<compile_context>
chip_gen: v7x
topology: tpu7x:2x2x1
jax: 0.10.0
libtpu: 0.0.40
codegen_flags: <defaults>
</compile_context>

<pallas_src>
import functools

import numpy as np

import jax
import jax.numpy as jnp
from jax.experimental import pallas as pl
from jax.experimental.pallas import tpu as pltpu


# ----------------------------------------------------------------------------
# Host-side repacking: PyTorch conv weights -> one fat matmul per conv layer
# ----------------------------------------------------------------------------
def repack_conv(w_pt, b, h_in, w_in, stride, cin, cout):
    """w_pt: (cout, cin, 4, 4), b: (cout,).

    Returns:
      W_big  : (4*w_in*cin, w_out*cout)  all 4 kernel-row taps concatenated along K
      bias_t : (1, w_out*cout)           bias tiled over output columns
      G      : (w_out*cout, cout)        per-channel gather (InstanceNorm stats)
      Gt     : (cout, w_out*cout)        per-channel broadcast back
      h_out, w_out
    Column taps and column zero-padding are folded into W_big (via the `valid` mask);
    row taps / row zero-padding are handled in-kernel by strided reads of a padded
    activation scratch.
    """
    kh = kw = 4
    h_out = (h_in + 2 - kh) // stride + 1
    w_out = (w_in + 2 - kw) // stride + 1

    w_perm = np.transpose(w_pt, (2, 3, 1, 0))                 # (kh, kw, cin, cout)
    q_idx = np.arange(w_in)[:, None]
    x_idx = np.arange(w_out)[None, :]
    j = q_idx - stride * x_idx + 1                            # (w_in, w_out)
    valid = ((j >= 0) & (j < kw)).astype(np.float32)
    jc = np.clip(j, 0, kw - 1)
    tap = w_perm[:, jc, :, :]                                 # (kh, w_in, w_out, cin, cout)
    tap = tap * valid[None, :, :, None, None]
    Wt = np.transpose(tap, (0, 1, 3, 2, 4)).reshape(kh, w_in * cin, w_out * cout)
    W_big = np.ascontiguousarray(Wt.reshape(kh * w_in * cin, w_out * cout))

    bias_t = np.tile(b.astype(np.float32), w_out).reshape(1, w_out * cout)
    G = np.tile(np.eye(cout, dtype=np.float32), (w_out, 1))   # (w_out*cout, cout)
    return W_big, bias_t, G, np.ascontiguousarray(G.T), h_out, w_out


def make_discriminator_params(key, in_channels, depth, H, W):
    """Flat kernel parameter list + static per-layer config + raw (w, b) for the reference."""
    chans = [in_channels] + list(depth) + [1]
    strides = [2, 2, 2, 1, 1]
    params, layer_cfg, raw = [], [], []
    h, w = H, W
    keys = jax.random.split(key, 10)
    for li in range(5):
        cin, cout, s = chans[li], chans[li + 1], strides[li]
        bound = 1.0 / float(np.sqrt(cin * 16))
        # PyTorch Conv2d default init: U(-1/sqrt(fan_in), 1/sqrt(fan_in))
        w_pt = jax.random.uniform(keys[2 * li], (cout, cin, 4, 4), jnp.float32, -bound, bound)
        b = jax.random.uniform(keys[2 * li + 1], (cout,), jnp.float32, -bound, bound)
        # Round conv weights to bf16 once (the kernel feeds the MXU in bf16), so the
        # f32 reference and the kernel share identical weights.
        w_np = np.asarray(jnp.asarray(w_pt, jnp.bfloat16).astype(jnp.float32))
        b_np = np.asarray(b, np.float32)
        raw.append((jnp.asarray(w_np), jnp.asarray(b_np)))

        W_big, bt, G, Gt, h_out, w_out = repack_conv(w_np, b_np, h, w, s, cin, cout)
        do_norm = li in (1, 2, 3)    # InstanceNorm on conv2/3/4
        do_elu = li in (0, 1, 2, 3)  # ELU on conv1..4
        if li == 4:
            # Fold the global average pool into the last conv:
            #   logit = sum_rows(A @ W_fold) + b,  W_fold = W_big @ 1 / (h_out*w_out)
            W_big = W_big @ np.ones((w_out * cout, 1), np.float32) / float(h_out * w_out)
            bt = b_np.reshape(1, 1)

        params.append(jnp.asarray(W_big, jnp.bfloat16))   # MXU-native dtype
        params.append(jnp.asarray(bt, jnp.float32))
        if do_norm:
            params.append(jnp.asarray(G, jnp.float32))
            params.append(jnp.asarray(Gt, jnp.float32))

        layer_cfg.append(dict(h_in=h, k0=w * cin, stride=s, h_out=h_out, w_out=w_out,
                              do_norm=do_norm, do_elu=do_elu))
        h, w = h_out, w_out
    return params, tuple(layer_cfg), raw


# ----------------------------------------------------------------------------
# The single fused Pallas kernel (one image per grid step)
# ----------------------------------------------------------------------------
def discriminator_kernel(x_ref, *refs, n_params, layer_cfg):
    param_refs = refs[:n_params]
    o_ref = refs[n_params]
    pad_refs = refs[n_params + 1:]

    pi = 0
    act = None
    final_b_ref = None
    for li, cfg in enumerate(layer_cfg):
        h_in, k0, stride, h_out = cfg["h_in"], cfg["k0"], cfg["stride"], cfg["h_out"]
        pad = pad_refs[li]

        # Padded activation scratch: rows 0 and h_in+1 are the conv zero-padding rows.
        zrow = jnp.zeros((1, k0), jnp.float32)
        pad[0:1, :] = zrow
        pad[h_in + 1:h_in + 2, :] = zrow
        if li == 0:
            pad[1:h_in + 1, :] = x_ref[0].astype(jnp.float32)
        else:
            pad[1:h_in + 1, :] = act

        # Gather the 4 kernel-row taps with (strided) sublane reads and fuse them into
        # one fat-K matmul:  A[y, t*k0 + :] = padded[t + stride*y, :].
        slabs = []
        for t in range(4):
            if stride == 1:
                slabs.append(pad[t:t + h_out, :])
            else:
                slabs.append(pad[pl.ds(t, h_out, stride=stride), :])
        a = jnp.concatenate(slabs, axis=1).astype(jnp.bfloat16)   # (h_out, 4*k0)

        w_ref, b_ref = param_refs[pi], param_refs[pi + 1]
        pi += 2
        y = jnp.dot(a, w_ref[...], preferred_element_type=jnp.float32)

        if li < len(layer_cfg) - 1:
            y = y + b_ref[...]            # (h_out, w_out*cout)
        else:
            final_b_ref = b_ref           # last layer: avgpool folded, bias added at end

        if cfg["do_norm"]:
            # InstanceNorm2d: per (image, channel) over spatial, biased var, eps=1e-5.
            # One stacked stats matmul + one stacked broadcast matmul.
            g_ref, gt_ref = param_refs[pi], param_refs[pi + 1]
            pi += 2
            inv_p = 1.0 / float(h_out * cfg["w_out"])
            s1 = jnp.sum(y, axis=0, keepdims=True)
            s2 = jnp.sum(y * y, axis=0, keepdims=True)
            stats = jnp.dot(jnp.concatenate([s1, s2], axis=0), g_ref[...],
                            preferred_element_type=jnp.float32) * inv_p     # (2, cout)
            mean = stats[0:1, :]
            var = jnp.maximum(stats[1:2, :] - mean * mean, 0.0)
            scale = jax.lax.rsqrt(var + 1e-5)
            shift = -mean * scale
            bc = jnp.dot(jnp.concatenate([scale, shift], axis=0), gt_ref[...],
                         preferred_element_type=jnp.float32)                # (2, w_out*cout)
            y = y * bc[0:1, :] + bc[1:2, :]

        if cfg["do_elu"]:
            # ELU(alpha=1); clamp the exp argument so the dead branch never makes inf.
            y = jnp.where(y > 0.0, y, jnp.exp(jnp.minimum(y, 0.0)) - 1.0)

        act = y

    # act: (h5, 1) = per-row column-averaged final conv output (avgpool folded into W).
    logit = jnp.sum(act, axis=0, keepdims=True) + final_b_ref[...]           # (1, 1)
    o_ref[0] = 1.0 / (1.0 + jnp.exp(-logit))


# ----------------------------------------------------------------------------
# Wrapper
# ----------------------------------------------------------------------------
def discriminator_forward(x_nchw, params, layer_cfg):
    """x_nchw: (N, C_in, H, W) float32 -> (N, 1) sigmoid scores."""
    N, Cin, H, W = x_nchw.shape
    # NCHW -> lane-dense per-image row-matrix (N, H, W*Cin); DMA'd in bf16.
    x_rm = jnp.transpose(x_nchw, (0, 2, 3, 1)).reshape(N, H, W * Cin).astype(jnp.bfloat16)

    kernel = functools.partial(discriminator_kernel,
                               n_params=len(params), layer_cfg=layer_cfg)

    in_specs = [pl.BlockSpec((1, H, W * Cin), lambda n: (n, 0, 0))]
    for p in params:
        in_specs.append(pl.BlockSpec(p.shape, lambda n, nd=p.ndim: (0,) * nd))

    # One zero-padded activation scratch per layer (all tiny at these sizes).
    scratch_shapes = [pltpu.VMEM((c["h_in"] + 2, c["k0"]), jnp.float32) for c in layer_cfg]

    out = pl.pallas_call(
        kernel,
        out_shape=jax.ShapeDtypeStruct((N, 1, 1), jnp.float32),
        grid=(N,),
        in_specs=in_specs,
        out_specs=pl.BlockSpec((1, 1, 1), lambda n: (n, 0, 0)),
        scratch_shapes=scratch_shapes,
        compiler_params=pltpu.CompilerParams(dimension_semantics=("parallel",)),
    )(x_rm, *params)
    return out.reshape(N, 1)


# ----------------------------------------------------------------------------
# Pure-JAX f32 reference (PyTorch semantics) for validation
# ----------------------------------------------------------------------------
def reference_forward(x, raw_params):
    strides = [2, 2, 2, 1, 1]
    act = x
    for li, (w, b) in enumerate(raw_params):
        act = jax.lax.conv_general_dilated(
            act, w, window_strides=(strides[li], strides[li]),
            padding=((1, 1), (1, 1)),
            dimension_numbers=("NCHW", "OIHW", "NCHW"),
            precision=jax.lax.Precision.HIGHEST) + b[None, :, None, None]
        if li in (1, 2, 3):
            mean = jnp.mean(act, axis=(2, 3), keepdims=True)
            var = jnp.mean(jnp.square(act - mean), axis=(2, 3), keepdims=True)
            act = (act - mean) * jax.lax.rsqrt(var + 1e-5)
        if li in (0, 1, 2, 3):
            act = jnp.where(act > 0.0, act, jnp.exp(jnp.minimum(act, 0.0)) - 1.0)
    pooled = jnp.mean(act, axis=(2, 3))          # (N, 1)
    return jax.nn.sigmoid(pooled)


# ----------------------------------------------------------------------------
# Demo
# ----------------------------------------------------------------------------
if __name__ == "__main__":
    in_channels = 4
    depth = [8, 16, 32, 64]
    N, H, W = 2, 32, 32   # 32 -> 16 -> 8 -> 4 -> 3 -> 2 -> avgpool -> (N, 1)

    key = jax.random.PRNGKey(0)
    key, xk = jax.random.split(key)

    params, layer_cfg, raw = make_discriminator_params(key, in_channels, depth, H, W)
    x = jax.random.normal(xk, (N, in_channels, H, W), jnp.float32)
    # Pre-round the input to bf16 (the kernel DMAs it in bf16) so the reference matches.
    x = x.astype(jnp.bfloat16).astype(jnp.float32)

    out = jax.block_until_ready(discriminator_forward(x, params, layer_cfg))
    ref = jax.block_until_ready(reference_forward(x, raw))

    assert out.shape == (N, 1)
    assert bool(jnp.all(jnp.isfinite(out)))
    assert bool(jnp.all((out > 0.0) & (out < 1.0)))
    max_err = float(jnp.max(jnp.abs(out - ref)))
    assert max_err < 3e-2, max_err   # bf16 activations/weights vs f32 reference
    print("KERNEL_OK")
</pallas_src>

<mosaic_0001>
module attributes {stable_mosaic.version = 11 : i64} {
  func.func @discriminator_kernel(%arg0: i32, %arg1: memref<1x32x128xbf16, #tpu.memory_space<vmem>>, %arg2: memref<512x128xbf16, #tpu.memory_space<vmem>>, %arg3: memref<1x128xf32, #tpu.memory_space<vmem>>, %arg4: memref<512x128xbf16, #tpu.memory_space<vmem>>, %arg5: memref<1x128xf32, #tpu.memory_space<vmem>>, %arg6: memref<128x16xf32, #tpu.memory_space<vmem>>, %arg7: memref<16x128xf32, #tpu.memory_space<vmem>>, %arg8: memref<512x128xbf16, #tpu.memory_space<vmem>>, %arg9: memref<1x128xf32, #tpu.memory_space<vmem>>, %arg10: memref<128x32xf32, #tpu.memory_space<vmem>>, %arg11: memref<32x128xf32, #tpu.memory_space<vmem>>, %arg12: memref<512x192xbf16, #tpu.memory_space<vmem>>, %arg13: memref<1x192xf32, #tpu.memory_space<vmem>>, %arg14: memref<192x64xf32, #tpu.memory_space<vmem>>, %arg15: memref<64x192xf32, #tpu.memory_space<vmem>>, %arg16: memref<768x1xbf16, #tpu.memory_space<vmem>>, %arg17: memref<1x1xf32, #tpu.memory_space<vmem>>, %arg18: memref<1x1x1xf32, #tpu.memory_space<vmem>>, %arg19: memref<34x128xf32, #tpu.memory_space<vmem>>, %arg20: memref<18x128xf32, #tpu.memory_space<vmem>>, %arg21: memref<10x128xf32, #tpu.memory_space<vmem>>, %arg22: memref<6x128xf32, #tpu.memory_space<vmem>>, %arg23: memref<5x192xf32, #tpu.memory_space<vmem>>) attributes {dimension_semantics = [#tpu.dimension_semantics<parallel>], iteration_bounds = array<i64: 2>, scalar_prefetch = 0 : i64, scratch_operands = 5 : i64, tpu.core_type = #tpu.core_type<tc>, window_params = [{transform_indices = @transform_0, window_bounds = array<i64: 1, 32, 128>}, {pipeline_mode = #tpu.pipeline_mode<synchronous>, transform_indices = @transform_1, window_bounds = array<i64: 512, 128>}, {pipeline_mode = #tpu.pipeline_mode<synchronous>, transform_indices = @transform_2, window_bounds = array<i64: 1, 128>}, {pipeline_mode = #tpu.pipeline_mode<synchronous>, transform_indices = @transform_3, window_bounds = array<i64: 512, 128>}, {pipeline_mode = #tpu.pipeline_mode<synchronous>, transform_indices = @transform_4, window_bounds = array<i64: 1, 128>}, {pipeline_mode = #tpu.pipeline_mode<synchronous>, transform_indices = @transform_5, window_bounds = array<i64: 128, 16>}, {pipeline_mode = #tpu.pipeline_mode<synchronous>, transform_indices = @transform_6, window_bounds = array<i64: 16, 128>}, {pipeline_mode = #tpu.pipeline_mode<synchronous>, transform_indices = @transform_7, window_bounds = array<i64: 512, 128>}, {pipeline_mode = #tpu.pipeline_mode<synchronous>, transform_indices = @transform_8, window_bounds = array<i64: 1, 128>}, {pipeline_mode = #tpu.pipeline_mode<synchronous>, transform_indices = @transform_9, window_bounds = array<i64: 128, 32>}, {pipeline_mode = #tpu.pipeline_mode<synchronous>, transform_indices = @transform_10, window_bounds = array<i64: 32, 128>}, {pipeline_mode = #tpu.pipeline_mode<synchronous>, transform_indices = @transform_11, window_bounds = array<i64: 512, 192>}, {pipeline_mode = #tpu.pipeline_mode<synchronous>, transform_indices = @transform_12, window_bounds = array<i64: 1, 192>}, {pipeline_mode = #tpu.pipeline_mode<synchronous>, transform_indices = @transform_13, window_bounds = array<i64: 192, 64>}, {pipeline_mode = #tpu.pipeline_mode<synchronous>, transform_indices = @transform_14, window_bounds = array<i64: 64, 192>}, {pipeline_mode = #tpu.pipeline_mode<synchronous>, transform_indices = @transform_15, window_bounds = array<i64: 768, 1>}, {pipeline_mode = #tpu.pipeline_mode<synchronous>, transform_indices = @transform_16, window_bounds = array<i64: 1, 1>}, {transform_indices = @transform_17, window_bounds = array<i64: 1, 1, 1>}]} {
    %cst = arith.constant 0.000000e+00 : f32
    %0 = vector.broadcast %cst : f32 to vector<1x128xf32>
    %c0 = arith.constant 0 : index
    %c0_0 = arith.constant 0 : index
    %1 = vector.load %arg19[%c0, %c0_0] : memref<34x128xf32, #tpu.memory_space<vmem>>, vector<1x128xf32>
    tpu.vector_store %arg19[%c0, %c0_0], %0 {strides = array<i32>} : memref<34x128xf32, #tpu.memory_space<vmem>>, vector<1x128xf32>,
    %c33 = arith.constant 33 : index
    %c0_1 = arith.constant 0 : index
    %2 = vector.load %arg19[%c33, %c0_1] : memref<34x128xf32, #tpu.memory_space<vmem>>, vector<1x128xf32>
    tpu.vector_store %arg19[%c33, %c0_1], %0 {strides = array<i32>} : memref<34x128xf32, #tpu.memory_space<vmem>>, vector<1x128xf32>,
    %c0_2 = arith.constant 0 : index
    %c0_3 = arith.constant 0 : index
    %c0_4 = arith.constant 0 : index
    %3 = vector.load %arg1[%c0_2, %c0_3, %c0_4] : memref<1x32x128xbf16, #tpu.memory_space<vmem>>, vector<1x32x128xbf16>
    %4 = vector.shape_cast %3 : vector<1x32x128xbf16> to vector<32x128xbf16>
    %5 = arith.extf %4 : vector<32x128xbf16> to vector<32x128xf32>
    %c1 = arith.constant 1 : index
    %c0_5 = arith.constant 0 : index
    %6 = vector.load %arg19[%c1, %c0_5] : memref<34x128xf32, #tpu.memory_space<vmem>>, vector<32x128xf32>
    tpu.vector_store %arg19[%c1, %c0_5], %5 {strides = array<i32>} : memref<34x128xf32, #tpu.memory_space<vmem>>, vector<32x128xf32>,
    %c0_6 = arith.constant 0 : index
    %c0_7 = arith.constant 0 : index
    %7 = tpu.strided_load %arg19[%c0_6, %c0_7] {strides = array<i32: 2, 1>} : memref<34x128xf32, #tpu.memory_space<vmem>>, vector<16x128xf32>
    %c1_8 = arith.constant 1 : index
    %c0_9 = arith.constant 0 : index
    %8 = tpu.strided_load %arg19[%c1_8, %c0_9] {strides = array<i32: 2, 1>} : memref<34x128xf32, #tpu.memory_space<vmem>>, vector<16x128xf32>
    %c2 = arith.constant 2 : index
    %c0_10 = arith.constant 0 : index
    %9 = tpu.strided_load %arg19[%c2, %c0_10] {strides = array<i32: 2, 1>} : memref<34x128xf32, #tpu.memory_space<vmem>>, vector<16x128xf32>
    %c3 = arith.constant 3 : index
    %c0_11 = arith.constant 0 : index
    %10 = tpu.strided_load %arg19[%c3, %c0_11] {strides = array<i32: 2, 1>} : memref<34x128xf32, #tpu.memory_space<vmem>>, vector<16x128xf32>
    %11 = tpu.concatenate %7, %8, %9, %10 in 1 : vector<16x128xf32>, vector<16x128xf32>, vector<16x128xf32>, vector<16x128xf32> -> vector<16x512xf32>
    %12 = arith.truncf %11 : vector<16x512xf32> to vector<16x512xbf16>
    %c0_12 = arith.constant 0 : index
    %c0_13 = arith.constant 0 : index
    %13 = vector.load %arg2[%c0_12, %c0_13] : memref<512x128xbf16, #tpu.memory_space<vmem>>, vector<512x128xbf16>
    %cst_14 = arith.constant dense<0.000000e+00> : vector<16x128xf32>
    %14 = tpu.matmul %12, %13, %cst_14 {dimension_numbers = #tpu.dot_dimension_numbers<[1], [0], [0], [1], [0, 0, 1, 1], [], []>} : vector<16x512xbf16>, vector<512x128xbf16>, vector<16x128xf32> -> vector<16x128xf32>
    %c0_15 = arith.constant 0 : index
    %c0_16 = arith.constant 0 : index
    %15 = vector.load %arg3[%c0_15, %c0_16] : memref<1x128xf32, #tpu.memory_space<vmem>>, vector<1x128xf32>
    %16 = vector.broadcast %15 : vector<1x128xf32> to vector<16x128xf32>
    %17 = arith.addf %14, %16 : vector<16x128xf32>
    %cst_17 = arith.constant 0.000000e+00 : f32
    %18 = vector.broadcast %cst_17 : f32 to vector<16x128xf32>
    %19 = arith.cmpf ogt, %17, %18 : vector<16x128xf32>
    %cst_18 = arith.constant 0.000000e+00 : f32
    %20 = vector.broadcast %cst_18 : f32 to vector<16x128xf32>
    %21 = arith.minimumf %17, %20 : vector<16x128xf32>
    %22 = math.exp %21 : vector<16x128xf32>
    %cst_19 = arith.constant 1.000000e+00 : f32
    %23 = vector.broadcast %cst_19 : f32 to vector<16x128xf32>
    %24 = arith.subf %22, %23 : vector<16x128xf32>
    %25 = arith.select %19, %17, %24 : vector<16x128xi1>, vector<16x128xf32>
    %cst_20 = arith.constant 0.000000e+00 : f32
    %26 = vector.broadcast %cst_20 : f32 to vector<1x128xf32>
    %c0_21 = arith.constant 0 : index
    %c0_22 = arith.constant 0 : index
    %27 = vector.load %arg20[%c0_21, %c0_22] : memref<18x128xf32, #tpu.memory_space<vmem>>, vector<1x128xf32>
    tpu.vector_store %arg20[%c0_21, %c0_22], %26 {strides = array<i32>} : memref<18x128xf32, #tpu.memory_space<vmem>>, vector<1x128xf32>,
    %c17 = arith.constant 17 : index
    %c0_23 = arith.constant 0 : index
    %28 = vector.load %arg20[%c17, %c0_23] : memref<18x128xf32, #tpu.memory_space<vmem>>, vector<1x128xf32>
    tpu.vector_store %arg20[%c17, %c0_23], %26 {strides = array<i32>} : memref<18x128xf32, #tpu.memory_space<vmem>>, vector<1x128xf32>,
    %c1_24 = arith.constant 1 : index
    %c0_25 = arith.constant 0 : index
    %29 = vector.load %arg20[%c1_24, %c0_25] : memref<18x128xf32, #tpu.memory_space<vmem>>, vector<16x128xf32>
    tpu.vector_store %arg20[%c1_24, %c0_25], %25 {strides = array<i32>} : memref<18x128xf32, #tpu.memory_space<vmem>>, vector<16x128xf32>,
    %c0_26 = arith.constant 0 : index
    %c0_27 = arith.constant 0 : index
    %30 = tpu.strided_load %arg20[%c0_26, %c0_27] {strides = array<i32: 2, 1>} : memref<18x128xf32, #tpu.memory_space<vmem>>, vector<8x128xf32>
    %c1_28 = arith.constant 1 : index
    %c0_29 = arith.constant 0 : index
    %31 = tpu.strided_load %arg20[%c1_28, %c0_29] {strides = array<i32: 2, 1>} : memref<18x128xf32, #tpu.memory_space<vmem>>, vector<8x128xf32>
    %c2_30 = arith.constant 2 : index
    %c0_31 = arith.constant 0 : index
    %32 = tpu.strided_load %arg20[%c2_30, %c0_31] {strides = array<i32: 2, 1>} : memref<18x128xf32, #tpu.memory_space<vmem>>, vector<8x128xf32>
    %c3_32 = arith.constant 3 : index
    %c0_33 = arith.constant 0 : index
    %33 = tpu.strided_load %arg20[%c3_32, %c0_33] {strides = array<i32: 2, 1>} : memref<18x128xf32, #tpu.memory_space<vmem>>, vector<8x128xf32>
    %34 = tpu.concatenate %30, %31, %32, %33 in 1 : vector<8x128xf32>, vector<8x128xf32>, vector<8x128xf32>, vector<8x128xf32> -> vector<8x512xf32>
    %35 = arith.truncf %34 : vector<8x512xf32> to vector<8x512xbf16>
    %c0_34 = arith.constant 0 : index
    %c0_35 = arith.constant 0 : index
    %36 = vector.load %arg4[%c0_34, %c0_35] : memref<512x128xbf16, #tpu.memory_space<vmem>>, vector<512x128xbf16>
    %cst_36 = arith.constant dense<0.000000e+00> : vector<8x128xf32>
    %37 = tpu.matmul %35, %36, %cst_36 {dimension_numbers = #tpu.dot_dimension_numbers<[1], [0], [0], [1], [0, 0, 1, 1], [], []>} : vector<8x512xbf16>, vector<512x128xbf16>, vector<8x128xf32> -> vector<8x128xf32>
    %c0_37 = arith.constant 0 : index
    %c0_38 = arith.constant 0 : index
    %38 = vector.load %arg5[%c0_37, %c0_38] : memref<1x128xf32, #tpu.memory_space<vmem>>, vector<1x128xf32>
    %39 = vector.broadcast %38 : vector<1x128xf32> to vector<8x128xf32>
    %40 = arith.addf %37, %39 : vector<8x128xf32>
    %cst_39 = arith.constant dense<0.000000e+00> : vector<128xf32>
    %41 = vector.multi_reduction <add>, %40, %cst_39 [0] : vector<8x128xf32> to vector<128xf32>
    %42 = vector.shape_cast %41 : vector<128xf32> to vector<1x128xf32>
    %43 = arith.mulf %40, %40 : vector<8x128xf32>
    %cst_40 = arith.constant dense<0.000000e+00> : vector<128xf32>
    %44 = vector.multi_reduction <add>, %43, %cst_40 [0] : vector<8x128xf32> to vector<128xf32>
    %45 = vector.shape_cast %44 : vector<128xf32> to vector<1x128xf32>
    %46 = tpu.concatenate %42, %45 in 0 : vector<1x128xf32>, vector<1x128xf32> -> vector<2x128xf32>
    %c0_41 = arith.constant 0 : index
    %c0_42 = arith.constant 0 : index
    %47 = vector.load %arg6[%c0_41, %c0_42] : memref<128x16xf32, #tpu.memory_space<vmem>>, vector<128x16xf32>
    %cst_43 = arith.constant dense<0.000000e+00> : vector<2x16xf32>
    %48 = tpu.matmul %46, %47, %cst_43 {dimension_numbers = #tpu.dot_dimension_numbers<[1], [0], [0], [1], [0, 0, 1, 1], [], []>} : vector<2x128xf32>, vector<128x16xf32>, vector<2x16xf32> -> vector<2x16xf32>
    %cst_44 = arith.constant 1.562500e-02 : f32
    %49 = vector.broadcast %cst_44 : f32 to vector<2x16xf32>
    %50 = arith.mulf %48, %49 : vector<2x16xf32>
    %51 = vector.extract_strided_slice %50 {offsets = [0, 0], sizes = [1, 16], strides = [1, 1]} : vector<2x16xf32> to vector<1x16xf32>
    %52 = vector.extract_strided_slice %50 {offsets = [1, 0], sizes = [1, 16], strides = [1, 1]} : vector<2x16xf32> to vector<1x16xf32>
    %53 = arith.mulf %51, %51 : vector<1x16xf32>
    %54 = arith.subf %52, %53 : vector<1x16xf32>
    %cst_45 = arith.constant 0.000000e+00 : f32
    %55 = vector.broadcast %cst_45 : f32 to vector<1x16xf32>
    %56 = arith.maximumf %54, %55 : vector<1x16xf32>
    %cst_46 = arith.constant 9.99999974E-6 : f32
    %57 = vector.broadcast %cst_46 : f32 to vector<1x16xf32>
    %58 = arith.addf %56, %57 : vector<1x16xf32>
    %59 = math.rsqrt %58 : vector<1x16xf32>
    %cst_47 = arith.constant 0.000000e+00 : f32
    %60 = vector.broadcast %cst_47 : f32 to vector<1x16xf32>
    %61 = arith.subf %60, %51 : vector<1x16xf32>
    %62 = arith.mulf %61, %59 : vector<1x16xf32>
    %63 = tpu.concatenate %59, %62 in 0 : vector<1x16xf32>, vector<1x16xf32> -> vector<2x16xf32>
    %c0_48 = arith.constant 0 : index
    %c0_49 = arith.constant 0 : index
    %64 = vector.load %arg7[%c0_48, %c0_49] : memref<16x128xf32, #tpu.memory_space<vmem>>, vector<16x128xf32>
    %cst_50 = arith.constant dense<0.000000e+00> : vector<2x128xf32>
    %65 = tpu.matmul %63, %64, %cst_50 {dimension_numbers = #tpu.dot_dimension_numbers<[1], [0], [0], [1], [0, 0, 1, 1], [], []>} : vector<2x16xf32>, vector<16x128xf32>, vector<2x128xf32> -> vector<2x128xf32>
    %66 = vector.extract_strided_slice %65 {offsets = [0, 0], sizes = [1, 128], strides = [1, 1]} : vector<2x128xf32> to vector<1x128xf32>
    %67 = vector.broadcast %66 : vector<1x128xf32> to vector<8x128xf32>
    %68 = arith.mulf %40, %67 : vector<8x128xf32>
    %69 = vector.extract_strided_slice %65 {offsets = [1, 0], sizes = [1, 128], strides = [1, 1]} : vector<2x128xf32> to vector<1x128xf32>
    %70 = vector.broadcast %69 : vector<1x128xf32> to vector<8x128xf32>
    %71 = arith.addf %68, %70 : vector<8x128xf32>
    %cst_51 = arith.constant 0.000000e+00 : f32
    %72 = vector.broadcast %cst_51 : f32 to vector<8x128xf32>
    %73 = arith.cmpf ogt, %71, %72 : vector<8x128xf32>
    %cst_52 = arith.constant 0.000000e+00 : f32
    %74 = vector.broadcast %cst_52 : f32 to vector<8x128xf32>
    %75 = arith.minimumf %71, %74 : vector<8x128xf32>
    %76 = math.exp %75 : vector<8x128xf32>
    %cst_53 = arith.constant 1.000000e+00 : f32
    %77 = vector.broadcast %cst_53 : f32 to vector<8x128xf32>
    %78 = arith.subf %76, %77 : vector<8x128xf32>
    %79 = arith.select %73, %71, %78 : vector<8x128xi1>, vector<8x128xf32>
    %cst_54 = arith.constant 0.000000e+00 : f32
    %80 = vector.broadcast %cst_54 : f32 to vector<1x128xf32>
    %c0_55 = arith.constant 0 : index
    %c0_56 = arith.constant 0 : index
    %81 = vector.load %arg21[%c0_55, %c0_56] : memref<10x128xf32, #tpu.memory_space<vmem>>, vector<1x128xf32>
    tpu.vector_store %arg21[%c0_55, %c0_56], %80 {strides = array<i32>} : memref<10x128xf32, #tpu.memory_space<vmem>>, vector<1x128xf32>,
    %c9 = arith.constant 9 : index
    %c0_57 = arith.constant 0 : index
    %82 = vector.load %arg21[%c9, %c0_57] : memref<10x128xf32, #tpu.memory_space<vmem>>, vector<1x128xf32>
    tpu.vector_store %arg21[%c9, %c0_57], %80 {strides = array<i32>} : memref<10x128xf32, #tpu.memory_space<vmem>>, vector<1x128xf32>,
    %c1_58 = arith.constant 1 : index
    %c0_59 = arith.constant 0 : index
    %83 = vector.load %arg21[%c1_58, %c0_59] : memref<10x128xf32, #tpu.memory_space<vmem>>, vector<8x128xf32>
    tpu.vector_store %arg21[%c1_58, %c0_59], %79 {strides = array<i32>} : memref<10x128xf32, #tpu.memory_space<vmem>>, vector<8x128xf32>,
    %c0_60 = arith.constant 0 : index
    %c0_61 = arith.constant 0 : index
    %84 = tpu.strided_load %arg21[%c0_60, %c0_61] {strides = array<i32: 2, 1>} : memref<10x128xf32, #tpu.memory_space<vmem>>, vector<4x128xf32>
    %c1_62 = arith.constant 1 : index
    %c0_63 = arith.constant 0 : index
    %85 = tpu.strided_load %arg21[%c1_62, %c0_63] {strides = array<i32: 2, 1>} : memref<10x128xf32, #tpu.memory_space<vmem>>, vector<4x128xf32>
    %c2_64 = arith.constant 2 : index
    %c0_65 = arith.constant 0 : index
    %86 = tpu.strided_load %arg21[%c2_64, %c0_65] {strides = array<i32: 2, 1>} : memref<10x128xf32, #tpu.memory_space<vmem>>, vector<4x128xf32>
    %c3_66 = arith.constant 3 : index
    %c0_67 = arith.constant 0 : index
    %87 = tpu.strided_load %arg21[%c3_66, %c0_67] {strides = array<i32: 2, 1>} : memref<10x128xf32, #tpu.memory_space<vmem>>, vector<4x128xf32>
    %88 = tpu.concatenate %84, %85, %86, %87 in 1 : vector<4x128xf32>, vector<4x128xf32>, vector<4x128xf32>, vector<4x128xf32> -> vector<4x512xf32>
    %89 = arith.truncf %88 : vector<4x512xf32> to vector<4x512xbf16>
    %c0_68 = arith.constant 0 : index
    %c0_69 = arith.constant 0 : index
    %90 = vector.load %arg8[%c0_68, %c0_69] : memref<512x128xbf16, #tpu.memory_space<vmem>>, vector<512x128xbf16>
    %cst_70 = arith.constant dense<0.000000e+00> : vector<4x128xf32>
    %91 = tpu.matmul %89, %90, %cst_70 {dimension_numbers = #tpu.dot_dimension_numbers<[1], [0], [0], [1], [0, 0, 1, 1], [], []>} : vector<4x512xbf16>, vector<512x128xbf16>, vector<4x128xf32> -> vector<4x128xf32>
    %c0_71 = arith.constant 0 : index
    %c0_72 = arith.constant 0 : index
    %92 = vector.load %arg9[%c0_71, %c0_72] : memref<1x128xf32, #tpu.memory_space<vmem>>, vector<1x128xf32>
    %93 = vector.broadcast %92 : vector<1x128xf32> to vector<4x128xf32>
    %94 = arith.addf %91, %93 : vector<4x128xf32>
    %cst_73 = arith.constant dense<0.000000e+00> : vector<128xf32>
    %95 = vector.multi_reduction <add>, %94, %cst_73 [0] : vector<4x128xf32> to vector<128xf32>
    %96 = vector.shape_cast %95 : vector<128xf32> to vector<1x128xf32>
    %97 = arith.mulf %94, %94 : vector<4x128xf32>
    %cst_74 = arith.constant dense<0.000000e+00> : vector<128xf32>
    %98 = vector.multi_reduction <add>, %97, %cst_74 [0] : vector<4x128xf32> to vector<128xf32>
    %99 = vector.shape_cast %98 : vector<128xf32> to vector<1x128xf32>
    %100 = tpu.concatenate %96, %99 in 0 : vector<1x128xf32>, vector<1x128xf32> -> vector<2x128xf32>
    %c0_75 = arith.constant 0 : index
    %c0_76 = arith.constant 0 : index
    %101 = vector.load %arg10[%c0_75, %c0_76] : memref<128x32xf32, #tpu.memory_space<vmem>>, vector<128x32xf32>
    %cst_77 = arith.constant dense<0.000000e+00> : vector<2x32xf32>
    %102 = tpu.matmul %100, %101, %cst_77 {dimension_numbers = #tpu.dot_dimension_numbers<[1], [0], [0], [1], [0, 0, 1, 1], [], []>} : vector<2x128xf32>, vector<128x32xf32>, vector<2x32xf32> -> vector<2x32xf32>
    %cst_78 = arith.constant 6.250000e-02 : f32
    %103 = vector.broadcast %cst_78 : f32 to vector<2x32xf32>
    %104 = arith.mulf %102, %103 : vector<2x32xf32>
    %105 = vector.extract_strided_slice %104 {offsets = [0, 0], sizes = [1, 32], strides = [1, 1]} : vector<2x32xf32> to vector<1x32xf32>
    %106 = vector.extract_strided_slice %104 {offsets = [1, 0], sizes = [1, 32], strides = [1, 1]} : vector<2x32xf32> to vector<1x32xf32>
    %107 = arith.mulf %105, %105 : vector<1x32xf32>
    %108 = arith.subf %106, %107 : vector<1x32xf32>
    %cst_79 = arith.constant 0.000000e+00 : f32
    %109 = vector.broadcast %cst_79 : f32 to vector<1x32xf32>
    %110 = arith.maximumf %108, %109 : vector<1x32xf32>
    %cst_80 = arith.constant 9.99999974E-6 : f32
    %111 = vector.broadcast %cst_80 : f32 to vector<1x32xf32>
    %112 = arith.addf %110, %111 : vector<1x32xf32>
    %113 = math.rsqrt %112 : vector<1x32xf32>
    %cst_81 = arith.constant 0.000000e+00 : f32
    %114 = vector.broadcast %cst_81 : f32 to vector<1x32xf32>
    %115 = arith.subf %114, %105 : vector<1x32xf32>
    %116 = arith.mulf %115, %113 : vector<1x32xf32>
    %117 = tpu.concatenate %113, %116 in 0 : vector<1x32xf32>, vector<1x32xf32> -> vector<2x32xf32>
    %c0_82 = arith.constant 0 : index
    %c0_83 = arith.constant 0 : index
    %118 = vector.load %arg11[%c0_82, %c0_83] : memref<32x128xf32, #tpu.memory_space<vmem>>, vector<32x128xf32>
    %cst_84 = arith.constant dense<0.000000e+00> : vector<2x128xf32>
    %119 = tpu.matmul %117, %118, %cst_84 {dimension_numbers = #tpu.dot_dimension_numbers<[1], [0], [0], [1], [0, 0, 1, 1], [], []>} : vector<2x32xf32>, vector<32x128xf32>, vector<2x128xf32> -> vector<2x128xf32>
    %120 = vector.extract_strided_slice %119 {offsets = [0, 0], sizes = [1, 128], strides = [1, 1]} : vector<2x128xf32> to vector<1x128xf32>
    %121 = vector.broadcast %120 : vector<1x128xf32> to vector<4x128xf32>
    %122 = arith.mulf %94, %121 : vector<4x128xf32>
    %123 = vector.extract_strided_slice %119 {offsets = [1, 0], sizes = [1, 128], strides = [1, 1]} : vector<2x128xf32> to vector<1x128xf32>
    %124 = vector.broadcast %123 : vector<1x128xf32> to vector<4x128xf32>
    %125 = arith.addf %122, %124 : vector<4x128xf32>
    %cst_85 = arith.constant 0.000000e+00 : f32
    %126 = vector.broadcast %cst_85 : f32 to vector<4x128xf32>
    %127 = arith.cmpf ogt, %125, %126 : vector<4x128xf32>
    %cst_86 = arith.constant 0.000000e+00 : f32
    %128 = vector.broadcast %cst_86 : f32 to vector<4x128xf32>
    %129 = arith.minimumf %125, %128 : vector<4x128xf32>
    %130 = math.exp %129 : vector<4x128xf32>
    %cst_87 = arith.constant 1.000000e+00 : f32
    %131 = vector.broadcast %cst_87 : f32 to vector<4x128xf32>
    %132 = arith.subf %130, %131 : vector<4x128xf32>
    %133 = arith.select %127, %125, %132 : vector<4x128xi1>, vector<4x128xf32>
    %cst_88 = arith.constant 0.000000e+00 : f32
    %134 = vector.broadcast %cst_88 : f32 to vector<1x128xf32>
    %c0_89 = arith.constant 0 : index
    %c0_90 = arith.constant 0 : index
    %135 = vector.load %arg22[%c0_89, %c0_90] : memref<6x128xf32, #tpu.memory_space<vmem>>, vector<1x128xf32>
    tpu.vector_store %arg22[%c0_89, %c0_90], %134 {strides = array<i32>} : memref<6x128xf32, #tpu.memory_space<vmem>>, vector<1x128xf32>,
    %c5 = arith.constant 5 : index
    %c0_91 = arith.constant 0 : index
    %136 = vector.load %arg22[%c5, %c0_91] : memref<6x128xf32, #tpu.memory_space<vmem>>, vector<1x128xf32>
    tpu.vector_store %arg22[%c5, %c0_91], %134 {strides = array<i32>} : memref<6x128xf32, #tpu.memory_space<vmem>>, vector<1x128xf32>,
    %c1_92 = arith.constant 1 : index
    %c0_93 = arith.constant 0 : index
    %137 = vector.load %arg22[%c1_92, %c0_93] : memref<6x128xf32, #tpu.memory_space<vmem>>, vector<4x128xf32>
    tpu.vector_store %arg22[%c1_92, %c0_93], %133 {strides = array<i32>} : memref<6x128xf32, #tpu.memory_space<vmem>>, vector<4x128xf32>,
    %c0_94 = arith.constant 0 : index
    %c0_95 = arith.constant 0 : index
    %138 = vector.load %arg22[%c0_94, %c0_95] : memref<6x128xf32, #tpu.memory_space<vmem>>, vector<3x128xf32>
    %c1_96 = arith.constant 1 : index
    %c0_97 = arith.constant 0 : index
    %139 = vector.load %arg22[%c1_96, %c0_97] : memref<6x128xf32, #tpu.memory_space<vmem>>, vector<3x128xf32>
    %c2_98 = arith.constant 2 : index
    %c0_99 = arith.constant 0 : index
    %140 = vector.load %arg22[%c2_98, %c0_99] : memref<6x128xf32, #tpu.memory_space<vmem>>, vector<3x128xf32>
    %c3_100 = arith.constant 3 : index
    %c0_101 = arith.constant 0 : index
    %141 = vector.load %arg22[%c3_100, %c0_101] : memref<6x128xf32, #tpu.memory_space<vmem>>, vector<3x128xf32>
    %142 = tpu.concatenate %138, %139, %140, %141 in 1 : vector<3x128xf32>, vector<3x128xf32>, vector<3x128xf32>, vector<3x128xf32> -> vector<3x512xf32>
    %143 = arith.truncf %142 : vector<3x512xf32> to vector<3x512xbf16>
    %c0_102 = arith.constant 0 : index
    %c0_103 = arith.constant 0 : index
    %144 = vector.load %arg12[%c0_102, %c0_103] : memref<512x192xbf16, #tpu.memory_space<vmem>>, vector<512x192xbf16>
    %cst_104 = arith.constant dense<0.000000e+00> : vector<3x192xf32>
    %145 = tpu.matmul %143, %144, %cst_104 {dimension_numbers = #tpu.dot_dimension_numbers<[1], [0], [0], [1], [0, 0, 1, 1], [], []>} : vector<3x512xbf16>, vector<512x192xbf16>, vector<3x192xf32> -> vector<3x192xf32>
    %c0_105 = arith.constant 0 : index
    %c0_106 = arith.constant 0 : index
    %146 = vector.load %arg13[%c0_105, %c0_106] : memref<1x192xf32, #tpu.memory_space<vmem>>, vector<1x192xf32>
    %147 = vector.broadcast %146 : vector<1x192xf32> to vector<3x192xf32>
    %148 = arith.addf %145, %147 : vector<3x192xf32>
    %cst_107 = arith.constant dense<0.000000e+00> : vector<192xf32>
    %149 = vector.multi_reduction <add>, %148, %cst_107 [0] : vector<3x192xf32> to vector<192xf32>
    %150 = vector.shape_cast %149 : vector<192xf32> to vector<1x192xf32>
    %151 = arith.mulf %148, %148 : vector<3x192xf32>
    %cst_108 = arith.constant dense<0.000000e+00> : vector<192xf32>
    %152 = vector.multi_reduction <add>, %151, %cst_108 [0] : vector<3x192xf32> to vector<192xf32>
    %153 = vector.shape_cast %152 : vector<192xf32> to vector<1x192xf32>
    %154 = tpu.concatenate %150, %153 in 0 : vector<1x192xf32>, vector<1x192xf32> -> vector<2x192xf32>
    %c0_109 = arith.constant 0 : index
    %c0_110 = arith.constant 0 : index
    %155 = vector.load %arg14[%c0_109, %c0_110] : memref<192x64xf32, #tpu.memory_space<vmem>>, vector<192x64xf32>
    %cst_111 = arith.constant dense<0.000000e+00> : vector<2x64xf32>
    %156 = tpu.matmul %154, %155, %cst_111 {dimension_numbers = #tpu.dot_dimension_numbers<[1], [0], [0], [1], [0, 0, 1, 1], [], []>} : vector<2x192xf32>, vector<192x64xf32>, vector<2x64xf32> -> vector<2x64xf32>
    %cst_112 = arith.constant 0.111111112 : f32
    %157 = vector.broadcast %cst_112 : f32 to vector<2x64xf32>
    %158 = arith.mulf %156, %157 : vector<2x64xf32>
    %159 = vector.extract_strided_slice %158 {offsets = [0, 0], sizes = [1, 64], strides = [1, 1]} : vector<2x64xf32> to vector<1x64xf32>
    %160 = vector.extract_strided_slice %158 {offsets = [1, 0], sizes = [1, 64], strides = [1, 1]} : vector<2x64xf32> to vector<1x64xf32>
    %161 = arith.mulf %159, %159 : vector<1x64xf32>
    %162 = arith.subf %160, %161 : vector<1x64xf32>
    %cst_113 = arith.constant 0.000000e+00 : f32
    %163 = vector.broadcast %cst_113 : f32 to vector<1x64xf32>
    %164 = arith.maximumf %162, %163 : vector<1x64xf32>
    %cst_114 = arith.constant 9.99999974E-6 : f32
    %165 = vector.broadcast %cst_114 : f32 to vector<1x64xf32>
    %166 = arith.addf %164, %165 : vector<1x64xf32>
    %167 = math.rsqrt %166 : vector<1x64xf32>
    %cst_115 = arith.constant 0.000000e+00 : f32
    %168 = vector.broadcast %cst_115 : f32 to vector<1x64xf32>
    %169 = arith.subf %168, %159 : vector<1x64xf32>
    %170 = arith.mulf %169, %167 : vector<1x64xf32>
    %171 = tpu.concatenate %167, %170 in 0 : vector<1x64xf32>, vector<1x64xf32> -> vector<2x64xf32>
    %c0_116 = arith.constant 0 : index
    %c0_117 = arith.constant 0 : index
    %172 = vector.load %arg15[%c0_116, %c0_117] : memref<64x192xf32, #tpu.memory_space<vmem>>, vector<64x192xf32>
    %cst_118 = arith.constant dense<0.000000e+00> : vector<2x192xf32>
    %173 = tpu.matmul %171, %172, %cst_118 {dimension_numbers = #tpu.dot_dimension_numbers<[1], [0], [0], [1], [0, 0, 1, 1], [], []>} : vector<2x64xf32>, vector<64x192xf32>, vector<2x192xf32> -> vector<2x192xf32>
    %174 = vector.extract_strided_slice %173 {offsets = [0, 0], sizes = [1, 192], strides = [1, 1]} : vector<2x192xf32> to vector<1x192xf32>
    %175 = vector.broadcast %174 : vector<1x192xf32> to vector<3x192xf32>
    %176 = arith.mulf %148, %175 : vector<3x192xf32>
    %177 = vector.extract_strided_slice %173 {offsets = [1, 0], sizes = [1, 192], strides = [1, 1]} : vector<2x192xf32> to vector<1x192xf32>
    %178 = vector.broadcast %177 : vector<1x192xf32> to vector<3x192xf32>
    %179 = arith.addf %176, %178 : vector<3x192xf32>
    %cst_119 = arith.constant 0.000000e+00 : f32
    %180 = vector.broadcast %cst_119 : f32 to vector<3x192xf32>
    %181 = arith.cmpf ogt, %179, %180 : vector<3x192xf32>
    %cst_120 = arith.constant 0.000000e+00 : f32
    %182 = vector.broadcast %cst_120 : f32 to vector<3x192xf32>
    %183 = arith.minimumf %179, %182 : vector<3x192xf32>
    %184 = math.exp %183 : vector<3x192xf32>
    %cst_121 = arith.constant 1.000000e+00 : f32
    %185 = vector.broadcast %cst_121 : f32 to vector<3x192xf32>
    %186 = arith.subf %184, %185 : vector<3x192xf32>
    %187 = arith.select %181, %179, %186 : vector<3x192xi1>, vector<3x192xf32>
    %cst_122 = arith.constant 0.000000e+00 : f32
    %188 = vector.broadcast %cst_122 : f32 to vector<1x192xf32>
    %c0_123 = arith.constant 0 : index
    %c0_124 = arith.constant 0 : index
    %189 = vector.load %arg23[%c0_123, %c0_124] : memref<5x192xf32, #tpu.memory_space<vmem>>, vector<1x192xf32>
    tpu.vector_store %arg23[%c0_123, %c0_124], %188 {strides = array<i32>} : memref<5x192xf32, #tpu.memory_space<vmem>>, vector<1x192xf32>,
    %c4 = arith.constant 4 : index
    %c0_125 = arith.constant 0 : index
    %190 = vector.load %arg23[%c4, %c0_125] : memref<5x192xf32, #tpu.memory_space<vmem>>, vector<1x192xf32>
    tpu.vector_store %arg23[%c4, %c0_125], %188 {strides = array<i32>} : memref<5x192xf32, #tpu.memory_space<vmem>>, vector<1x192xf32>,
    %c1_126 = arith.constant 1 : index
    %c0_127 = arith.constant 0 : index
    %191 = vector.load %arg23[%c1_126, %c0_127] : memref<5x192xf32, #tpu.memory_space<vmem>>, vector<3x192xf32>
    tpu.vector_store %arg23[%c1_126, %c0_127], %187 {strides = array<i32>} : memref<5x192xf32, #tpu.memory_space<vmem>>, vector<3x192xf32>,
    %c0_128 = arith.constant 0 : index
    %c0_129 = arith.constant 0 : index
    %192 = vector.load %arg23[%c0_128, %c0_129] : memref<5x192xf32, #tpu.memory_space<vmem>>, vector<2x192xf32>
    %c1_130 = arith.constant 1 : index
    %c0_131 = arith.constant 0 : index
    %193 = vector.load %arg23[%c1_130, %c0_131] : memref<5x192xf32, #tpu.memory_space<vmem>>, vector<2x192xf32>
    %c2_132 = arith.constant 2 : index
    %c0_133 = arith.constant 0 : index
    %194 = vector.load %arg23[%c2_132, %c0_133] : memref<5x192xf32, #tpu.memory_space<vmem>>, vector<2x192xf32>
    %c3_134 = arith.constant 3 : index
    %c0_135 = arith.constant 0 : index
    %195 = vector.load %arg23[%c3_134, %c0_135] : memref<5x192xf32, #tpu.memory_space<vmem>>, vector<2x192xf32>
    %196 = tpu.concatenate %192, %193, %194, %195 in 1 : vector<2x192xf32>, vector<2x192xf32>, vector<2x192xf32>, vector<2x192xf32> -> vector<2x768xf32>
    %197 = arith.truncf %196 : vector<2x768xf32> to vector<2x768xbf16>
    %c0_136 = arith.constant 0 : index
    %c0_137 = arith.constant 0 : index
    %198 = vector.load %arg16[%c0_136, %c0_137] : memref<768x1xbf16, #tpu.memory_space<vmem>>, vector<768x1xbf16>
    %cst_138 = arith.constant dense<0.000000e+00> : vector<2x1xf32>
    %199 = tpu.matmul %197, %198, %cst_138 {dimension_numbers = #tpu.dot_dimension_numbers<[1], [0], [0], [1], [0, 0, 1, 1], [], []>} : vector<2x768xbf16>, vector<768x1xbf16>, vector<2x1xf32> -> vector<2x1xf32>
    %cst_139 = arith.constant dense<0.000000e+00> : vector<1xf32>
    %200 = vector.multi_reduction <add>, %199, %cst_139 [0] : vector<2x1xf32> to vector<1xf32>
    %201 = vector.shape_cast %200 : vector<1xf32> to vector<1x1xf32>
    %c0_140 = arith.constant 0 : index
    %c0_141 = arith.constant 0 : index
    %202 = vector.load %arg17[%c0_140, %c0_141] : memref<1x1xf32, #tpu.memory_space<vmem>>, vector<1x1xf32>
    %203 = arith.addf %201, %202 : vector<1x1xf32>
    %cst_142 = arith.constant 0.000000e+00 : f32
    %204 = vector.broadcast %cst_142 : f32 to vector<1x1xf32>
    %205 = arith.subf %204, %203 : vector<1x1xf32>
    %206 = math.exp %205 : vector<1x1xf32>
    %cst_143 = arith.constant 1.000000e+00 : f32
    %207 = vector.broadcast %cst_143 : f32 to vector<1x1xf32>
    %208 = arith.addf %207, %206 : vector<1x1xf32>
    %cst_144 = arith.constant 1.000000e+00 : f32
    %209 = vector.broadcast %cst_144 : f32 to vector<1x1xf32>
    %210 = arith.divf %209, %208 : vector<1x1xf32>
    %c0_145 = arith.constant 0 : index
    %c0_146 = arith.constant 0 : index
    %c0_147 = arith.constant 0 : index
    %211 = vector.load %arg18[%c0_145, %c0_146, %c0_147] : memref<1x1x1xf32, #tpu.memory_space<vmem>>, vector<1x1x1xf32>
    %212 = vector.shape_cast %211 : vector<1x1x1xf32> to vector<1x1xf32>
    %213 = vector.shape_cast %210 : vector<1x1xf32> to vector<1x1x1xf32>
    tpu.vector_store %arg18[%c0_145, %c0_146, %c0_147], %213 {strides = array<i32>} : memref<1x1x1xf32, #tpu.memory_space<vmem>>, vector<1x1x1xf32>,
    return
  }
  func.func @transform_0(%arg0: i32) -> (i32, i32, i32) {
    %c0_i32 = arith.constant 0 : i32
    %c0_i32_0 = arith.constant 0 : i32
    %c0_i32_1 = arith.constant 0 : i32
    return %arg0, %c0_i32, %c0_i32_0 : i32, i32, i32
  }
  func.func @transform_1(%arg0: i32) -> (i32, i32) {
    %c0_i32 = arith.constant 0 : i32
    %c0_i32_0 = arith.constant 0 : i32
    %c0_i32_1 = arith.constant 0 : i32
    return %c0_i32, %c0_i32_0 : i32, i32
  }
  func.func @transform_2(%arg0: i32) -> (i32, i32) {
    %c0_i32 = arith.constant 0 : i32
    %c0_i32_0 = arith.constant 0 : i32
    %c0_i32_1 = arith.constant 0 : i32
    return %c0_i32, %c0_i32_0 : i32, i32
  }
  func.func @transform_3(%arg0: i32) -> (i32, i32) {
    %c0_i32 = arith.constant 0 : i32
    %c0_i32_0 = arith.constant 0 : i32
    %c0_i32_1 = arith.constant 0 : i32
    return %c0_i32, %c0_i32_0 : i32, i32
  }
  func.func @transform_4(%arg0: i32) -> (i32, i32) {
    %c0_i32 = arith.constant 0 : i32
    %c0_i32_0 = arith.constant 0 : i32
    %c0_i32_1 = arith.constant 0 : i32
    return %c0_i32, %c0_i32_0 : i32, i32
  }
  func.func @transform_5(%arg0: i32) -> (i32, i32) {
    %c0_i32 = arith.constant 0 : i32
    %c0_i32_0 = arith.constant 0 : i32
    %c0_i32_1 = arith.constant 0 : i32
    return %c0_i32, %c0_i32_0 : i32, i32
  }
  func.func @transform_6(%arg0: i32) -> (i32, i32) {
    %c0_i32 = arith.constant 0 : i32
    %c0_i32_0 = arith.constant 0 : i32
    %c0_i32_1 = arith.constant 0 : i32
    return %c0_i32, %c0_i32_0 : i32, i32
  }
  func.func @transform_7(%arg0: i32) -> (i32, i32) {
    %c0_i32 = arith.constant 0 : i32
    %c0_i32_0 = arith.constant 0 : i32
    %c0_i32_1 = arith.constant 0 : i32
    return %c0_i32, %c0_i32_0 : i32, i32
  }
  func.func @transform_8(%arg0: i32) -> (i32, i32) {
    %c0_i32 = arith.constant 0 : i32
    %c0_i32_0 = arith.constant 0 : i32
    %c0_i32_1 = arith.constant 0 : i32
    return %c0_i32, %c0_i32_0 : i32, i32
  }
  func.func @transform_9(%arg0: i32) -> (i32, i32) {
    %c0_i32 = arith.constant 0 : i32
    %c0_i32_0 = arith.constant 0 : i32
    %c0_i32_1 = arith.constant 0 : i32
    return %c0_i32, %c0_i32_0 : i32, i32
  }
  func.func @transform_10(%arg0: i32) -> (i32, i32) {
    %c0_i32 = arith.constant 0 : i32
    %c0_i32_0 = arith.constant 0 : i32
    %c0_i32_1 = arith.constant 0 : i32
    return %c0_i32, %c0_i32_0 : i32, i32
  }
  func.func @transform_11(%arg0: i32) -> (i32, i32) {
    %c0_i32 = arith.constant 0 : i32
    %c0_i32_0 = arith.constant 0 : i32
    %c0_i32_1 = arith.constant 0 : i32
    return %c0_i32, %c0_i32_0 : i32, i32
  }
  func.func @transform_12(%arg0: i32) -> (i32, i32) {
    %c0_i32 = arith.constant 0 : i32
    %c0_i32_0 = arith.constant 0 : i32
    %c0_i32_1 = arith.constant 0 : i32
    return %c0_i32, %c0_i32_0 : i32, i32
  }
  func.func @transform_13(%arg0: i32) -> (i32, i32) {
    %c0_i32 = arith.constant 0 : i32
    %c0_i32_0 = arith.constant 0 : i32
    %c0_i32_1 = arith.constant 0 : i32
    return %c0_i32, %c0_i32_0 : i32, i32
  }
  func.func @transform_14(%arg0: i32) -> (i32, i32) {
    %c0_i32 = arith.constant 0 : i32
    %c0_i32_0 = arith.constant 0 : i32
    %c0_i32_1 = arith.constant 0 : i32
    return %c0_i32, %c0_i32_0 : i32, i32
  }
  func.func @transform_15(%arg0: i32) -> (i32, i32) {
    %c0_i32 = arith.constant 0 : i32
    %c0_i32_0 = arith.constant 0 : i32
    %c0_i32_1 = arith.constant 0 : i32
    return %c0_i32, %c0_i32_0 : i32, i32
  }
  func.func @transform_16(%arg0: i32) -> (i32, i32) {
    %c0_i32 = arith.constant 0 : i32
    %c0_i32_0 = arith.constant 0 : i32
    %c0_i32_1 = arith.constant 0 : i32
    return %c0_i32, %c0_i32_0 : i32, i32
  }
  func.func @transform_17(%arg0: i32) -> (i32, i32, i32) {
    %c0_i32 = arith.constant 0 : i32
    %c0_i32_0 = arith.constant 0 : i32
    %c0_i32_1 = arith.constant 0 : i32
    return %arg0, %c0_i32, %c0_i32_0 : i32, i32, i32
  }
}

</mosaic_0001>

<llo_original>
// kernel: tpu_custom_call.1
$region0: #{tpu_custom_call.1}
  #allocation0 [shape = 'u32[]', space=smem, size = 0x4, offset = 0x4, fixed_abs, tag = 'smem constant byte address 0x4 - core index']
  #allocation1 [shape = 'u32[144,128]{1,0:T(1,128)}', space=vmem, size = 0x12000, scoped, tag = 'internal scratch']
  #allocation2 [shape = 'f32[34,128]{1,0:T(8,128)}', space=vmem, size = 0x5000, scoped, tag = 'scratch operand']
  #allocation3 [shape = 'f32[18,128]{1,0:T(8,128)}', space=vmem, size = 0x3000, scoped, tag = 'scratch operand']
  #allocation4 [shape = 'f32[10,128]{1,0:T(8,128)}', space=vmem, size = 0x2000, scoped, tag = 'scratch operand']
  #allocation5 [shape = 'f32[6,128]{1,0:T(8,128)}', space=vmem, size = 0x1000, scoped, tag = 'scratch operand']
  #allocation6 [shape = 'f32[5,192]{1,0:T(8,128)}', space=vmem, size = 0x2000, scoped, tag = 'scratch operand']
  #allocation7 [shape = 'f32[1,1]{1,0:T(1,128)S(1)}', space=vmem, size = 0x200, scoped, tag = 'scoped memory for tpu_custom_call.1']
  %s0 = inlined_call_operand.vmem [shape: bf16[2,32,128], index: 0, kind: input, shape index: {}]
  %s1 = inlined_call_operand.vmem [shape: bf16[512,128], index: 1, kind: input, shape index: {}]
  %s2 = inlined_call_operand.vmem [shape: f32[1,128], index: 2, kind: input, shape index: {}]
  %s3 = inlined_call_operand.vmem [shape: bf16[512,128], index: 3, kind: input, shape index: {}]
  %s4 = inlined_call_operand.vmem [shape: f32[1,128], index: 4, kind: input, shape index: {}]
  %s5 = inlined_call_operand.vmem [shape: f32[128,16], index: 5, kind: input, shape index: {}]
  %s6 = inlined_call_operand.vmem [shape: f32[16,128], index: 6, kind: input, shape index: {}]
  %s7 = inlined_call_operand.vmem [shape: bf16[512,128], index: 7, kind: input, shape index: {}]
  %s8 = inlined_call_operand.vmem [shape: f32[1,128], index: 8, kind: input, shape index: {}]
  %s9 = inlined_call_operand.vmem [shape: f32[128,32], index: 9, kind: input, shape index: {}]
  %s10 = inlined_call_operand.vmem [shape: f32[32,128], index: 10, kind: input, shape index: {}]
  %s11 = inlined_call_operand.vmem [shape: bf16[512,192], index: 11, kind: input, shape index: {}]
  %s12 = inlined_call_operand.vmem [shape: f32[1,192], index: 12, kind: input, shape index: {}]
  %s13 = inlined_call_operand.vmem [shape: f32[192,64], index: 13, kind: input, shape index: {}]
  %s14 = inlined_call_operand.vmem [shape: f32[64,192], index: 14, kind: input, shape index: {}]
  %s15 = inlined_call_operand.vmem [shape: bf16[768,1], index: 15, kind: input, shape index: {}]
  %s16 = inlined_call_operand.<no memory space> [shape: f32[1,1], index: 16, kind: input, shape index: {}]
  %s17 = inlined_call_operand.vmem [shape: f32[2,1,1], index: 17, kind: output, shape index: {}]
  %s18 = sld [smem:[#allocation0]]
  $region101: #{tpu_custom_call.1} parent=0
    _
  %s20 = ssub.s32 1, %s18
  %s21 = scalar_select 0, %s20, %s18
  %v22 = vstv %s16
  %23 = vst [vmem:[#allocation7] sm:$0x1] %v22
  loop: start=0, step=1, limit=4
  $region2: #{tpu_custom_call.1} parent=0 // loop_pre_header
    _
  $region3: #{tpu_custom_call.1} parent=0 // loop_header
    %s25 = sphi 0, %s29
    %p26 = scmp.ge.s32.totalorder %s25, 4
    %s35 = sphi 0, %s37
    %s38 = sphi 0, %s35
    %s39 = sphi 0, %s38
    %s55 = sphi 0, %s39
    %s59 = sphi 0, %s59
    %s61 = sphi 0, %s59
    %s62 = sphi 0, %s61
    %s76 = sphi 0, %s62
    %s80 = sphi 0, %s80
    %s82 = sphi 0, %s80
    %s83 = sphi 0, %s82
    %s97 = sphi 0, %s83
    %s101 = sphi 0, %s101
    %s103 = sphi 0, %s101
    %s104 = sphi 0, %s103
    %s118 = sphi 0, %s104
    %s122 = sphi 0, %s122
    %s124 = sphi 0, %s122
    %s125 = sphi 0, %s124
    %s139 = sphi 0, %s125
    %s143 = sphi 0, %s143
    %s145 = sphi 0, %s143
    %s146 = sphi 0, %s145
    %s160 = sphi 0, %s146
    %s164 = sphi 0, %s164
    %s166 = sphi 0, %s164
    %s167 = sphi 0, %s166
    %s181 = sphi 0, %s167
    %s185 = sphi 0, %s185
    %s187 = sphi 0, %s185
    %s188 = sphi 0, %s187
    %s202 = sphi 0, %s188
    %s206 = sphi 0, %s206
    %s208 = sphi 0, %s206
    %s209 = sphi 0, %s208
    %s223 = sphi 0, %s209
    %s227 = sphi 0, %s227
    %s229 = sphi 0, %s227
    %s230 = sphi 0, %s229
    %s244 = sphi 0, %s230
    %s248 = sphi 0, %s248
    %s250 = sphi 0, %s248
    %s251 = sphi 0, %s250
    %s265 = sphi 0, %s251
    %s269 = sphi 0, %s269
    %s271 = sphi 0, %s269
    %s272 = sphi 0, %s271
    %s286 = sphi 0, %s272
    %s290 = sphi 0, %s290
    %s292 = sphi 0, %s290
    %s293 = sphi 0, %s292
    %s307 = sphi 0, %s293
    %s311 = sphi 0, %s311
    %s313 = sphi 0, %s311
    %s314 = sphi 0, %s313
    %s328 = sphi 0, %s314
    %s332 = sphi 0, %s332
    %s334 = sphi 0, %s332
    %s335 = sphi 0, %s334
    %s349 = sphi 0, %s335
    %s353 = sphi 0, %s353
    %s355 = sphi 0, %s353
    %s356 = sphi 0, %s355
    %s370 = sphi 0, %s356
    %s374 = sphi 0, %s374
    %s376 = sphi 0, %s374
    %s377 = sphi 0, %s376
    %s391 = sphi 0, %s377
    %s397 = sphi 0, %s399
    %s400 = sphi 0, %s397
    %s401 = sphi 0, %s400
    %s417 = sphi 0, %s401
  $region4: #{tpu_custom_call.1} parent=0 // loop_header_branch
    %28 = sbr.rel (%p26) target = $region8
  $region5: #{tpu_custom_call.1} parent=0 // loop_body
    %s30 = ssub.s32 %s25, 1
    %s31 = ssub.s32 %s25, 2
    %s32 = sadd.s32 %s25, 1
    %s33 = ssub.s32 %s25, %s32
    %p34 = scmp.eq.s32.totalorder %s33, 0
    %s36 = sadd.s32 %s35, 1
    %s37 = scalar_select %p34, %s35, %s36
    %p40 = pneg %p34
    %p41 = scmp.eq.s32.totalorder %s25, 1
    %p42 = por %p40, %p41
    %p43 = scmp.ne.s32.totalorder %s35, %s38
    %p44 = scmp.eq.s32.totalorder %s25, 0
    %p45 = por %p43, %p44
    %p46 = scmp.ne.s32.totalorder %s35, %s38
    %p47 = scmp.eq.s32.totalorder %s30, 1
    %p48 = por %p46, %p47
    %p49 = scmp.ne.s32.totalorder %s38, %s39
    %p50 = scmp.eq.s32.totalorder %s30, 0
    %p51 = por %p49, %p50
    %p52 = scmp.ne.s32.totalorder %s38, %s39
    %p53 = scmp.eq.s32.totalorder %s31, 1
    %p54 = por %p52, %p53
    %p56 = scmp.ne.s32.totalorder %s39, %s55
    %p57 = scmp.eq.s32.totalorder %s31, 0
    %p58 = por %p56, %p57
    %s60 = sadd.s32 %s59, 1
    %p63 = scmp.eq.s32.totalorder %s25, 1
    %p64 = scmp.ne.s32.totalorder %s59, %s61
    %p65 = scmp.eq.s32.totalorder %s25, 0
    %p66 = por %p64, %p65
    %p67 = scmp.ne.s32.totalorder %s59, %s61
    %p68 = scmp.eq.s32.totalorder %s30, 1
    %p69 = por %p67, %p68
    %p70 = scmp.ne.s32.totalorder %s61, %s62
    %p71 = scmp.eq.s32.totalorder %s30, 0
    %p72 = por %p70, %p71
    %p73 = scmp.ne.s32.totalorder %s61, %s62
    %p74 = scmp.eq.s32.totalorder %s31, 1
    %p75 = por %p73, %p74
    %p77 = scmp.ne.s32.totalorder %s62, %s76
    %p78 = scmp.eq.s32.totalorder %s31, 0
    %p79 = por %p77, %p78
    %s81 = sadd.s32 %s80, 1
    %p84 = scmp.eq.s32.totalorder %s25, 1
    %p85 = scmp.ne.s32.totalorder %s80, %s82
    %p86 = scmp.eq.s32.totalorder %s25, 0
    %p87 = por %p85, %p86
    %p88 = scmp.ne.s32.totalorder %s80, %s82
    %p89 = scmp.eq.s32.totalorder %s30, 1
    %p90 = por %p88, %p89
    %p91 = scmp.ne.s32.totalorder %s82, %s83
    %p92 = scmp.eq.s32.totalorder %s30, 0
    %p93 = por %p91, %p92
    %p94 = scmp.ne.s32.totalorder %s82, %s83
    %p95 = scmp.eq.s32.totalorder %s31, 1
    %p96 = por %p94, %p95
    %p98 = scmp.ne.s32.totalorder %s83, %s97
    %p99 = scmp.eq.s32.totalorder %s31, 0
    %p100 = por %p98, %p99
    %s102 = sadd.s32 %s101, 1
    %p105 = scmp.eq.s32.totalorder %s25, 1
    %p106 = scmp.ne.s32.totalorder %s101, %s103
    %p107 = scmp.eq.s32.totalorder %s25, 0
    %p108 = por %p106, %p107
    %p109 = scmp.ne.s32.totalorder %s101, %s103
    %p110 = scmp.eq.s32.totalorder %s30, 1
    %p111 = por %p109, %p110
    %p112 = scmp.ne.s32.totalorder %s103, %s104
    %p113 = scmp.eq.s32.totalorder %s30, 0
    %p114 = por %p112, %p113
    %p115 = scmp.ne.s32.totalorder %s103, %s104
    %p116 = scmp.eq.s32.totalorder %s31, 1
    %p117 = por %p115, %p116
    %p119 = scmp.ne.s32.totalorder %s104, %s118
    %p120 = scmp.eq.s32.totalorder %s31, 0
    %p121 = por %p119, %p120
    %s123 = sadd.s32 %s122, 1
    %p126 = scmp.eq.s32.totalorder %s25, 1
    %p127 = scmp.ne.s32.totalorder %s122, %s124
    %p128 = scmp.eq.s32.totalorder %s25, 0
    %p129 = por %p127, %p128
    %p130 = scmp.ne.s32.totalorder %s122, %s124
    %p131 = scmp.eq.s32.totalorder %s30, 1
    %p132 = por %p130, %p131
    %p133 = scmp.ne.s32.totalorder %s124, %s125
    %p134 = scmp.eq.s32.totalorder %s30, 0
    %p135 = por %p133, %p134
    %p136 = scmp.ne.s32.totalorder %s124, %s125
    %p137 = scmp.eq.s32.totalorder %s31, 1
    %p138 = por %p136, %p137
    %p140 = scmp.ne.s32.totalorder %s125, %s139
    %p141 = scmp.eq.s32.totalorder %s31, 0
    %p142 = por %p140, %p141
    %s144 = sadd.s32 %s143, 1
    %p147 = scmp.eq.s32.totalorder %s25, 1
    %p148 = scmp.ne.s32.totalorder %s143, %s145
    %p149 = scmp.eq.s32.totalorder %s25, 0
    %p150 = por %p148, %p149
    %p151 = scmp.ne.s32.totalorder %s143, %s145
    %p152 = scmp.eq.s32.totalorder %s30, 1
    %p153 = por %p151, %p152
    %p154 = scmp.ne.s32.totalorder %s145, %s146
    %p155 = scmp.eq.s32.totalorder %s30, 0
    %p156 = por %p154, %p155
    %p157 = scmp.ne.s32.totalorder %s145, %s146
    %p158 = scmp.eq.s32.totalorder %s31, 1
    %p159 = por %p157, %p158
    %p161 = scmp.ne.s32.totalorder %s146, %s160
    %p162 = scmp.eq.s32.totalorder %s31, 0
    %p163 = por %p161, %p162
    %s165 = sadd.s32 %s164, 1
    %p168 = scmp.eq.s32.totalorder %s25, 1
    %p169 = scmp.ne.s32.totalorder %s164, %s166
    %p170 = scmp.eq.s32.totalorder %s25, 0
    %p171 = por %p169, %p170
    %p172 = scmp.ne.s32.totalorder %s164, %s166
    %p173 = scmp.eq.s32.totalorder %s30, 1
    %p174 = por %p172, %p173
    %p175 = scmp.ne.s32.totalorder %s166, %s167
    %p176 = scmp.eq.s32.totalorder %s30, 0
    %p177 = por %p175, %p176
    %p178 = scmp.ne.s32.totalorder %s166, %s167
    %p179 = scmp.eq.s32.totalorder %s31, 1
    %p180 = por %p178, %p179
    %p182 = scmp.ne.s32.totalorder %s167, %s181
    %p183 = scmp.eq.s32.totalorder %s31, 0
    %p184 = por %p182, %p183
    %s186 = sadd.s32 %s185, 1
    %p189 = scmp.eq.s32.totalorder %s25, 1
    %p190 = scmp.ne.s32.totalorder %s185, %s187
    %p191 = scmp.eq.s32.totalorder %s25, 0
    %p192 = por %p190, %p191
    %p193 = scmp.ne.s32.totalorder %s185, %s187
    %p194 = scmp.eq.s32.totalorder %s30, 1
    %p195 = por %p193, %p194
    %p196 = scmp.ne.s32.totalorder %s187, %s188
    %p197 = scmp.eq.s32.totalorder %s30, 0
    %p198 = por %p196, %p197
    %p199 = scmp.ne.s32.totalorder %s187, %s188
    %p200 = scmp.eq.s32.totalorder %s31, 1
    %p201 = por %p199, %p200
    %p203 = scmp.ne.s32.totalorder %s188, %s202
    %p204 = scmp.eq.s32.totalorder %s31, 0
    %p205 = por %p203, %p204
    %s207 = sadd.s32 %s206, 1
    %p210 = scmp.eq.s32.totalorder %s25, 1
    %p211 = scmp.ne.s32.totalorder %s206, %s208
    %p212 = scmp.eq.s32.totalorder %s25, 0
    %p213 = por %p211, %p212
    %p214 = scmp.ne.s32.totalorder %s206, %s208
    %p215 = scmp.eq.s32.totalorder %s30, 1
    %p216 = por %p214, %p215
    %p217 = scmp.ne.s32.totalorder %s208, %s209
    %p218 = scmp.eq.s32.totalorder %s30, 0
    %p219 = por %p217, %p218
    %p220 = scmp.ne.s32.totalorder %s208, %s209
    %p221 = scmp.eq.s32.totalorder %s31, 1
    %p222 = por %p220, %p221
    %p224 = scmp.ne.s32.totalorder %s209, %s223
    %p225 = scmp.eq.s32.totalorder %s31, 0
    %p226 = por %p224, %p225
    %s228 = sadd.s32 %s227, 1
    %p231 = scmp.eq.s32.totalorder %s25, 1
    %p232 = scmp.ne.s32.totalorder %s227, %s229
    %p233 = scmp.eq.s32.totalorder %s25, 0
    %p234 = por %p232, %p233
    %p235 = scmp.ne.s32.totalorder %s227, %s229
    %p236 = scmp.eq.s32.totalorder %s30, 1
    %p237 = por %p235, %p236
    %p238 = scmp.ne.s32.totalorder %s229, %s230
    %p239 = scmp.eq.s32.totalorder %s30, 0
    %p240 = por %p238, %p239
    %p241 = scmp.ne.s32.totalorder %s229, %s230
    %p242 = scmp.eq.s32.totalorder %s31, 1
    %p243 = por %p241, %p242
    %p245 = scmp.ne.s32.totalorder %s230, %s244
    %p246 = scmp.eq.s32.totalorder %s31, 0
    %p247 = por %p245, %p246
    %s249 = sadd.s32 %s248, 1
    %p252 = scmp.eq.s32.totalorder %s25, 1
    %p253 = scmp.ne.s32.totalorder %s248, %s250
    %p254 = scmp.eq.s32.totalorder %s25, 0
    %p255 = por %p253, %p254
    %p256 = scmp.ne.s32.totalorder %s248, %s250
    %p257 = scmp.eq.s32.totalorder %s30, 1
    %p258 = por %p256, %p257
    %p259 = scmp.ne.s32.totalorder %s250, %s251
    %p260 = scmp.eq.s32.totalorder %s30, 0
    %p261 = por %p259, %p260
    %p262 = scmp.ne.s32.totalorder %s250, %s251
    %p263 = scmp.eq.s32.totalorder %s31, 1
    %p264 = por %p262, %p263
    %p266 = scmp.ne.s32.totalorder %s251, %s265
    %p267 = scmp.eq.s32.totalorder %s31, 0
    %p268 = por %p266, %p267
    %s270 = sadd.s32 %s269, 1
    %p273 = scmp.eq.s32.totalorder %s25, 1
    %p274 = scmp.ne.s32.totalorder %s269, %s271
    %p275 = scmp.eq.s32.totalorder %s25, 0
    %p276 = por %p274, %p275
    %p277 = scmp.ne.s32.totalorder %s269, %s271
    %p278 = scmp.eq.s32.totalorder %s30, 1
    %p279 = por %p277, %p278
    %p280 = scmp.ne.s32.totalorder %s271, %s272
    %p281 = scmp.eq.s32.totalorder %s30, 0
    %p282 = por %p280, %p281
    %p283 = scmp.ne.s32.totalorder %s271, %s272
    %p284 = scmp.eq.s32.totalorder %s31, 1
    %p285 = por %p283, %p284
    %p287 = scmp.ne.s32.totalorder %s272, %s286
    %p288 = scmp.eq.s32.totalorder %s31, 0
    %p289 = por %p287, %p288
    %s291 = sadd.s32 %s290, 1
    %p294 = scmp.eq.s32.totalorder %s25, 1
    %p295 = scmp.ne.s32.totalorder %s290, %s292
    %p296 = scmp.eq.s32.totalorder %s25, 0
    %p297 = por %p295, %p296
    %p298 = scmp.ne.s32.totalorder %s290, %s292
    %p299 = scmp.eq.s32.totalorder %s30, 1
    %p300 = por %p298, %p299
    %p301 = scmp.ne.s32.totalorder %s292, %s293
    %p302 = scmp.eq.s32.totalorder %s30, 0
    %p303 = por %p301, %p302
    %p304 = scmp.ne.s32.totalorder %s292, %s293
    %p305 = scmp.eq.s32.totalorder %s31, 1
    %p306 = por %p304, %p305
    %p308 = scmp.ne.s32.totalorder %s293, %s307
    %p309 = scmp.eq.s32.totalorder %s31, 0
    %p310 = por %p308, %p309
    %s312 = sadd.s32 %s311, 1
    %p315 = scmp.eq.s32.totalorder %s25, 1
    %p316 = scmp.ne.s32.totalorder %s311, %s313
    %p317 = scmp.eq.s32.totalorder %s25, 0
    %p318 = por %p316, %p317
    %p319 = scmp.ne.s32.totalorder %s311, %s313
    %p320 = scmp.eq.s32.totalorder %s30, 1
    %p321 = por %p319, %p320
    %p322 = scmp.ne.s32.totalorder %s313, %s314
    %p323 = scmp.eq.s32.totalorder %s30, 0
    %p324 = por %p322, %p323
    %p325 = scmp.ne.s32.totalorder %s313, %s314
    %p326 = scmp.eq.s32.totalorder %s31, 1
    %p327 = por %p325, %p326
    %p329 = scmp.ne.s32.totalorder %s314, %s328
    %p330 = scmp.eq.s32.totalorder %s31, 0
    %p331 = por %p329, %p330
    %s333 = sadd.s32 %s332, 1
    %p336 = scmp.eq.s32.totalorder %s25, 1
    %p337 = scmp.ne.s32.totalorder %s332, %s334
    %p338 = scmp.eq.s32.totalorder %s25, 0
    %p339 = por %p337, %p338
    %p340 = scmp.ne.s32.totalorder %s332, %s334
    %p341 = scmp.eq.s32.totalorder %s30, 1
    %p342 = por %p340, %p341
    %p343 = scmp.ne.s32.totalorder %s334, %s335
    %p344 = scmp.eq.s32.totalorder %s30, 0
    %p345 = por %p343, %p344
    %p346 = scmp.ne.s32.totalorder %s334, %s335
    %p347 = scmp.eq.s32.totalorder %s31, 1
    %p348 = por %p346, %p347
    %p350 = scmp.ne.s32.totalorder %s335, %s349
    %p351 = scmp.eq.s32.totalorder %s31, 0
    %p352 = por %p350, %p351
    %s354 = sadd.s32 %s353, 1
    %p357 = scmp.eq.s32.totalorder %s25, 1
    %p358 = scmp.ne.s32.totalorder %s353, %s355
    %p359 = scmp.eq.s32.totalorder %s25, 0
    %p360 = por %p358, %p359
    %p361 = scmp.ne.s32.totalorder %s353, %s355
    %p362 = scmp.eq.s32.totalorder %s30, 1
    %p363 = por %p361, %p362
    %p364 = scmp.ne.s32.totalorder %s355, %s356
    %p365 = scmp.eq.s32.totalorder %s30, 0
    %p366 = por %p364, %p365
    %p367 = scmp.ne.s32.totalorder %s355, %s356
    %p368 = scmp.eq.s32.totalorder %s31, 1
    %p369 = por %p367, %p368
    %p371 = scmp.ne.s32.totalorder %s356, %s370
    %p372 = scmp.eq.s32.totalorder %s31, 0
    %p373 = por %p371, %p372
    %s375 = sadd.s32 %s374, 1
    %p378 = scmp.eq.s32.totalorder %s25, 1
    %p379 = scmp.ne.s32.totalorder %s374, %s376
    %p380 = scmp.eq.s32.totalorder %s25, 0
    %p381 = por %p379, %p380
    %p382 = scmp.ne.s32.totalorder %s374, %s376
    %p383 = scmp.eq.s32.totalorder %s30, 1
    %p384 = por %p382, %p383
    %p385 = scmp.ne.s32.totalorder %s376, %s377
    %p386 = scmp.eq.s32.totalorder %s30, 0
    %p387 = por %p385, %p386
    %p388 = scmp.ne.s32.totalorder %s376, %s377
    %p389 = scmp.eq.s32.totalorder %s31, 1
    %p390 = por %p388, %p389
    %p392 = scmp.ne.s32.totalorder %s377, %s391
    %p393 = scmp.eq.s32.totalorder %s31, 0
    %p394 = por %p392, %p393
    %s395 = ssub.s32 %s25, %s32
    %p396 = scmp.eq.s32.totalorder %s395, 0
    %s398 = sadd.s32 %s397, 1
    %s399 = scalar_select %p396, %s397, %s398
    %p402 = pneg %p396
    %p403 = scmp.eq.s32.totalorder %s25, 1
    %p404 = por %p402, %p403
    %p405 = scmp.ne.s32.totalorder %s397, %s400
    %p406 = scmp.eq.s32.totalorder %s25, 0
    %p407 = por %p405, %p406
    %p408 = scmp.ne.s32.totalorder %s397, %s400
    %p409 = scmp.eq.s32.totalorder %s30, 1
    %p410 = por %p408, %p409
    %p411 = scmp.ne.s32.totalorder %s400, %s401
    %p412 = scmp.eq.s32.totalorder %s30, 0
    %p413 = por %p411, %p412
    %p414 = scmp.ne.s32.totalorder %s400, %s401
    %p415 = scmp.eq.s32.totalorder %s31, 1
    %p416 = por %p414, %p415
    %p418 = scmp.ne.s32.totalorder %s401, %s417
    %p419 = scmp.eq.s32.totalorder %s31, 0
    %p420 = por %p418, %p419
    %p421 = scmp.le.s32.totalorder 1, %s25
    %p422 = scmp.lt.s32.totalorder %s25, 3
    %p423 = pnand %p421, %p422
    %p424 = pneg %p423
    // Predicated region
    $region9: #{tpu_custom_call.1} parent=5 // pred_check
      _
    $region10: #{tpu_custom_call.1} parent=5 // pred_check_branch
      %426 = sbr.rel (%p423) target = $region12
    $region11: #{tpu_custom_call.1} parent=5 // pred_region
      %s427 = ssub.s32 %s25, 1
      // Predicated region
      $region13: #{tpu_custom_call.1} parent=11 // pred_check
        %p428 = pneg %p72
      $region14: #{tpu_custom_call.1} parent=11 // pred_check_branch
        %430 = sbr.rel (%p428) target = $region16
      $region15: #{tpu_custom_call.1} parent=11 // pred_region
        _
      $region16: #{tpu_custom_call.1} parent=11 // pred_fallthru
        _
      // Predicated region
      $region17: #{tpu_custom_call.1} parent=11 // pred_check
        %p431 = pneg %p93
      $region18: #{tpu_custom_call.1} parent=11 // pred_check_branch
        %433 = sbr.rel (%p431) target = $region20
      $region19: #{tpu_custom_call.1} parent=11 // pred_region
        _
      $region20: #{tpu_custom_call.1} parent=11 // pred_fallthru
        _
      // Predicated region
      $region21: #{tpu_custom_call.1} parent=11 // pred_check
        %p434 = pneg %p114
      $region22: #{tpu_custom_call.1} parent=11 // pred_check_branch
        %436 = sbr.rel (%p434) target = $region24
      $region23: #{tpu_custom_call.1} parent=11 // pred_region
        _
      $region24: #{tpu_custom_call.1} parent=11 // pred_fallthru
        _
      // Predicated region
      $region25: #{tpu_custom_call.1} parent=11 // pred_check
        %p437 = pneg %p135
      $region26: #{tpu_custom_call.1} parent=11 // pred_check_branch
        %439 = sbr.rel (%p437) target = $region28
      $region27: #{tpu_custom_call.1} parent=11 // pred_region
        _
      $region28: #{tpu_custom_call.1} parent=11 // pred_fallthru
        _
      // Predicated region
      $region29: #{tpu_custom_call.1} parent=11 // pred_check
        %p440 = pneg %p156
      $region30: #{tpu_custom_call.1} parent=11 // pred_check_branch
        %442 = sbr.rel (%p440) target = $region32
      $region31: #{tpu_custom_call.1} parent=11 // pred_region
        _
      $region32: #{tpu_custom_call.1} parent=11 // pred_fallthru
        _
      // Predicated region
      $region33: #{tpu_custom_call.1} parent=11 // pred_check
        %p443 = pneg %p177
      $region34: #{tpu_custom_call.1} parent=11 // pred_check_branch
        %445 = sbr.rel (%p443) target = $region36
      $region35: #{tpu_custom_call.1} parent=11 // pred_region
        _
      $region36: #{tpu_custom_call.1} parent=11 // pred_fallthru
        _
      // Predicated region
      $region37: #{tpu_custom_call.1} parent=11 // pred_check
        %p446 = pneg %p198
      $region38: #{tpu_custom_call.1} parent=11 // pred_check_branch
        %448 = sbr.rel (%p446) target = $region40
      $region39: #{tpu_custom_call.1} parent=11 // pred_region
        _
      $region40: #{tpu_custom_call.1} parent=11 // pred_fallthru
        _
      // Predicated region
      $region41: #{tpu_custom_call.1} parent=11 // pred_check
        %p449 = pneg %p219
      $region42: #{tpu_custom_call.1} parent=11 // pred_check_branch
        %451 = sbr.rel (%p449) target = $region44
      $region43: #{tpu_custom_call.1} parent=11 // pred_region
        _
      $region44: #{tpu_custom_call.1} parent=11 // pred_fallthru
        _
      // Predicated region
      $region45: #{tpu_custom_call.1} parent=11 // pred_check
        %p452 = pneg %p240
      $region46: #{tpu_custom_call.1} parent=11 // pred_check_branch
        %454 = sbr.rel (%p452) target = $region48
      $region47: #{tpu_custom_call.1} parent=11 // pred_region
        _
      $region48: #{tpu_custom_call.1} parent=11 // pred_fallthru
        _
      // Predicated region
      $region49: #{tpu_custom_call.1} parent=11 // pred_check
        %p455 = pneg %p261
      $region50: #{tpu_custom_call.1} parent=11 // pred_check_branch
        %457 = sbr.rel (%p455) target = $region52
      $region51: #{tpu_custom_call.1} parent=11 // pred_region
        _
      $region52: #{tpu_custom_call.1} parent=11 // pred_fallthru
        _
      // Predicated region
      $region53: #{tpu_custom_call.1} parent=11 // pred_check
        %p458 = pneg %p282
      $region54: #{tpu_custom_call.1} parent=11 // pred_check_branch
        %460 = sbr.rel (%p458) target = $region56
      $region55: #{tpu_custom_call.1} parent=11 // pred_region
        _
      $region56: #{tpu_custom_call.1} parent=11 // pred_fallthru
        _
      // Predicated region
      $region57: #{tpu_custom_call.1} parent=11 // pred_check
        %p461 = pneg %p303
      $region58: #{tpu_custom_call.1} parent=11 // pred_check_branch
        %463 = sbr.rel (%p461) target = $region60
      $region59: #{tpu_custom_call.1} parent=11 // pred_region
        _
      $region60: #{tpu_custom_call.1} parent=11 // pred_fallthru
        _
      // Predicated region
      $region61: #{tpu_custom_call.1} parent=11 // pred_check
        %p464 = pneg %p324
      $region62: #{tpu_custom_call.1} parent=11 // pred_check_branch
        %466 = sbr.rel (%p464) target = $region64
      $region63: #{tpu_custom_call.1} parent=11 // pred_region
        _
      $region64: #{tpu_custom_call.1} parent=11 // pred_fallthru
        _
      // Predicated region
      $region65: #{tpu_custom_call.1} parent=11 // pred_check
        %p467 = pneg %p345
      $region66: #{tpu_custom_call.1} parent=11 // pred_check_branch
        %469 = sbr.rel (%p467) target = $region68
      $region67: #{tpu_custom_call.1} parent=11 // pred_region
        _
      $region68: #{tpu_custom_call.1} parent=11 // pred_fallthru
        _
      // Predicated region
      $region69: #{tpu_custom_call.1} parent=11 // pred_check
        %p470 = pneg %p366
      $region70: #{tpu_custom_call.1} parent=11 // pred_check_branch
        %472 = sbr.rel (%p470) target = $region72
      $region71: #{tpu_custom_call.1} parent=11 // pred_region
        _
      $region72: #{tpu_custom_call.1} parent=11 // pred_fallthru
        _
      // Predicated region
      $region73: #{tpu_custom_call.1} parent=11 // pred_check
        %p473 = pneg %p387
      $region74: #{tpu_custom_call.1} parent=11 // pred_check_branch
        %475 = sbr.rel (%p473) target = $region76
      $region75: #{tpu_custom_call.1} parent=11 // pred_region
        _
      $region76: #{tpu_custom_call.1} parent=11 // pred_fallthru
        _
    $region12: #{tpu_custom_call.1} parent=5 // pred_fallthru
      _
    %p476 = scmp.lt.s32.totalorder %s25, 2
    // Predicated region
    $region77: #{tpu_custom_call.1} parent=5 // pred_check
      %p477 = pneg %p476
    $region78: #{tpu_custom_call.1} parent=5 // pred_check_branch
      %479 = sbr.rel (%p477) target = $region80
    $region79: #{tpu_custom_call.1} parent=5 // pred_region
      // Predicated region
      $region81: #{tpu_custom_call.1} parent=79 // pred_check
        %p480 = pneg %p45
      $region82: #{tpu_custom_call.1} parent=79 // pred_check_branch
        %482 = sbr.rel (%p480) target = $region84
      $region83: #{tpu_custom_call.1} parent=79 // pred_region
        %p483 = scmp.lt.s32.totalorder %s25, 1
        %s484 = scalar_select %p483, %s25, 1
        %s485 = smul.addr %s484, 4
        %s486 = smul.addr %s485, 4
        %s487 = scalar_lea.vmem %s0, %s486
      $region84: #{tpu_custom_call.1} parent=79 // pred_fallthru
        _
    $region80: #{tpu_custom_call.1} parent=5 // pred_fallthru
      _
    %p488 = scmp.le.s32.totalorder 1, %s25
    %p489 = scmp.lt.s32.totalorder %s25, 3
    %p490 = pnand %p488, %p489
    %p491 = pneg %p490
    // Predicated region
    $region85: #{tpu_custom_call.1} parent=5 // pred_check
      _
    $region86: #{tpu_custom_call.1} parent=5 // pred_check_branch
      %493 = sbr.rel (%p490) target = $region88
    $region87: #{tpu_custom_call.1} parent=5 // pred_region
      %s494 = ssub.s32 %s25, 1
      %p495 = scmp.lt.s32.totalorder %s30, 1
      %s496 = scalar_select %p495, %s30, 1
      %s497 = smul.addr %s496, 4
      %s498 = smul.addr %s497, 4
      %s499 = scalar_lea.vmem %s0, %s498
      %p500 = pneg %p51
      %p501 = pneg %p48
      %p502 = pneg %p72
      %p503 = pneg %p69
      %p504 = pneg %p93
      %p505 = pneg %p90
      %p506 = pneg %p114
      %p507 = pneg %p111
      %p508 = pneg %p135
      %p509 = pneg %p132
      %p510 = pneg %p156
      %p511 = pneg %p153
      %p512 = pneg %p177
      %p513 = pneg %p174
      %p514 = pneg %p198
      %p515 = pneg %p195
      %p516 = pneg %p219
      %p517 = pneg %p216
      %p518 = pneg %p240
      %p519 = pneg %p237
      %p520 = pneg %p261
      %p521 = pneg %p258
      %p522 = pneg %p282
      %p523 = pneg %p279
      %p524 = pneg %p303
      %p525 = pneg %p300
      %p526 = pneg %p324
      %p527 = pneg %p321
      %p528 = pneg %p345
      %p529 = pneg %p342
      %p530 = pneg %p366
      %p531 = pneg %p363
      %p532 = pneg %p387
      %p533 = pneg %p384
      %p534 = pneg %p413
      %p535 = pneg %p410
      %p536 = scmp.lt.s32.totalorder %s30, 1
      %s537 = scalar_select %p536, %s30, 1
      %s538 = scalar_lea.vmem %s17, %s537
      %p539 = scmp.lt.s32.totalorder %s30, 1
      %s540 = scalar_select %p539, %s30, 1
      %s541 = smul.addr %s540, 4
      %s542 = smul.addr %s541, 4
      %s543 = scalar_lea.vmem %s0, %s542
      %p544 = scmp.lt.s32.totalorder %s30, 1
      %s545 = scalar_select %p544, %s30, 1
      %s546 = scalar_lea.vmem %s17, %s545
      %548 = vst [vmem:[#allocation2] sm:$0x1] 0.0
      %549 = vst [vmem:[#allocation2 + $0x21] sm:$0x1] 0.0
      %v550 = vld [vmem:[%s543] sm:$0xf]
      %v551 = vld [vmem:[%s543 + $0x4] sm:$0xf]
      %v552 = vld [vmem:[%s543 + $0x8] sm:$0xf]
      %v553 = vld [vmem:[%s543 + $0xc] sm:$0xf]
      %v554 = vunpack.c.l.bf16 %v550
      %v555 = vunpack.c.l.bf16 %v551
      %v556 = vunpack.c.l.bf16 %v552
      %v557 = vunpack.c.l.bf16 %v553
      %558 = vst [vmem:[#allocation2 + $0x1] sm:$0xff] %v554
      %559 = vst [vmem:[#allocation2 + $0x9] sm:$0xff] %v555
      %560 = vst [vmem:[#allocation2 + $0x11] sm:$0xff] %v556
      %561 = vst [vmem:[#allocation2 + $0x19] sm:$0xff] %v557
      %v562 = vld [vmem:[#allocation2] ss:$2 sm:$0xff]
      %s563 = scalar_lea.vmem [#allocation2], 16
      %v564 = vld [vmem:[%s563] ss:$2 sm:$0xff]
      %s565 = scalar_lea.vmem [#allocation2], 1
      %v566 = vld [vmem:[%s565] ss:$2 sm:$0xff]
      %s567 = scalar_lea.vmem [#allocation2], 17
      %v568 = vld [vmem:[%s567] ss:$2 sm:$0xff]
      %s569 = scalar_lea.vmem [#allocation2], 2
      %v570 = vld [vmem:[%s569] ss:$2 sm:$0xff]
      %s571 = scalar_lea.vmem [#allocation2], 18
      %v572 = vld [vmem:[%s571] ss:$2 sm:$0xff]
      %s573 = scalar_lea.vmem [#allocation2], 3
      %v574 = vld [vmem:[%s573] ss:$2 sm:$0xff]
      %s575 = scalar_lea.vmem [#allocation2], 19
      %v576 = vld [vmem:[%s575] ss:$2 sm:$0xff]
      %v577 = vpack.c.bf16 %v564, %v562
      %v578 = vpack.c.bf16 %v568, %v566
      %v579 = vpack.c.bf16 %v572, %v570
      %v580 = vpack.c.bf16 %v576, %v574
      %v581 = vld [vmem:[%s1] sm:$0xf]
      %v582 = vld [vmem:[%s1 + $0x4] sm:$0xf]
      %v583 = vld [vmem:[%s1 + $0x8] sm:$0xf]
      %v584 = vld [vmem:[%s1 + $0xc] sm:$0xf]
      %v585 = vld [vmem:[%s1 + $0x10] sm:$0xf]
      %v586 = vld [vmem:[%s1 + $0x14] sm:$0xf]
      %v587 = vld [vmem:[%s1 + $0x18] sm:$0xf]
      %v588 = vld [vmem:[%s1 + $0x1c] sm:$0xf]
      %v589 = vld [vmem:[%s1 + $0x20] sm:$0xf]
      %v590 = vld [vmem:[%s1 + $0x24] sm:$0xf]
      %v591 = vld [vmem:[%s1 + $0x28] sm:$0xf]
      %v592 = vld [vmem:[%s1 + $0x2c] sm:$0xf]
      %v593 = vld [vmem:[%s1 + $0x30] sm:$0xf]
      %v594 = vld [vmem:[%s1 + $0x34] sm:$0xf]
      %v595 = vld [vmem:[%s1 + $0x38] sm:$0xf]
      %v596 = vld [vmem:[%s1 + $0x3c] sm:$0xf]
      %v597 = vld [vmem:[%s1 + $0x40] sm:$0xf]
      %v598 = vld [vmem:[%s1 + $0x44] sm:$0xf]
      %v599 = vld [vmem:[%s1 + $0x48] sm:$0xf]
      %v600 = vld [vmem:[%s1 + $0x4c] sm:$0xf]
      %v601 = vld [vmem:[%s1 + $0x50] sm:$0xf]
      %v602 = vld [vmem:[%s1 + $0x54] sm:$0xf]
      %v603 = vld [vmem:[%s1 + $0x58] sm:$0xf]
      %v604 = vld [vmem:[%s1 + $0x5c] sm:$0xf]
      %v605 = vld [vmem:[%s1 + $0x60] sm:$0xf]
      %v606 = vld [vmem:[%s1 + $0x64] sm:$0xf]
      %v607 = vld [vmem:[%s1 + $0x68] sm:$0xf]
      %v608 = vld [vmem:[%s1 + $0x6c] sm:$0xf]
      %v609 = vld [vmem:[%s1 + $0x70] sm:$0xf]
      %v610 = vld [vmem:[%s1 + $0x74] sm:$0xf]
      %v611 = vld [vmem:[%s1 + $0x78] sm:$0xf]
      %v612 = vld [vmem:[%s1 + $0x7c] sm:$0xf]
      %v613 = vld [vmem:[%s1 + $0x80] sm:$0xf]
      %v614 = vld [vmem:[%s1 + $0x84] sm:$0xf]
      %v615 = vld [vmem:[%s1 + $0x88] sm:$0xf]
      %v616 = vld [vmem:[%s1 + $0x8c] sm:$0xf]
      %v617 = vld [vmem:[%s1 + $0x90] sm:$0xf]
      %v618 = vld [vmem:[%s1 + $0x94] sm:$0xf]
      %v619 = vld [vmem:[%s1 + $0x98] sm:$0xf]
      %v620 = vld [vmem:[%s1 + $0x9c] sm:$0xf]
      %v621 = vld [vmem:[%s1 + $0xa0] sm:$0xf]
      %v622 = vld [vmem:[%s1 + $0xa4] sm:$0xf]
      %v623 = vld [vmem:[%s1 + $0xa8] sm:$0xf]
      %v624 = vld [vmem:[%s1 + $0xac] sm:$0xf]
      %v625 = vld [vmem:[%s1 + $0xb0] sm:$0xf]
      %v626 = vld [vmem:[%s1 + $0xb4] sm:$0xf]
      %v627 = vld [vmem:[%s1 + $0xb8] sm:$0xf]
      %v628 = vld [vmem:[%s1 + $0xbc] sm:$0xf]
      %v629 = vld [vmem:[%s1 + $0xc0] sm:$0xf]
      %v630 = vld [vmem:[%s1 + $0xc4] sm:$0xf]
      %v631 = vld [vmem:[%s1 + $0xc8] sm:$0xf]
      %v632 = vld [vmem:[%s1 + $0xcc] sm:$0xf]
      %v633 = vld [vmem:[%s1 + $0xd0] sm:$0xf]
      %v634 = vld [vmem:[%s1 + $0xd4] sm:$0xf]
      %v635 = vld [vmem:[%s1 + $0xd8] sm:$0xf]
      %v636 = vld [vmem:[%s1 + $0xdc] sm:$0xf]
      %v637 = vld [vmem:[%s1 + $0xe0] sm:$0xf]
      %v638 = vld [vmem:[%s1 + $0xe4] sm:$0xf]
      %v639 = vld [vmem:[%s1 + $0xe8] sm:$0xf]
      %v640 = vld [vmem:[%s1 + $0xec] sm:$0xf]
      %v641 = vld [vmem:[%s1 + $0xf0] sm:$0xf]
      %v642 = vld [vmem:[%s1 + $0xf4] sm:$0xf]
      %v643 = vld [vmem:[%s1 + $0xf8] sm:$0xf]
      %v644 = vld [vmem:[%s1 + $0xfc] sm:$0xf]
      %v645 = vld [vmem:[%s2] sm:$0x1]
      %v647 = vlaneseq
      %v648 = vshrl.u32 %v647, 7
      %v649 = vsub.s32 0, %v648
      %v650 = vrot.slane %v645, %v649
      %v716 = vunpack.c.l.b16 %v581
      %v717 = vunpack.c.l.b16 %v582
      %v718 = vunpack.c.l.b16 %v583
      %v719 = vunpack.c.l.b16 %v584
      %v720 = vunpack.c.l.b16 %v585
      %v721 = vunpack.c.l.b16 %v586
      %v722 = vunpack.c.l.b16 %v587
      %v723 = vunpack.c.l.b16 %v588
      %v724 = vunpack.c.l.b16 %v589
      %v725 = vunpack.c.l.b16 %v590
      %v726 = vunpack.c.l.b16 %v591
      %v727 = vunpack.c.l.b16 %v592
      %v728 = vunpack.c.l.b16 %v593
      %v729 = vunpack.c.l.b16 %v594
      %v730 = vunpack.c.l.b16 %v595
      %v731 = vunpack.c.l.b16 %v596
      %v732 = vunpack.c.l.b16 %v597
      %v733 = vunpack.c.l.b16 %v598
      %v734 = vunpack.c.l.b16 %v599
      %v735 = vunpack.c.l.b16 %v600
      %v736 = vunpack.c.l.b16 %v601
      %v737 = vunpack.c.l.b16 %v602
      %v738 = vunpack.c.l.b16 %v603
      %v739 = vunpack.c.l.b16 %v604
      %v740 = vunpack.c.l.b16 %v605
      %v741 = vunpack.c.l.b16 %v606
      %v742 = vunpack.c.l.b16 %v607
      %v743 = vunpack.c.l.b16 %v608
      %v744 = vunpack.c.l.b16 %v609
      %v745 = vunpack.c.l.b16 %v610
      %v746 = vunpack.c.l.b16 %v611
      %v747 = vunpack.c.l.b16 %v612
      %v748 = vunpack.c.l.b16 %v613
      %v749 = vunpack.c.l.b16 %v614
      %v750 = vunpack.c.l.b16 %v615
      %v751 = vunpack.c.l.b16 %v616
      %v752 = vunpack.c.l.b16 %v617
      %v753 = vunpack.c.l.b16 %v618
      %v754 = vunpack.c.l.b16 %v619
      %v755 = vunpack.c.l.b16 %v620
      %v756 = vunpack.c.l.b16 %v621
      %v757 = vunpack.c.l.b16 %v622
      %v758 = vunpack.c.l.b16 %v623
      %v759 = vunpack.c.l.b16 %v624
      %v760 = vunpack.c.l.b16 %v625
      %v761 = vunpack.c.l.b16 %v626
      %v762 = vunpack.c.l.b16 %v627
      %v763 = vunpack.c.l.b16 %v628
      %v764 = vunpack.c.l.b16 %v629
      %v765 = vunpack.c.l.b16 %v630
      %v766 = vunpack.c.l.b16 %v631
      %v767 = vunpack.c.l.b16 %v632
      %v768 = vunpack.c.l.b16 %v633
      %v769 = vunpack.c.l.b16 %v634
      %v770 = vunpack.c.l.b16 %v635
      %v771 = vunpack.c.l.b16 %v636
      %v772 = vunpack.c.l.b16 %v637
      %v773 = vunpack.c.l.b16 %v638
      %v774 = vunpack.c.l.b16 %v639
      %v775 = vunpack.c.l.b16 %v640
      %v776 = vunpack.c.l.b16 %v641
      %v777 = vunpack.c.l.b16 %v642
      %v778 = vunpack.c.l.b16 %v643
      %v779 = vunpack.c.l.b16 %v644
      %v780 = vpack.c.b16 %v717, %v716
      %v781 = vpack.c.b16 %v719, %v718
      %v782 = vpack.c.b16 %v721, %v720
      %v783 = vpack.c.b16 %v723, %v722
      %v784 = vpack.c.b16 %v725, %v724
      %v785 = vpack.c.b16 %v727, %v726
      %v786 = vpack.c.b16 %v729, %v728
      %v787 = vpack.c.b16 %v731, %v730
      %v788 = vpack.c.b16 %v733, %v732
      %v789 = vpack.c.b16 %v735, %v734
      %v790 = vpack.c.b16 %v737, %v736
      %v791 = vpack.c.b16 %v739, %v738
      %v792 = vpack.c.b16 %v741, %v740
      %v793 = vpack.c.b16 %v743, %v742
      %v794 = vpack.c.b16 %v745, %v744
      %v795 = vpack.c.b16 %v747, %v746
      %v796 = vpack.c.b16 %v749, %v748
      %v797 = vpack.c.b16 %v751, %v750
      %v798 = vpack.c.b16 %v753, %v752
      %v799 = vpack.c.b16 %v755, %v754
      %v800 = vpack.c.b16 %v757, %v756
      %v801 = vpack.c.b16 %v759, %v758
      %v802 = vpack.c.b16 %v761, %v760
      %v803 = vpack.c.b16 %v763, %v762
      %v804 = vpack.c.b16 %v765, %v764
      %v805 = vpack.c.b16 %v767, %v766
      %v806 = vpack.c.b16 %v769, %v768
      %v807 = vpack.c.b16 %v771, %v770
      %v808 = vpack.c.b16 %v773, %v772
      %v809 = vpack.c.b16 %v775, %v774
      %v810 = vpack.c.b16 %v777, %v776
      %v811 = vpack.c.b16 %v779, %v778
      %844 = vmatprep.subr.bf16.mxu0 0
      %845 = vmatpush1.bf16.msra.mxu0 %v780
      %846 = vmatprep.subr.bf16.mxu0 0
      %847 = vmatpush1.bf16.msra.mxu0 %v781
      %848 = vmatprep.subr.bf16.mxu0 0
      %849 = vmatpush1.bf16.msra.mxu0 %v782
      %850 = vmatprep.subr.bf16.mxu0 0
      %851 = vmatpush1.bf16.msra.mxu0 %v783
      %852 = vmatprep.subr.bf16.mxu0 0
      %853 = vmatpush1.bf16.msra.mxu0 %v784
      %854 = vmatprep.subr.bf16.mxu0 0
      %855 = vmatpush1.bf16.msra.mxu0 %v785
      %856 = vmatprep.subr.bf16.mxu0 0
      %857 = vmatpush1.bf16.msra.mxu0 %v786
      %858 = vmatprep.subr.bf16.mxu0 0
      %859 = vmatpush1.bf16.msra.mxu0 %v787
      %860 = vmatprep.subr.bf16.mxu0 0
      %861 = vmatpush1.bf16.msra.mxu0 %v788
      %862 = vmatprep.subr.bf16.mxu0 0
      %863 = vmatpush1.bf16.msra.mxu0 %v789
      %864 = vmatprep.subr.bf16.mxu0 0
      %865 = vmatpush1.bf16.msra.mxu0 %v790
      %866 = vmatprep.subr.bf16.mxu0 0
      %867 = vmatpush1.bf16.msra.mxu0 %v791
      %868 = vmatprep.subr.bf16.mxu0 0
      %869 = vmatpush1.bf16.msra.mxu0 %v792
      %870 = vmatprep.subr.bf16.mxu0 0
      %871 = vmatpush1.bf16.msra.mxu0 %v793
      %872 = vmatprep.subr.bf16.mxu0 0
      %873 = vmatpush1.bf16.msra.mxu0 %v794
      %874 = vmatprep.subr.bf16.mxu0 0
      %875 = vmatpush1.bf16.msra.mxu0 %v795
      %876 = vmatprep.mubr.bf16.mxu0 %v578
      %877 = vmatmul.mubr.bf16.gmra.mrb[0].mxu0 %v577
      %v878 = vpop.f32.mrb[0].mxu0
      %v879 = vadd.f32 %v650, %v878
      %v880 = vpop.f32.mrb[0].mxu0
      %v881 = vpop.f32.mrb[0].mxu0
      %v882 = vadd.f32 %v650, %v881
      %v883 = vpop.f32.mrb[0].mxu0
      %884 = vdwg.mxu0
      %885 = vmatprep.subr.bf16.mxu0 0
      %886 = vmatpush1.bf16.msra.mxu0 %v796
      %887 = vmatprep.subr.bf16.mxu0 0
      %888 = vmatpush1.bf16.msra.mxu0 %v797
      %889 = vmatprep.subr.bf16.mxu0 0
      %890 = vmatpush1.bf16.msra.mxu0 %v798
      %891 = vmatprep.subr.bf16.mxu0 0
      %892 = vmatpush1.bf16.msra.mxu0 %v799
      %893 = vmatprep.subr.bf16.mxu0 0
      %894 = vmatpush1.bf16.msra.mxu0 %v800
      %895 = vmatprep.subr.bf16.mxu0 0
      %896 = vmatpush1.bf16.msra.mxu0 %v801
      %897 = vmatprep.subr.bf16.mxu0 0
      %898 = vmatpush1.bf16.msra.mxu0 %v802
      %899 = vmatprep.subr.bf16.mxu0 0
      %900 = vmatpush1.bf16.msra.mxu0 %v803
      %901 = vmatprep.subr.bf16.mxu0 0
      %902 = vmatpush1.bf16.msra.mxu0 %v804
      %903 = vmatprep.subr.bf16.mxu0 0
      %904 = vmatpush1.bf16.msra.mxu0 %v805
      %905 = vmatprep.subr.bf16.mxu0 0
      %906 = vmatpush1.bf16.msra.mxu0 %v806
      %907 = vmatprep.subr.bf16.mxu0 0
      %908 = vmatpush1.bf16.msra.mxu0 %v807
      %909 = vmatprep.subr.bf16.mxu0 0
      %910 = vmatpush1.bf16.msra.mxu0 %v808
      %911 = vmatprep.subr.bf16.mxu0 0
      %912 = vmatpush1.bf16.msra.mxu0 %v809
      %913 = vmatprep.subr.bf16.mxu0 0
      %914 = vmatpush1.bf16.msra.mxu0 %v810
      %915 = vmatprep.subr.bf16.mxu0 0
      %916 = vmatpush1.bf16.msra.mxu0 %v811
      %917 = vmatprep.mubr.bf16.mxu0 %v580
      %918 = vmatmul.mubr.bf16.gmra.mrb[0].mxu0 %v579
      %v919 = vpop.f32.mrb[0].mxu0
      %v920 = vadd.f32 %v879, %v919
      %v921 = vpop.f32.mrb[0].mxu0
      %v922 = vpop.f32.mrb[0].mxu0
      %v923 = vadd.f32 %v882, %v922
      %v924 = vpop.f32.mrb[0].mxu0
      %925 = vdwg.mxu0
      %vm926 = vcmp.gt.f32.partialorder %v920, 0.0
      %vm927 = vcmp.gt.f32.partialorder %v923, 0.0
      %v928 = vmin.f32 %v920, 0.0
      %v929 = vmin.f32 %v923, 0.0
      %v930 = vmul.f32 %v928, 1.442695
      %v931 = vpow.pop %v930
      %v932 = vmul.f32 %v929, 1.442695
      %v933 = vpow.pop %v932
      %v934 = vsub.f32 %v931, 1.0
      %v935 = vsub.f32 %v933, 1.0
      %v936 = vsel %vm926, %v920, %v934
      %v937 = vsel %vm927, %v923, %v935
      %938 = vst [vmem:[#allocation3] sm:$0x1] 0.0
      %939 = vst [vmem:[#allocation3 + $0x11] sm:$0x1] 0.0
      %940 = vst [vmem:[#allocation3 + $0x1] sm:$0xff] %v936
      %941 = vst [vmem:[#allocation3 + $0x9] sm:$0xff] %v937
      %v942 = vld [vmem:[#allocation3] ss:$2 sm:$0xff]
      %s943 = scalar_lea.vmem [#allocation3], 1
      %v944 = vld [vmem:[%s943] ss:$2 sm:$0xff]
      %s945 = scalar_lea.vmem [#allocation3], 2
      %v946 = vld [vmem:[%s945] ss:$2 sm:$0xff]
      %s947 = scalar_lea.vmem [#allocation3], 3
      %v948 = vld [vmem:[%s947] ss:$2 sm:$0xff]
      %v949 = vpack.c.bf16 %v942, %v942
      %v950 = vpack.c.bf16 %v944, %v944
      %v951 = vpack.c.bf16 %v946, %v946
      %v952 = vpack.c.bf16 %v948, %v948
      %v953 = vld [vmem:[%s3] sm:$0xf]
      %v954 = vld [vmem:[%s3 + $0x4] sm:$0xf]
      %v955 = vld [vmem:[%s3 + $0x8] sm:$0xf]
      %v956 = vld [vmem:[%s3 + $0xc] sm:$0xf]
      %v957 = vld [vmem:[%s3 + $0x10] sm:$0xf]
      %v958 = vld [vmem:[%s3 + $0x14] sm:$0xf]
      %v959 = vld [vmem:[%s3 + $0x18] sm:$0xf]
      %v960 = vld [vmem:[%s3 + $0x1c] sm:$0xf]
      %v961 = vld [vmem:[%s3 + $0x20] sm:$0xf]
      %v962 = vld [vmem:[%s3 + $0x24] sm:$0xf]
      %v963 = vld [vmem:[%s3 + $0x28] sm:$0xf]
      %v964 = vld [vmem:[%s3 + $0x2c] sm:$0xf]
      %v965 = vld [vmem:[%s3 + $0x30] sm:$0xf]
      %v966 = vld [vmem:[%s3 + $0x34] sm:$0xf]
      %v967 = vld [vmem:[%s3 + $0x38] sm:$0xf]
      %v968 = vld [vmem:[%s3 + $0x3c] sm:$0xf]
      %v969 = vld [vmem:[%s3 + $0x40] sm:$0xf]
      %v970 = vld [vmem:[%s3 + $0x44] sm:$0xf]
      %v971 = vld [vmem:[%s3 + $0x48] sm:$0xf]
      %v972 = vld [vmem:[%s3 + $0x4c] sm:$0xf]
      %v973 = vld [vmem:[%s3 + $0x50] sm:$0xf]
      %v974 = vld [vmem:[%s3 + $0x54] sm:$0xf]
      %v975 = vld [vmem:[%s3 + $0x58] sm:$0xf]
      %v976 = vld [vmem:[%s3 + $0x5c] sm:$0xf]
      %v977 = vld [vmem:[%s3 + $0x60] sm:$0xf]
      %v978 = vld [vmem:[%s3 + $0x64] sm:$0xf]
      %v979 = vld [vmem:[%s3 + $0x68] sm:$0xf]
      %v980 = vld [vmem:[%s3 + $0x6c] sm:$0xf]
      %v981 = vld [vmem:[%s3 + $0x70] sm:$0xf]
      %v982 = vld [vmem:[%s3 + $0x74] sm:$0xf]
      %v983 = vld [vmem:[%s3 + $0x78] sm:$0xf]
      %v984 = vld [vmem:[%s3 + $0x7c] sm:$0xf]
      %v985 = vld [vmem:[%s3 + $0x80] sm:$0xf]
      %v986 = vld [vmem:[%s3 + $0x84] sm:$0xf]
      %v987 = vld [vmem:[%s3 + $0x88] sm:$0xf]
      %v988 = vld [vmem:[%s3 + $0x8c] sm:$0xf]
      %v989 = vld [vmem:[%s3 + $0x90] sm:$0xf]
      %v990 = vld [vmem:[%s3 + $0x94] sm:$0xf]
      %v991 = vld [vmem:[%s3 + $0x98] sm:$0xf]
      %v992 = vld [vmem:[%s3 + $0x9c] sm:$0xf]
      %v993 = vld [vmem:[%s3 + $0xa0] sm:$0xf]
      %v994 = vld [vmem:[%s3 + $0xa4] sm:$0xf]
      %v995 = vld [vmem:[%s3 + $0xa8] sm:$0xf]
      %v996 = vld [vmem:[%s3 + $0xac] sm:$0xf]
      %v997 = vld [vmem:[%s3 + $0xb0] sm:$0xf]
      %v998 = vld [vmem:[%s3 + $0xb4] sm:$0xf]
      %v999 = vld [vmem:[%s3 + $0xb8] sm:$0xf]
      %v1000 = vld [vmem:[%s3 + $0xbc] sm:$0xf]
      %v1001 = vld [vmem:[%s3 + $0xc0] sm:$0xf]
      %v1002 = vld [vmem:[%s3 + $0xc4] sm:$0xf]
      %v1003 = vld [vmem:[%s3 + $0xc8] sm:$0xf]
      %v1004 = vld [vmem:[%s3 + $0xcc] sm:$0xf]
      %v1005 = vld [vmem:[%s3 + $0xd0] sm:$0xf]
      %v1006 = vld [vmem:[%s3 + $0xd4] sm:$0xf]
      %v1007 = vld [vmem:[%s3 + $0xd8] sm:$0xf]
      %v1008 = vld [vmem:[%s3 + $0xdc] sm:$0xf]
      %v1009 = vld [vmem:[%s3 + $0xe0] sm:$0xf]
      %v1010 = vld [vmem:[%s3 + $0xe4] sm:$0xf]
      %v1011 = vld [vmem:[%s3 + $0xe8] sm:$0xf]
      %v1012 = vld [vmem:[%s3 + $0xec] sm:$0xf]
      %v1013 = vld [vmem:[%s3 + $0xf0] sm:$0xf]
      %v1014 = vld [vmem:[%s3 + $0xf4] sm:$0xf]
      %v1015 = vld [vmem:[%s3 + $0xf8] sm:$0xf]
      %v1016 = vld [vmem:[%s3 + $0xfc] sm:$0xf]
      %v1017 = vld [vmem:[%s4] sm:$0x1]
      %v1019 = vlaneseq
      %v1020 = vshrl.u32 %v1019, 7
      %v1021 = vsub.s32 0, %v1020
      %v1022 = vrot.slane %v1017, %v1021
      %v1088 = vunpack.c.l.b16 %v953
      %v1089 = vunpack.c.l.b16 %v954
      %v1090 = vunpack.c.l.b16 %v955
      %v1091 = vunpack.c.l.b16 %v956
      %v1092 = vunpack.c.l.b16 %v957
      %v1093 = vunpack.c.l.b16 %v958
      %v1094 = vunpack.c.l.b16 %v959
      %v1095 = vunpack.c.l.b16 %v960
      %v1096 = vunpack.c.l.b16 %v961
      %v1097 = vunpack.c.l.b16 %v962
      %v1098 = vunpack.c.l.b16 %v963
      %v1099 = vunpack.c.l.b16 %v964
      %v1100 = vunpack.c.l.b16 %v965
      %v1101 = vunpack.c.l.b16 %v966
      %v1102 = vunpack.c.l.b16 %v967
      %v1103 = vunpack.c.l.b16 %v968
      %v1104 = vunpack.c.l.b16 %v969
      %v1105 = vunpack.c.l.b16 %v970
      %v1106 = vunpack.c.l.b16 %v971
      %v1107 = vunpack.c.l.b16 %v972
      %v1108 = vunpack.c.l.b16 %v973
      %v1109 = vunpack.c.l.b16 %v974
      %v1110 = vunpack.c.l.b16 %v975
      %v1111 = vunpack.c.l.b16 %v976
      %v1112 = vunpack.c.l.b16 %v977
      %v1113 = vunpack.c.l.b16 %v978
      %v1114 = vunpack.c.l.b16 %v979
      %v1115 = vunpack.c.l.b16 %v980
      %v1116 = vunpack.c.l.b16 %v981
      %v1117 = vunpack.c.l.b16 %v982
      %v1118 = vunpack.c.l.b16 %v983
      %v1119 = vunpack.c.l.b16 %v984
      %v1120 = vunpack.c.l.b16 %v985
      %v1121 = vunpack.c.l.b16 %v986
      %v1122 = vunpack.c.l.b16 %v987
      %v1123 = vunpack.c.l.b16 %v988
      %v1124 = vunpack.c.l.b16 %v989
      %v1125 = vunpack.c.l.b16 %v990
      %v1126 = vunpack.c.l.b16 %v991
      %v1127 = vunpack.c.l.b16 %v992
      %v1128 = vunpack.c.l.b16 %v993
      %v1129 = vunpack.c.l.b16 %v994
      %v1130 = vunpack.c.l.b16 %v995
      %v1131 = vunpack.c.l.b16 %v996
      %v1132 = vunpack.c.l.b16 %v997
      %v1133 = vunpack.c.l.b16 %v998
      %v1134 = vunpack.c.l.b16 %v999
      %v1135 = vunpack.c.l.b16 %v1000
      %v1136 = vunpack.c.l.b16 %v1001
      %v1137 = vunpack.c.l.b16 %v1002
      %v1138 = vunpack.c.l.b16 %v1003
      %v1139 = vunpack.c.l.b16 %v1004
      %v1140 = vunpack.c.l.b16 %v1005
      %v1141 = vunpack.c.l.b16 %v1006
      %v1142 = vunpack.c.l.b16 %v1007
      %v1143 = vunpack.c.l.b16 %v1008
      %v1144 = vunpack.c.l.b16 %v1009
      %v1145 = vunpack.c.l.b16 %v1010
      %v1146 = vunpack.c.l.b16 %v1011
      %v1147 = vunpack.c.l.b16 %v1012
      %v1148 = vunpack.c.l.b16 %v1013
      %v1149 = vunpack.c.l.b16 %v1014
      %v1150 = vunpack.c.l.b16 %v1015
      %v1151 = vunpack.c.l.b16 %v1016
      %v1152 = vpack.c.b16 %v1089, %v1088
      %v1153 = vpack.c.b16 %v1091, %v1090
      %v1154 = vpack.c.b16 %v1093, %v1092
      %v1155 = vpack.c.b16 %v1095, %v1094
      %v1156 = vpack.c.b16 %v1097, %v1096
      %v1157 = vpack.c.b16 %v1099, %v1098
      %v1158 = vpack.c.b16 %v1101, %v1100
      %v1159 = vpack.c.b16 %v1103, %v1102
      %v1160 = vpack.c.b16 %v1105, %v1104
      %v1161 = vpack.c.b16 %v1107, %v1106
      %v1162 = vpack.c.b16 %v1109, %v1108
      %v1163 = vpack.c.b16 %v1111, %v1110
      %v1164 = vpack.c.b16 %v1113, %v1112
      %v1165 = vpack.c.b16 %v1115, %v1114
      %v1166 = vpack.c.b16 %v1117, %v1116
      %v1167 = vpack.c.b16 %v1119, %v1118
      %v1168 = vpack.c.b16 %v1121, %v1120
      %v1169 = vpack.c.b16 %v1123, %v1122
      %v1170 = vpack.c.b16 %v1125, %v1124
      %v1171 = vpack.c.b16 %v1127, %v1126
      %v1172 = vpack.c.b16 %v1129, %v1128
      %v1173 = vpack.c.b16 %v1131, %v1130
      %v1174 = vpack.c.b16 %v1133, %v1132
      %v1175 = vpack.c.b16 %v1135, %v1134
      %v1176 = vpack.c.b16 %v1137, %v1136
      %v1177 = vpack.c.b16 %v1139, %v1138
      %v1178 = vpack.c.b16 %v1141, %v1140
      %v1179 = vpack.c.b16 %v1143, %v1142
      %v1180 = vpack.c.b16 %v1145, %v1144
      %v1181 = vpack.c.b16 %v1147, %v1146
      %v1182 = vpack.c.b16 %v1149, %v1148
      %v1183 = vpack.c.b16 %v1151, %v1150
      %1216 = vmatprep.subr.bf16.mxu0 0
      %1217 = vmatpush1.bf16.msra.mxu0 %v1152
      %1218 = vmatprep.subr.bf16.mxu0 0
      %1219 = vmatpush1.bf16.msra.mxu0 %v1153
      %1220 = vmatprep.subr.bf16.mxu0 0
      %1221 = vmatpush1.bf16.msra.mxu0 %v1154
      %1222 = vmatprep.subr.bf16.mxu0 0
      %1223 = vmatpush1.bf16.msra.mxu0 %v1155
      %1224 = vmatprep.subr.bf16.mxu0 0
      %1225 = vmatpush1.bf16.msra.mxu0 %v1156
      %1226 = vmatprep.subr.bf16.mxu0 0
      %1227 = vmatpush1.bf16.msra.mxu0 %v1157
      %1228 = vmatprep.subr.bf16.mxu0 0
      %1229 = vmatpush1.bf16.msra.mxu0 %v1158
      %1230 = vmatprep.subr.bf16.mxu0 0
      %1231 = vmatpush1.bf16.msra.mxu0 %v1159
      %1232 = vmatprep.subr.bf16.mxu0 0
      %1233 = vmatpush1.bf16.msra.mxu0 %v1160
      %1234 = vmatprep.subr.bf16.mxu0 0
      %1235 = vmatpush1.bf16.msra.mxu0 %v1161
      %1236 = vmatprep.subr.bf16.mxu0 0
      %1237 = vmatpush1.bf16.msra.mxu0 %v1162
      %1238 = vmatprep.subr.bf16.mxu0 0
      %1239 = vmatpush1.bf16.msra.mxu0 %v1163
      %1240 = vmatprep.subr.bf16.mxu0 0
      %1241 = vmatpush1.bf16.msra.mxu0 %v1164
      %1242 = vmatprep.subr.bf16.mxu0 0
      %1243 = vmatpush1.bf16.msra.mxu0 %v1165
      %1244 = vmatprep.subr.bf16.mxu0 0
      %1245 = vmatpush1.bf16.msra.mxu0 %v1166
      %1246 = vmatprep.subr.bf16.mxu0 0
      %1247 = vmatpush1.bf16.msra.mxu0 %v1167
      %1248 = vmatprep.mubr.bf16.mxu0 %v950
      %1249 = vmatmul.mubr.bf16.gmra.mrb[0].mxu0 %v949
      %v1250 = vpop.f32.mrb[0].mxu0
      %v1251 = vadd.f32 %v1022, %v1250
      %v1252 = vpop.f32.mrb[0].mxu0
      %v1253 = vpop.f32.mrb[0].mxu0
      %v1254 = vpop.f32.mrb[0].mxu0
      %1255 = vdwg.mxu0
      %1256 = vmatprep.subr.bf16.mxu0 0
      %1257 = vmatpush1.bf16.msra.mxu0 %v1168
      %1258 = vmatprep.subr.bf16.mxu0 0
      %1259 = vmatpush1.bf16.msra.mxu0 %v1169
      %1260 = vmatprep.subr.bf16.mxu0 0
      %1261 = vmatpush1.bf16.msra.mxu0 %v1170
      %1262 = vmatprep.subr.bf16.mxu0 0
      %1263 = vmatpush1.bf16.msra.mxu0 %v1171
      %1264 = vmatprep.subr.bf16.mxu0 0
      %1265 = vmatpush1.bf16.msra.mxu0 %v1172
      %1266 = vmatprep.subr.bf16.mxu0 0
      %1267 = vmatpush1.bf16.msra.mxu0 %v1173
      %1268 = vmatprep.subr.bf16.mxu0 0
      %1269 = vmatpush1.bf16.msra.mxu0 %v1174
      %1270 = vmatprep.subr.bf16.mxu0 0
      %1271 = vmatpush1.bf16.msra.mxu0 %v1175
      %1272 = vmatprep.subr.bf16.mxu0 0
      %1273 = vmatpush1.bf16.msra.mxu0 %v1176
      %1274 = vmatprep.subr.bf16.mxu0 0
      %1275 = vmatpush1.bf16.msra.mxu0 %v1177
      %1276 = vmatprep.subr.bf16.mxu0 0
      %1277 = vmatpush1.bf16.msra.mxu0 %v1178
      %1278 = vmatprep.subr.bf16.mxu0 0
      %1279 = vmatpush1.bf16.msra.mxu0 %v1179
      %1280 = vmatprep.subr.bf16.mxu0 0
      %1281 = vmatpush1.bf16.msra.mxu0 %v1180
      %1282 = vmatprep.subr.bf16.mxu0 0
      %1283 = vmatpush1.bf16.msra.mxu0 %v1181
      %1284 = vmatprep.subr.bf16.mxu0 0
      %1285 = vmatpush1.bf16.msra.mxu0 %v1182
      %1286 = vmatprep.subr.bf16.mxu0 0
      %1287 = vmatpush1.bf16.msra.mxu0 %v1183
      %1288 = vmatprep.mubr.bf16.mxu0 %v952
      %1289 = vmatmul.mubr.bf16.gmra.mrb[0].mxu0 %v951
      %v1290 = vpop.f32.mrb[0].mxu0
      %v1291 = vadd.f32 %v1251, %v1290
      %v1292 = vpop.f32.mrb[0].mxu0
      %v1293 = vpop.f32.mrb[0].mxu0
      %v1294 = vpop.f32.mrb[0].mxu0
      %1295 = vdwg.mxu0
      %v1296 = vrot.slane %v1291, 4
      %v1297 = vadd.f32 %v1291, %v1296
      %v1298 = vrot.slane %v1297, 2
      %v1299 = vadd.f32 %v1297, %v1298
      %v1300 = vrot.slane %v1299, 1
      %v1301 = vadd.f32 %v1299, %v1300
      %v1302 = vmul.f32 %v1291, %v1291
      %v1303 = vrot.slane %v1302, 4
      %v1304 = vadd.f32 %v1302, %v1303
      %v1305 = vrot.slane %v1304, 2
      %v1306 = vadd.f32 %v1304, %v1305
      %v1307 = vrot.slane %v1306, 1
      %v1308 = vadd.f32 %v1306, %v1307
      %vm1309 = vcmask 1040384
      %v1310 = vsel %vm1309, %v1301, %v1308
      %v1311 = vld [vmem:[%s5] sm:$0xff]
      %v1312 = vld [vmem:[%s5 + $0x8] sm:$0xff]
      %v1313 = vld [vmem:[%s5 + $0x10] sm:$0xff]
      %v1314 = vld [vmem:[%s5 + $0x18] sm:$0xff]
      %v1315 = vld [vmem:[%s5 + $0x20] sm:$0xff]
      %v1316 = vld [vmem:[%s5 + $0x28] sm:$0xff]
      %v1317 = vld [vmem:[%s5 + $0x30] sm:$0xff]
      %v1318 = vld [vmem:[%s5 + $0x38] sm:$0xff]
      %v1319 = vld [vmem:[%s5 + $0x40] sm:$0xff]
      %v1320 = vld [vmem:[%s5 + $0x48] sm:$0xff]
      %v1321 = vld [vmem:[%s5 + $0x50] sm:$0xff]
      %v1322 = vld [vmem:[%s5 + $0x58] sm:$0xff]
      %v1323 = vld [vmem:[%s5 + $0x60] sm:$0xff]
      %v1324 = vld [vmem:[%s5 + $0x68] sm:$0xff]
      %v1325 = vld [vmem:[%s5 + $0x70] sm:$0xff]
      %v1326 = vld [vmem:[%s5 + $0x78] sm:$0xff]
      %1327 = vmatprep.subr.mxu0 0.0
      %1328 = vmatpush1.msra.mxu0 %v1311
      %1329 = vmatprep.subr.mxu0 0.0
      %1330 = vmatpush1.msra.mxu0 %v1312
      %1331 = vmatprep.subr.mxu0 0.0
      %1332 = vmatpush1.msra.mxu0 %v1313
      %1333 = vmatprep.subr.mxu0 0.0
      %1334 = vmatpush1.msra.mxu0 %v1314
      %1335 = vmatprep.subr.mxu0 0.0
      %1336 = vmatpush1.msra.mxu0 %v1315
      %1337 = vmatprep.subr.mxu0 0.0
      %1338 = vmatpush1.msra.mxu0 %v1316
      %1339 = vmatprep.subr.mxu0 0.0
      %1340 = vmatpush1.msra.mxu0 %v1317
      %1341 = vmatprep.subr.mxu0 0.0
      %1342 = vmatpush1.msra.mxu0 %v1318
      %1343 = vmatprep.subr.mxu0 0.0
      %1344 = vmatpush1.msra.mxu0 %v1319
      %1345 = vmatprep.subr.mxu0 0.0
      %1346 = vmatpush1.msra.mxu0 %v1320
      %1347 = vmatprep.subr.mxu0 0.0
      %1348 = vmatpush1.msra.mxu0 %v1321
      %1349 = vmatprep.subr.mxu0 0.0
      %1350 = vmatpush1.msra.mxu0 %v1322
      %1351 = vmatprep.subr.mxu0 0.0
      %1352 = vmatpush1.msra.mxu0 %v1323
      %1353 = vmatprep.subr.mxu0 0.0
      %1354 = vmatpush1.msra.mxu0 %v1324
      %1355 = vmatprep.subr.mxu0 0.0
      %1356 = vmatpush1.msra.mxu0 %v1325
      %1357 = vmatprep.subr.mxu0 0.0
      %1358 = vmatpush1.msra.mxu0 %v1326
      %1359 = vmatprep.subr.mxu0 0.0
      %1360 = vmatpush1.msra.mxu0 0.0
      %1361 = vmatprep.subr.mxu0 0.0
      %1362 = vmatpush1.msra.mxu0 0.0
      %1363 = vmatprep.subr.mxu0 0.0
      %1364 = vmatpush1.msra.mxu0 0.0
      %1365 = vmatprep.subr.mxu0 0.0
      %1366 = vmatpush1.msra.mxu0 0.0
      %1367 = vmatprep.subr.mxu0 0.0
      %1368 = vmatpush1.msra.mxu0 0.0
      %1369 = vmatprep.subr.mxu0 0.0
      %1370 = vmatpush1.msra.mxu0 0.0
      %1371 = vmatprep.subr.mxu0 0.0
      %1372 = vmatpush1.msra.mxu0 0.0
      %1373 = vmatprep.subr.mxu0 0.0
      %1374 = vmatpush1.msra.mxu0 0.0
      %1375 = vmatprep.subr.mxu0 0.0
      %1376 = vmatpush1.msra.mxu0 0.0
      %1377 = vmatprep.subr.mxu0 0.0
      %1378 = vmatpush1.msra.mxu0 0.0
      %1379 = vmatprep.subr.mxu0 0.0
      %1380 = vmatpush1.msra.mxu0 0.0
      %1381 = vmatprep.subr.mxu0 0.0
      %1382 = vmatpush1.msra.mxu0 0.0
      %1383 = vmatprep.subr.mxu0 0.0
      %1384 = vmatpush1.msra.mxu0 0.0
      %1385 = vmatprep.subr.mxu0 0.0
      %1386 = vmatpush1.msra.mxu0 0.0
      %1387 = vmatprep.subr.mxu0 0.0
      %1388 = vmatpush1.msra.mxu0 0.0
      %1389 = vmatprep.subr.mxu0 0.0
      %1390 = vmatpush1.msra.mxu0 0.0
      %1391 = vmatprep.mubr.f32.mxu0 0.0
      %1392 = vmatmul.mubr.f32.gmra.mrb[0].mxu0 %v1310
      %v1393 = vpop.f32.mrb[0].mxu0
      %v1394 = vadd.f32 0.0, %v1393
      %v1395 = vpop.f32.mrb[0].mxu0
      %1396 = vdwg.mxu0
      %v1397 = vmul.f32 %v1394, 0.015625
      %v1398 = vmul.f32 %v1397, %v1397
      %v1400 = vrot.slane %v1398, 7
      %v1402 = vsub.f32 %v1397, %v1400
      %v1403 = vmax.f32 %v1402, 0.0
      %v1404 = vadd.f32 %v1403, 1e-05
      %v1405 = vrsqrt.pop %v1404
      %v1406 = vsub.f32 0.0, %v1397
      %v1408 = vrot.slane %v1405, 1
      %v1410 = vmul.f32 %v1406, %v1408
      %v1412 = vrot.slane %v1410, 7
      %v1414 = vsel %vm1309, %v1408, %v1412
      %v1415 = vld [vmem:[%s6] sm:$0xff]
      %v1416 = vld [vmem:[%s6 + $0x8] sm:$0xff]
      %vm1417 = vcmask 130048
      %v1419 = vsel %vm1417, %v1414, 0
      %1421 = vmatprep.subr.mxu0 0.0
      %1422 = vmatpush1.msra.mxu0 %v1415
      %1423 = vmatprep.subr.mxu0 0.0
      %1424 = vmatpush1.msra.mxu0 %v1416
      %1425 = vmatprep.subr.mxu0 0.0
      %1426 = vmatpush1.msra.mxu0 0.0
      %1427 = vmatprep.subr.mxu0 0.0
      %1428 = vmatpush1.msra.mxu0 0.0
      %1429 = vmatprep.subr.mxu0 0.0
      %1430 = vmatpush1.msra.mxu0 0.0
      %1431 = vmatprep.subr.mxu0 0.0
      %1432 = vmatpush1.msra.mxu0 0.0
      %1433 = vmatprep.subr.mxu0 0.0
      %1434 = vmatpush1.msra.mxu0 0.0
      %1435 = vmatprep.subr.mxu0 0.0
      %1436 = vmatpush1.msra.mxu0 0.0
      %1437 = vmatprep.subr.mxu0 0.0
      %1438 = vmatpush1.msra.mxu0 0.0
      %1439 = vmatprep.subr.mxu0 0.0
      %1440 = vmatpush1.msra.mxu0 0.0
      %1441 = vmatprep.subr.mxu0 0.0
      %1442 = vmatpush1.msra.mxu0 0.0
      %1443 = vmatprep.subr.mxu0 0.0
      %1444 = vmatpush1.msra.mxu0 0.0
      %1445 = vmatprep.subr.mxu0 0.0
      %1446 = vmatpush1.msra.mxu0 0.0
      %1447 = vmatprep.subr.mxu0 0.0
      %1448 = vmatpush1.msra.mxu0 0.0
      %1449 = vmatprep.subr.mxu0 0.0
      %1450 = vmatpush1.msra.mxu0 0.0
      %1451 = vmatprep.subr.mxu0 0.0
      %1452 = vmatpush1.msra.mxu0 0.0
      %1453 = vmatprep.subr.mxu0 0.0
      %1454 = vmatpush1.msra.mxu0 0.0
      %1455 = vmatprep.subr.mxu0 0.0
      %1456 = vmatpush1.msra.mxu0 0.0
      %1457 = vmatprep.subr.mxu0 0.0
      %1458 = vmatpush1.msra.mxu0 0.0
      %1459 = vmatprep.subr.mxu0 0.0
      %1460 = vmatpush1.msra.mxu0 0.0
      %1461 = vmatprep.subr.mxu0 0.0
      %1462 = vmatpush1.msra.mxu0 0.0
      %1463 = vmatprep.subr.mxu0 0.0
      %1464 = vmatpush1.msra.mxu0 0.0
      %1465 = vmatprep.subr.mxu0 0.0
      %1466 = vmatpush1.msra.mxu0 0.0
      %1467 = vmatprep.subr.mxu0 0.0
      %1468 = vmatpush1.msra.mxu0 0.0
      %1469 = vmatprep.subr.mxu0 0.0
      %1470 = vmatpush1.msra.mxu0 0.0
      %1471 = vmatprep.subr.mxu0 0.0
      %1472 = vmatpush1.msra.mxu0 0.0
      %1473 = vmatprep.subr.mxu0 0.0
      %1474 = vmatpush1.msra.mxu0 0.0
      %1475 = vmatprep.subr.mxu0 0.0
      %1476 = vmatpush1.msra.mxu0 0.0
      %1477 = vmatprep.subr.mxu0 0.0
      %1478 = vmatpush1.msra.mxu0 0.0
      %1479 = vmatprep.subr.mxu0 0.0
      %1480 = vmatpush1.msra.mxu0 0.0
      %1481 = vmatprep.subr.mxu0 0.0
      %1482 = vmatpush1.msra.mxu0 0.0
      %1483 = vmatprep.subr.mxu0 0.0
      %1484 = vmatpush1.msra.mxu0 0.0
      %1485 = vmatprep.mubr.f32.mxu0 0.0
      %1486 = vmatmul.mubr.f32.gmra.mrb[0].mxu0 %v1419
      %v1487 = vpop.f32.mrb[0].mxu0
      %v1488 = vadd.f32 0.0, %v1487
      %v1489 = vpop.f32.mrb[0].mxu0
      %1490 = vdwg.mxu0
      %v1491 = vlaneseq
      %v1492 = vshrl.u32 %v1491, 7
      %v1493 = vsub.s32 0, %v1492
      %v1494 = vrot.slane %v1488, %v1493
      %v1495 = vmul.f32 %v1291, %v1494
      %v1496 = vlaneseq
      %v1497 = vshrl.u32 %v1496, 7
      %v1498 = vsub.s32 1, %v1497
      %v1499 = vrot.slane %v1488, %v1498
      %v1500 = vadd.f32 %v1495, %v1499
      %vm1501 = vcmp.gt.f32.partialorder %v1500, 0.0
      %v1502 = vmin.f32 %v1500, 0.0
      %v1503 = vmul.f32 %v1502, 1.442695
      %v1504 = vpow.pop %v1503
      %v1505 = vsub.f32 %v1504, 1.0
      %v1506 = vsel %vm1501, %v1500, %v1505
      %1507 = vst [vmem:[#allocation4] sm:$0x1] 0.0
      %1508 = vst [vmem:[#allocation4 + $0x9] sm:$0x1] 0.0
      %1509 = vst [vmem:[#allocation4 + $0x1] sm:$0xff] %v1506
      %v1510 = vld [vmem:[#allocation4] ss:$2 sm:$0xf]
      %s1511 = scalar_lea.vmem [#allocation4], 1
      %v1512 = vld [vmem:[%s1511] ss:$2 sm:$0xf]
      %s1513 = scalar_lea.vmem [#allocation4], 2
      %v1514 = vld [vmem:[%s1513] ss:$2 sm:$0xf]
      %s1515 = scalar_lea.vmem [#allocation4], 3
      %v1516 = vld [vmem:[%s1515] ss:$2 sm:$0xf]
      %v1517 = vpack.c.bf16 %v1510, %v1510
      %v1518 = vpack.c.bf16 %v1512, %v1512
      %v1519 = vpack.c.bf16 %v1514, %v1514
      %v1520 = vpack.c.bf16 %v1516, %v1516
      %v1521 = vld [vmem:[%s7] sm:$0xf]
      %v1522 = vld [vmem:[%s7 + $0x4] sm:$0xf]
      %v1523 = vld [vmem:[%s7 + $0x8] sm:$0xf]
      %v1524 = vld [vmem:[%s7 + $0xc] sm:$0xf]
      %v1525 = vld [vmem:[%s7 + $0x10] sm:$0xf]
      %v1526 = vld [vmem:[%s7 + $0x14] sm:$0xf]
      %v1527 = vld [vmem:[%s7 + $0x18] sm:$0xf]
      %v1528 = vld [vmem:[%s7 + $0x1c] sm:$0xf]
      %v1529 = vld [vmem:[%s7 + $0x20] sm:$0xf]
      %v1530 = vld [vmem:[%s7 + $0x24] sm:$0xf]
      %v1531 = vld [vmem:[%s7 + $0x28] sm:$0xf]
      %v1532 = vld [vmem:[%s7 + $0x2c] sm:$0xf]
      %v1533 = vld [vmem:[%s7 + $0x30] sm:$0xf]
      %v1534 = vld [vmem:[%s7 + $0x34] sm:$0xf]
      %v1535 = vld [vmem:[%s7 + $0x38] sm:$0xf]
      %v1536 = vld [vmem:[%s7 + $0x3c] sm:$0xf]
      %v1537 = vld [vmem:[%s7 + $0x40] sm:$0xf]
      %v1538 = vld [vmem:[%s7 + $0x44] sm:$0xf]
      %v1539 = vld [vmem:[%s7 + $0x48] sm:$0xf]
      %v1540 = vld [vmem:[%s7 + $0x4c] sm:$0xf]
      %v1541 = vld [vmem:[%s7 + $0x50] sm:$0xf]
      %v1542 = vld [vmem:[%s7 + $0x54] sm:$0xf]
      %v1543 = vld [vmem:[%s7 + $0x58] sm:$0xf]
      %v1544 = vld [vmem:[%s7 + $0x5c] sm:$0xf]
      %v1545 = vld [vmem:[%s7 + $0x60] sm:$0xf]
      %v1546 = vld [vmem:[%s7 + $0x64] sm:$0xf]
      %v1547 = vld [vmem:[%s7 + $0x68] sm:$0xf]
      %v1548 = vld [vmem:[%s7 + $0x6c] sm:$0xf]
      %v1549 = vld [vmem:[%s7 + $0x70] sm:$0xf]
      %v1550 = vld [vmem:[%s7 + $0x74] sm:$0xf]
      %v1551 = vld [vmem:[%s7 + $0x78] sm:$0xf]
      %v1552 = vld [vmem:[%s7 + $0x7c] sm:$0xf]
      %v1553 = vld [vmem:[%s7 + $0x80] sm:$0xf]
      %v1554 = vld [vmem:[%s7 + $0x84] sm:$0xf]
      %v1555 = vld [vmem:[%s7 + $0x88] sm:$0xf]
      %v1556 = vld [vmem:[%s7 + $0x8c] sm:$0xf]
      %v1557 = vld [vmem:[%s7 + $0x90] sm:$0xf]
      %v1558 = vld [vmem:[%s7 + $0x94] sm:$0xf]
      %v1559 = vld [vmem:[%s7 + $0x98] sm:$0xf]
      %v1560 = vld [vmem:[%s7 + $0x9c] sm:$0xf]
      %v1561 = vld [vmem:[%s7 + $0xa0] sm:$0xf]
      %v1562 = vld [vmem:[%s7 + $0xa4] sm:$0xf]
      %v1563 = vld [vmem:[%s7 + $0xa8] sm:$0xf]
      %v1564 = vld [vmem:[%s7 + $0xac] sm:$0xf]
      %v1565 = vld [vmem:[%s7 + $0xb0] sm:$0xf]
      %v1566 = vld [vmem:[%s7 + $0xb4] sm:$0xf]
      %v1567 = vld [vmem:[%s7 + $0xb8] sm:$0xf]
      %v1568 = vld [vmem:[%s7 + $0xbc] sm:$0xf]
      %v1569 = vld [vmem:[%s7 + $0xc0] sm:$0xf]
      %v1570 = vld [vmem:[%s7 + $0xc4] sm:$0xf]
      %v1571 = vld [vmem:[%s7 + $0xc8] sm:$0xf]
      %v1572 = vld [vmem:[%s7 + $0xcc] sm:$0xf]
      %v1573 = vld [vmem:[%s7 + $0xd0] sm:$0xf]
      %v1574 = vld [vmem:[%s7 + $0xd4] sm:$0xf]
      %v1575 = vld [vmem:[%s7 + $0xd8] sm:$0xf]
      %v1576 = vld [vmem:[%s7 + $0xdc] sm:$0xf]
      %v1577 = vld [vmem:[%s7 + $0xe0] sm:$0xf]
      %v1578 = vld [vmem:[%s7 + $0xe4] sm:$0xf]
      %v1579 = vld [vmem:[%s7 + $0xe8] sm:$0xf]
      %v1580 = vld [vmem:[%s7 + $0xec] sm:$0xf]
      %v1581 = vld [vmem:[%s7 + $0xf0] sm:$0xf]
      %v1582 = vld [vmem:[%s7 + $0xf4] sm:$0xf]
      %v1583 = vld [vmem:[%s7 + $0xf8] sm:$0xf]
      %v1584 = vld [vmem:[%s7 + $0xfc] sm:$0xf]
      %v1585 = vld [vmem:[%s8] sm:$0x1]
      %v1587 = vlaneseq
      %v1588 = vshrl.u32 %v1587, 7
      %v1589 = vsub.s32 0, %v1588
      %v1590 = vrot.slane %v1585, %v1589
      %v1656 = vunpack.c.l.b16 %v1521
      %v1657 = vunpack.c.l.b16 %v1522
      %v1658 = vunpack.c.l.b16 %v1523
      %v1659 = vunpack.c.l.b16 %v1524
      %v1660 = vunpack.c.l.b16 %v1525
      %v1661 = vunpack.c.l.b16 %v1526
      %v1662 = vunpack.c.l.b16 %v1527
      %v1663 = vunpack.c.l.b16 %v1528
      %v1664 = vunpack.c.l.b16 %v1529
      %v1665 = vunpack.c.l.b16 %v1530
      %v1666 = vunpack.c.l.b16 %v1531
      %v1667 = vunpack.c.l.b16 %v1532
      %v1668 = vunpack.c.l.b16 %v1533
      %v1669 = vunpack.c.l.b16 %v1534
      %v1670 = vunpack.c.l.b16 %v1535
      %v1671 = vunpack.c.l.b16 %v1536
      %v1672 = vunpack.c.l.b16 %v1537
      %v1673 = vunpack.c.l.b16 %v1538
      %v1674 = vunpack.c.l.b16 %v1539
      %v1675 = vunpack.c.l.b16 %v1540
      %v1676 = vunpack.c.l.b16 %v1541
      %v1677 = vunpack.c.l.b16 %v1542
      %v1678 = vunpack.c.l.b16 %v1543
      %v1679 = vunpack.c.l.b16 %v1544
      %v1680 = vunpack.c.l.b16 %v1545
      %v1681 = vunpack.c.l.b16 %v1546
      %v1682 = vunpack.c.l.b16 %v1547
      %v1683 = vunpack.c.l.b16 %v1548
      %v1684 = vunpack.c.l.b16 %v1549
      %v1685 = vunpack.c.l.b16 %v1550
      %v1686 = vunpack.c.l.b16 %v1551
      %v1687 = vunpack.c.l.b16 %v1552
      %v1688 = vunpack.c.l.b16 %v1553
      %v1689 = vunpack.c.l.b16 %v1554
      %v1690 = vunpack.c.l.b16 %v1555
      %v1691 = vunpack.c.l.b16 %v1556
      %v1692 = vunpack.c.l.b16 %v1557
      %v1693 = vunpack.c.l.b16 %v1558
      %v1694 = vunpack.c.l.b16 %v1559
      %v1695 = vunpack.c.l.b16 %v1560
      %v1696 = vunpack.c.l.b16 %v1561
      %v1697 = vunpack.c.l.b16 %v1562
      %v1698 = vunpack.c.l.b16 %v1563
      %v1699 = vunpack.c.l.b16 %v1564
      %v1700 = vunpack.c.l.b16 %v1565
      %v1701 = vunpack.c.l.b16 %v1566
      %v1702 = vunpack.c.l.b16 %v1567
      %v1703 = vunpack.c.l.b16 %v1568
      %v1704 = vunpack.c.l.b16 %v1569
      %v1705 = vunpack.c.l.b16 %v1570
      %v1706 = vunpack.c.l.b16 %v1571
      %v1707 = vunpack.c.l.b16 %v1572
      %v1708 = vunpack.c.l.b16 %v1573
      %v1709 = vunpack.c.l.b16 %v1574
      %v1710 = vunpack.c.l.b16 %v1575
      %v1711 = vunpack.c.l.b16 %v1576
      %v1712 = vunpack.c.l.b16 %v1577
      %v1713 = vunpack.c.l.b16 %v1578
      %v1714 = vunpack.c.l.b16 %v1579
      %v1715 = vunpack.c.l.b16 %v1580
      %v1716 = vunpack.c.l.b16 %v1581
      %v1717 = vunpack.c.l.b16 %v1582
      %v1718 = vunpack.c.l.b16 %v1583
      %v1719 = vunpack.c.l.b16 %v1584
      %v1720 = vpack.c.b16 %v1657, %v1656
      %v1721 = vpack.c.b16 %v1659, %v1658
      %v1722 = vpack.c.b16 %v1661, %v1660
      %v1723 = vpack.c.b16 %v1663, %v1662
      %v1724 = vpack.c.b16 %v1665, %v1664
      %v1725 = vpack.c.b16 %v1667, %v1666
      %v1726 = vpack.c.b16 %v1669, %v1668
      %v1727 = vpack.c.b16 %v1671, %v1670
      %v1728 = vpack.c.b16 %v1673, %v1672
      %v1729 = vpack.c.b16 %v1675, %v1674
      %v1730 = vpack.c.b16 %v1677, %v1676
      %v1731 = vpack.c.b16 %v1679, %v1678
      %v1732 = vpack.c.b16 %v1681, %v1680
      %v1733 = vpack.c.b16 %v1683, %v1682
      %v1734 = vpack.c.b16 %v1685, %v1684
      %v1735 = vpack.c.b16 %v1687, %v1686
      %v1736 = vpack.c.b16 %v1689, %v1688
      %v1737 = vpack.c.b16 %v1691, %v1690
      %v1738 = vpack.c.b16 %v1693, %v1692
      %v1739 = vpack.c.b16 %v1695, %v1694
      %v1740 = vpack.c.b16 %v1697, %v1696
      %v1741 = vpack.c.b16 %v1699, %v1698
      %v1742 = vpack.c.b16 %v1701, %v1700
      %v1743 = vpack.c.b16 %v1703, %v1702
      %v1744 = vpack.c.b16 %v1705, %v1704
      %v1745 = vpack.c.b16 %v1707, %v1706
      %v1746 = vpack.c.b16 %v1709, %v1708
      %v1747 = vpack.c.b16 %v1711, %v1710
      %v1748 = vpack.c.b16 %v1713, %v1712
      %v1749 = vpack.c.b16 %v1715, %v1714
      %v1750 = vpack.c.b16 %v1717, %v1716
      %v1751 = vpack.c.b16 %v1719, %v1718
      %1784 = vmatprep.subr.bf16.mxu0 0
      %1785 = vmatpush1.bf16.msra.mxu0 %v1720
      %1786 = vmatprep.subr.bf16.mxu0 0
      %1787 = vmatpush1.bf16.msra.mxu0 %v1721
      %1788 = vmatprep.subr.bf16.mxu0 0
      %1789 = vmatpush1.bf16.msra.mxu0 %v1722
      %1790 = vmatprep.subr.bf16.mxu0 0
      %1791 = vmatpush1.bf16.msra.mxu0 %v1723
      %1792 = vmatprep.subr.bf16.mxu0 0
      %1793 = vmatpush1.bf16.msra.mxu0 %v1724
      %1794 = vmatprep.subr.bf16.mxu0 0
      %1795 = vmatpush1.bf16.msra.mxu0 %v1725
      %1796 = vmatprep.subr.bf16.mxu0 0
      %1797 = vmatpush1.bf16.msra.mxu0 %v1726
      %1798 = vmatprep.subr.bf16.mxu0 0
      %1799 = vmatpush1.bf16.msra.mxu0 %v1727
      %1800 = vmatprep.subr.bf16.mxu0 0
      %1801 = vmatpush1.bf16.msra.mxu0 %v1728
      %1802 = vmatprep.subr.bf16.mxu0 0
      %1803 = vmatpush1.bf16.msra.mxu0 %v1729
      %1804 = vmatprep.subr.bf16.mxu0 0
      %1805 = vmatpush1.bf16.msra.mxu0 %v1730
      %1806 = vmatprep.subr.bf16.mxu0 0
      %1807 = vmatpush1.bf16.msra.mxu0 %v1731
      %1808 = vmatprep.subr.bf16.mxu0 0
      %1809 = vmatpush1.bf16.msra.mxu0 %v1732
      %1810 = vmatprep.subr.bf16.mxu0 0
      %1811 = vmatpush1.bf16.msra.mxu0 %v1733
      %1812 = vmatprep.subr.bf16.mxu0 0
      %1813 = vmatpush1.bf16.msra.mxu0 %v1734
      %1814 = vmatprep.subr.bf16.mxu0 0
      %1815 = vmatpush1.bf16.msra.mxu0 %v1735
      %1816 = vmatprep.mubr.bf16.mxu0 %v1518
      %1817 = vmatmul.mubr.bf16.gmra.mrb[0].mxu0 %v1517
      %v1818 = vpop.f32.mrb[0].mxu0
      %v1819 = vadd.f32 %v1590, %v1818
      %v1820 = vpop.f32.mrb[0].mxu0
      %v1821 = vpop.f32.mrb[0].mxu0
      %v1822 = vpop.f32.mrb[0].mxu0
      %1823 = vdwg.mxu0
      %1824 = vmatprep.subr.bf16.mxu0 0
      %1825 = vmatpush1.bf16.msra.mxu0 %v1736
      %1826 = vmatprep.subr.bf16.mxu0 0
      %1827 = vmatpush1.bf16.msra.mxu0 %v1737
      %1828 = vmatprep.subr.bf16.mxu0 0
      %1829 = vmatpush1.bf16.msra.mxu0 %v1738
      %1830 = vmatprep.subr.bf16.mxu0 0
      %1831 = vmatpush1.bf16.msra.mxu0 %v1739
      %1832 = vmatprep.subr.bf16.mxu0 0
      %1833 = vmatpush1.bf16.msra.mxu0 %v1740
      %1834 = vmatprep.subr.bf16.mxu0 0
      %1835 = vmatpush1.bf16.msra.mxu0 %v1741
      %1836 = vmatprep.subr.bf16.mxu0 0
      %1837 = vmatpush1.bf16.msra.mxu0 %v1742
      %1838 = vmatprep.subr.bf16.mxu0 0
      %1839 = vmatpush1.bf16.msra.mxu0 %v1743
      %1840 = vmatprep.subr.bf16.mxu0 0
      %1841 = vmatpush1.bf16.msra.mxu0 %v1744
      %1842 = vmatprep.subr.bf16.mxu0 0
      %1843 = vmatpush1.bf16.msra.mxu0 %v1745
      %1844 = vmatprep.subr.bf16.mxu0 0
      %1845 = vmatpush1.bf16.msra.mxu0 %v1746
      %1846 = vmatprep.subr.bf16.mxu0 0
      %1847 = vmatpush1.bf16.msra.mxu0 %v1747
      %1848 = vmatprep.subr.bf16.mxu0 0
      %1849 = vmatpush1.bf16.msra.mxu0 %v1748
      %1850 = vmatprep.subr.bf16.mxu0 0
      %1851 = vmatpush1.bf16.msra.mxu0 %v1749
      %1852 = vmatprep.subr.bf16.mxu0 0
      %1853 = vmatpush1.bf16.msra.mxu0 %v1750
      %1854 = vmatprep.subr.bf16.mxu0 0
      %1855 = vmatpush1.bf16.msra.mxu0 %v1751
      %1856 = vmatprep.mubr.bf16.mxu0 %v1520
      %1857 = vmatmul.mubr.bf16.gmra.mrb[0].mxu0 %v1519
      %v1858 = vpop.f32.mrb[0].mxu0
      %v1859 = vadd.f32 %v1819, %v1858
      %v1860 = vpop.f32.mrb[0].mxu0
      %v1861 = vpop.f32.mrb[0].mxu0
      %v1862 = vpop.f32.mrb[0].mxu0
      %1863 = vdwg.mxu0
      %vm1864 = vcmask 1043456
      %v1865 = vsel %vm1864, %v1859, 0.0
      %v1866 = vrot.slane %v1865, 4
      %v1867 = vadd.f32 %v1865, %v1866
      %v1868 = vrot.slane %v1867, 2
      %v1869 = vadd.f32 %v1867, %v1868
      %v1870 = vrot.slane %v1869, 1
      %v1871 = vadd.f32 %v1869, %v1870
      %v1872 = vmul.f32 %v1859, %v1859
      %v1873 = vsel %vm1864, %v1872, 0.0
      %v1874 = vrot.slane %v1873, 4
      %v1875 = vadd.f32 %v1873, %v1874
      %v1876 = vrot.slane %v1875, 2
      %v1877 = vadd.f32 %v1875, %v1876
      %v1878 = vrot.slane %v1877, 1
      %v1879 = vadd.f32 %v1877, %v1878
      %v1880 = vsel %vm1309, %v1871, %v1879
      %v1881 = vld [vmem:[%s9] sm:$0xff]
      %v1882 = vld [vmem:[%s9 + $0x8] sm:$0xff]
      %v1883 = vld [vmem:[%s9 + $0x10] sm:$0xff]
      %v1884 = vld [vmem:[%s9 + $0x18] sm:$0xff]
      %v1885 = vld [vmem:[%s9 + $0x20] sm:$0xff]
      %v1886 = vld [vmem:[%s9 + $0x28] sm:$0xff]
      %v1887 = vld [vmem:[%s9 + $0x30] sm:$0xff]
      %v1888 = vld [vmem:[%s9 + $0x38] sm:$0xff]
      %v1889 = vld [vmem:[%s9 + $0x40] sm:$0xff]
      %v1890 = vld [vmem:[%s9 + $0x48] sm:$0xff]
      %v1891 = vld [vmem:[%s9 + $0x50] sm:$0xff]
      %v1892 = vld [vmem:[%s9 + $0x58] sm:$0xff]
      %v1893 = vld [vmem:[%s9 + $0x60] sm:$0xff]
      %v1894 = vld [vmem:[%s9 + $0x68] sm:$0xff]
      %v1895 = vld [vmem:[%s9 + $0x70] sm:$0xff]
      %v1896 = vld [vmem:[%s9 + $0x78] sm:$0xff]
      %1897 = vmatprep.subr.mxu0 0.0
      %1898 = vmatpush1.msra.mxu0 %v1881
      %1899 = vmatprep.subr.mxu0 0.0
      %1900 = vmatpush1.msra.mxu0 %v1882
      %1901 = vmatprep.subr.mxu0 0.0
      %1902 = vmatpush1.msra.mxu0 %v1883
      %1903 = vmatprep.subr.mxu0 0.0
      %1904 = vmatpush1.msra.mxu0 %v1884
      %1905 = vmatprep.subr.mxu0 0.0
      %1906 = vmatpush1.msra.mxu0 %v1885
      %1907 = vmatprep.subr.mxu0 0.0
      %1908 = vmatpush1.msra.mxu0 %v1886
      %1909 = vmatprep.subr.mxu0 0.0
      %1910 = vmatpush1.msra.mxu0 %v1887
      %1911 = vmatprep.subr.mxu0 0.0
      %1912 = vmatpush1.msra.mxu0 %v1888
      %1913 = vmatprep.subr.mxu0 0.0
      %1914 = vmatpush1.msra.mxu0 %v1889
      %1915 = vmatprep.subr.mxu0 0.0
      %1916 = vmatpush1.msra.mxu0 %v1890
      %1917 = vmatprep.subr.mxu0 0.0
      %1918 = vmatpush1.msra.mxu0 %v1891
      %1919 = vmatprep.subr.mxu0 0.0
      %1920 = vmatpush1.msra.mxu0 %v1892
      %1921 = vmatprep.subr.mxu0 0.0
      %1922 = vmatpush1.msra.mxu0 %v1893
      %1923 = vmatprep.subr.mxu0 0.0
      %1924 = vmatpush1.msra.mxu0 %v1894
      %1925 = vmatprep.subr.mxu0 0.0
      %1926 = vmatpush1.msra.mxu0 %v1895
      %1927 = vmatprep.subr.mxu0 0.0
      %1928 = vmatpush1.msra.mxu0 %v1896
      %1929 = vmatprep.subr.mxu0 0.0
      %1930 = vmatpush1.msra.mxu0 0.0
      %1931 = vmatprep.subr.mxu0 0.0
      %1932 = vmatpush1.msra.mxu0 0.0
      %1933 = vmatprep.subr.mxu0 0.0
      %1934 = vmatpush1.msra.mxu0 0.0
      %1935 = vmatprep.subr.mxu0 0.0
      %1936 = vmatpush1.msra.mxu0 0.0
      %1937 = vmatprep.subr.mxu0 0.0
      %1938 = vmatpush1.msra.mxu0 0.0
      %1939 = vmatprep.subr.mxu0 0.0
      %1940 = vmatpush1.msra.mxu0 0.0
      %1941 = vmatprep.subr.mxu0 0.0
      %1942 = vmatpush1.msra.mxu0 0.0
      %1943 = vmatprep.subr.mxu0 0.0
      %1944 = vmatpush1.msra.mxu0 0.0
      %1945 = vmatprep.subr.mxu0 0.0
      %1946 = vmatpush1.msra.mxu0 0.0
      %1947 = vmatprep.subr.mxu0 0.0
      %1948 = vmatpush1.msra.mxu0 0.0
      %1949 = vmatprep.subr.mxu0 0.0
      %1950 = vmatpush1.msra.mxu0 0.0
      %1951 = vmatprep.subr.mxu0 0.0
      %1952 = vmatpush1.msra.mxu0 0.0
      %1953 = vmatprep.subr.mxu0 0.0
      %1954 = vmatpush1.msra.mxu0 0.0
      %1955 = vmatprep.subr.mxu0 0.0
      %1956 = vmatpush1.msra.mxu0 0.0
      %1957 = vmatprep.subr.mxu0 0.0
      %1958 = vmatpush1.msra.mxu0 0.0
      %1959 = vmatprep.subr.mxu0 0.0
      %1960 = vmatpush1.msra.mxu0 0.0
      %1961 = vmatprep.mubr.f32.mxu0 0.0
      %1962 = vmatmul.mubr.f32.gmra.mrb[0].mxu0 %v1880
      %v1963 = vpop.f32.mrb[0].mxu0
      %v1964 = vadd.f32 0.0, %v1963
      %v1965 = vpop.f32.mrb[0].mxu0
      %1966 = vdwg.mxu0
      %v1967 = vmul.f32 %v1964, 0.0625
      %v1968 = vmul.f32 %v1967, %v1967
      %v1970 = vrot.slane %v1968, 7
      %v1972 = vsub.f32 %v1967, %v1970
      %v1973 = vmax.f32 %v1972, 0.0
      %v1974 = vadd.f32 %v1973, 1e-05
      %v1975 = vrsqrt.pop %v1974
      %v1976 = vsub.f32 0.0, %v1967
      %v1978 = vrot.slane %v1975, 1
      %v1980 = vmul.f32 %v1976, %v1978
      %v1982 = vrot.slane %v1980, 7
      %v1984 = vsel %vm1309, %v1978, %v1982
      %v1985 = vld [vmem:[%s10] sm:$0xff]
      %v1986 = vld [vmem:[%s10 + $0x8] sm:$0xff]
      %v1987 = vld [vmem:[%s10 + $0x10] sm:$0xff]
      %v1988 = vld [vmem:[%s10 + $0x18] sm:$0xff]
      %vm1989 = vcmask 261120
      %v1991 = vsel %vm1989, %v1984, 0
      %1993 = vmatprep.subr.mxu0 0.0
      %1994 = vmatpush1.msra.mxu0 %v1985
      %1995 = vmatprep.subr.mxu0 0.0
      %1996 = vmatpush1.msra.mxu0 %v1986
      %1997 = vmatprep.subr.mxu0 0.0
      %1998 = vmatpush1.msra.mxu0 %v1987
      %1999 = vmatprep.subr.mxu0 0.0
      %2000 = vmatpush1.msra.mxu0 %v1988
      %2001 = vmatprep.subr.mxu0 0.0
      %2002 = vmatpush1.msra.mxu0 0.0
      %2003 = vmatprep.subr.mxu0 0.0
      %2004 = vmatpush1.msra.mxu0 0.0
      %2005 = vmatprep.subr.mxu0 0.0
      %2006 = vmatpush1.msra.mxu0 0.0
      %2007 = vmatprep.subr.mxu0 0.0
      %2008 = vmatpush1.msra.mxu0 0.0
      %2009 = vmatprep.subr.mxu0 0.0
      %2010 = vmatpush1.msra.mxu0 0.0
      %2011 = vmatprep.subr.mxu0 0.0
      %2012 = vmatpush1.msra.mxu0 0.0
      %2013 = vmatprep.subr.mxu0 0.0
      %2014 = vmatpush1.msra.mxu0 0.0
      %2015 = vmatprep.subr.mxu0 0.0
      %2016 = vmatpush1.msra.mxu0 0.0
      %2017 = vmatprep.subr.mxu0 0.0
      %2018 = vmatpush1.msra.mxu0 0.0
      %2019 = vmatprep.subr.mxu0 0.0
      %2020 = vmatpush1.msra.mxu0 0.0
      %2021 = vmatprep.subr.mxu0 0.0
      %2022 = vmatpush1.msra.mxu0 0.0
      %2023 = vmatprep.subr.mxu0 0.0
      %2024 = vmatpush1.msra.mxu0 0.0
      %2025 = vmatprep.subr.mxu0 0.0
      %2026 = vmatpush1.msra.mxu0 0.0
      %2027 = vmatprep.subr.mxu0 0.0
      %2028 = vmatpush1.msra.mxu0 0.0
      %2029 = vmatprep.subr.mxu0 0.0
      %2030 = vmatpush1.msra.mxu0 0.0
      %2031 = vmatprep.subr.mxu0 0.0
      %2032 = vmatpush1.msra.mxu0 0.0
      %2033 = vmatprep.subr.mxu0 0.0
      %2034 = vmatpush1.msra.mxu0 0.0
      %2035 = vmatprep.subr.mxu0 0.0
      %2036 = vmatpush1.msra.mxu0 0.0
      %2037 = vmatprep.subr.mxu0 0.0
      %2038 = vmatpush1.msra.mxu0 0.0
      %2039 = vmatprep.subr.mxu0 0.0
      %2040 = vmatpush1.msra.mxu0 0.0
      %2041 = vmatprep.subr.mxu0 0.0
      %2042 = vmatpush1.msra.mxu0 0.0
      %2043 = vmatprep.subr.mxu0 0.0
      %2044 = vmatpush1.msra.mxu0 0.0
      %2045 = vmatprep.subr.mxu0 0.0
      %2046 = vmatpush1.msra.mxu0 0.0
      %2047 = vmatprep.subr.mxu0 0.0
      %2048 = vmatpush1.msra.mxu0 0.0
      %2049 = vmatprep.subr.mxu0 0.0
      %2050 = vmatpush1.msra.mxu0 0.0
      %2051 = vmatprep.subr.mxu0 0.0
      %2052 = vmatpush1.msra.mxu0 0.0
      %2053 = vmatprep.subr.mxu0 0.0
      %2054 = vmatpush1.msra.mxu0 0.0
      %2055 = vmatprep.subr.mxu0 0.0
      %2056 = vmatpush1.msra.mxu0 0.0
      %2057 = vmatprep.mubr.f32.mxu0 0.0
      %2058 = vmatmul.mubr.f32.gmra.mrb[0].mxu0 %v1991
      %v2059 = vpop.f32.mrb[0].mxu0
      %v2060 = vadd.f32 0.0, %v2059
      %v2061 = vpop.f32.mrb[0].mxu0
      %2062 = vdwg.mxu0
      %v2063 = vlaneseq
      %v2064 = vshrl.u32 %v2063, 7
      %v2065 = vsub.s32 0, %v2064
      %v2066 = vrot.slane %v2060, %v2065
      %v2067 = vmul.f32 %v1859, %v2066
      %v2068 = vlaneseq
      %v2069 = vshrl.u32 %v2068, 7
      %v2070 = vsub.s32 1, %v2069
      %v2071 = vrot.slane %v2060, %v2070
      %v2072 = vadd.f32 %v2067, %v2071
      %vm2073 = vcmp.gt.f32.partialorder %v2072, 0.0
      %v2074 = vmin.f32 %v2072, 0.0
      %v2075 = vmul.f32 %v2074, 1.442695
      %v2076 = vpow.pop %v2075
      %v2077 = vsub.f32 %v2076, 1.0
      %v2078 = vsel %vm2073, %v2072, %v2077
      %2079 = vst [vmem:[#allocation5] sm:$0x1] 0.0
      %2080 = vst [vmem:[#allocation5 + $0x5] sm:$0x1] 0.0
      %2081 = vst [vmem:[#allocation5 + $0x1] sm:$0xf] %v2078
      %v2082 = vld [vmem:[#allocation5] sm:$0x7]
      %v2083 = vld [vmem:[#allocation5 + $0x1] sm:$0x7]
      %v2084 = vld [vmem:[#allocation5 + $0x2] sm:$0x7]
      %v2085 = vld [vmem:[#allocation5 + $0x3] sm:$0x7]
      %v2086 = vpack.c.bf16 %v2082, %v2082
      %v2087 = vpack.c.bf16 %v2083, %v2083
      %v2088 = vpack.c.bf16 %v2084, %v2084
      %v2089 = vpack.c.bf16 %v2085, %v2085
      %v2090 = vld [vmem:[%s11] sm:$0xff]
      %v2091 = vld [vmem:[%s11 + $0x8] sm:$0xff]
      %v2092 = vld [vmem:[%s11 + $0x10] sm:$0xff]
      %v2093 = vld [vmem:[%s11 + $0x18] sm:$0xff]
      %v2094 = vld [vmem:[%s11 + $0x20] sm:$0xff]
      %v2095 = vld [vmem:[%s11 + $0x28] sm:$0xff]
      %v2096 = vld [vmem:[%s11 + $0x30] sm:$0xff]
      %v2097 = vld [vmem:[%s11 + $0x38] sm:$0xff]
      %v2098 = vld [vmem:[%s11 + $0x40] sm:$0xff]
      %v2099 = vld [vmem:[%s11 + $0x48] sm:$0xff]
      %v2100 = vld [vmem:[%s11 + $0x50] sm:$0xff]
      %v2101 = vld [vmem:[%s11 + $0x58] sm:$0xff]
      %v2102 = vld [vmem:[%s11 + $0x60] sm:$0xff]
      %v2103 = vld [vmem:[%s11 + $0x68] sm:$0xff]
      %v2104 = vld [vmem:[%s11 + $0x70] sm:$0xff]
      %v2105 = vld [vmem:[%s11 + $0x78] sm:$0xff]
      %v2106 = vld [vmem:[%s11 + $0x80] sm:$0xff]
      %v2107 = vld [vmem:[%s11 + $0x88] sm:$0xff]
      %v2108 = vld [vmem:[%s11 + $0x90] sm:$0xff]
      %v2109 = vld [vmem:[%s11 + $0x98] sm:$0xff]
      %v2110 = vld [vmem:[%s11 + $0xa0] sm:$0xff]
      %v2111 = vld [vmem:[%s11 + $0xa8] sm:$0xff]
      %v2112 = vld [vmem:[%s11 + $0xb0] sm:$0xff]
      %v2113 = vld [vmem:[%s11 + $0xb8] sm:$0xff]
      %v2114 = vld [vmem:[%s11 + $0xc0] sm:$0xff]
      %v2115 = vld [vmem:[%s11 + $0xc8] sm:$0xff]
      %v2116 = vld [vmem:[%s11 + $0xd0] sm:$0xff]
      %v2117 = vld [vmem:[%s11 + $0xd8] sm:$0xff]
      %v2118 = vld [vmem:[%s11 + $0xe0] sm:$0xff]
      %v2119 = vld [vmem:[%s11 + $0xe8] sm:$0xff]
      %v2120 = vld [vmem:[%s11 + $0xf0] sm:$0xff]
      %v2121 = vld [vmem:[%s11 + $0xf8] sm:$0xff]
      %v2122 = vld [vmem:[%s11 + $0x100] sm:$0xff]
      %v2123 = vld [vmem:[%s11 + $0x108] sm:$0xff]
      %v2124 = vld [vmem:[%s11 + $0x110] sm:$0xff]
      %v2125 = vld [vmem:[%s11 + $0x118] sm:$0xff]
      %v2126 = vld [vmem:[%s11 + $0x120] sm:$0xff]
      %v2127 = vld [vmem:[%s11 + $0x128] sm:$0xff]
      %v2128 = vld [vmem:[%s11 + $0x130] sm:$0xff]
      %v2129 = vld [vmem:[%s11 + $0x138] sm:$0xff]
      %v2130 = vld [vmem:[%s11 + $0x140] sm:$0xff]
      %v2131 = vld [vmem:[%s11 + $0x148] sm:$0xff]
      %v2132 = vld [vmem:[%s11 + $0x150] sm:$0xff]
      %v2133 = vld [vmem:[%s11 + $0x158] sm:$0xff]
      %v2134 = vld [vmem:[%s11 + $0x160] sm:$0xff]
      %v2135 = vld [vmem:[%s11 + $0x168] sm:$0xff]
      %v2136 = vld [vmem:[%s11 + $0x170] sm:$0xff]
      %v2137 = vld [vmem:[%s11 + $0x178] sm:$0xff]
      %v2138 = vld [vmem:[%s11 + $0x180] sm:$0xff]
      %v2139 = vld [vmem:[%s11 + $0x188] sm:$0xff]
      %v2140 = vld [vmem:[%s11 + $0x190] sm:$0xff]
      %v2141 = vld [vmem:[%s11 + $0x198] sm:$0xff]
      %v2142 = vld [vmem:[%s11 + $0x1a0] sm:$0xff]
      %v2143 = vld [vmem:[%s11 + $0x1a8] sm:$0xff]
      %v2144 = vld [vmem:[%s11 + $0x1b0] sm:$0xff]
      %v2145 = vld [vmem:[%s11 + $0x1b8] sm:$0xff]
      %v2146 = vld [vmem:[%s11 + $0x1c0] sm:$0xff]
      %v2147 = vld [vmem:[%s11 + $0x1c8] sm:$0xff]
      %v2148 = vld [vmem:[%s11 + $0x1d0] sm:$0xff]
      %v2149 = vld [vmem:[%s11 + $0x1d8] sm:$0xff]
      %v2150 = vld [vmem:[%s11 + $0x1e0] sm:$0xff]
      %v2151 = vld [vmem:[%s11 + $0x1e8] sm:$0xff]
      %v2152 = vld [vmem:[%s11 + $0x1f0] sm:$0xff]
      %v2153 = vld [vmem:[%s11 + $0x1f8] sm:$0xff]
      %v2154 = vld [vmem:[%s12] sm:$0x3]
      %v2156 = vlaneseq
      %v2157 = vshrl.u32 %v2156, 7
      %v2158 = vsub.s32 0, %v2157
      %v2159 = vrot.slane %v2154, %v2158
      %v2160 = vlaneseq
      %v2161 = vshrl.u32 %v2160, 7
      %v2162 = vsub.s32 1, %v2161
      %v2163 = vrot.slane %v2154, %v2162
      %v2230 = vunpack.c.l.b16 %v2090
      %v2231 = vunpack.c.h.b16 %v2090
      %v2232 = vunpack.c.l.b16 %v2091
      %v2233 = vunpack.c.h.b16 %v2091
      %v2234 = vunpack.c.l.b16 %v2092
      %v2235 = vunpack.c.h.b16 %v2092
      %v2236 = vunpack.c.l.b16 %v2093
      %v2237 = vunpack.c.h.b16 %v2093
      %v2238 = vunpack.c.l.b16 %v2094
      %v2239 = vunpack.c.h.b16 %v2094
      %v2240 = vunpack.c.l.b16 %v2095
      %v2241 = vunpack.c.h.b16 %v2095
      %v2242 = vunpack.c.l.b16 %v2096
      %v2243 = vunpack.c.h.b16 %v2096
      %v2244 = vunpack.c.l.b16 %v2097
      %v2245 = vunpack.c.h.b16 %v2097
      %v2246 = vunpack.c.l.b16 %v2098
      %v2247 = vunpack.c.h.b16 %v2098
      %v2248 = vunpack.c.l.b16 %v2099
      %v2249 = vunpack.c.h.b16 %v2099
      %v2250 = vunpack.c.l.b16 %v2100
      %v2251 = vunpack.c.h.b16 %v2100
      %v2252 = vunpack.c.l.b16 %v2101
      %v2253 = vunpack.c.h.b16 %v2101
      %v2254 = vunpack.c.l.b16 %v2102
      %v2255 = vunpack.c.h.b16 %v2102
      %v2256 = vunpack.c.l.b16 %v2103
      %v2257 = vunpack.c.h.b16 %v2103
      %v2258 = vunpack.c.l.b16 %v2104
      %v2259 = vunpack.c.h.b16 %v2104
      %v2260 = vunpack.c.l.b16 %v2105
      %v2261 = vunpack.c.h.b16 %v2105
      %v2262 = vunpack.c.l.b16 %v2106
      %v2263 = vunpack.c.h.b16 %v2106
      %v2264 = vunpack.c.l.b16 %v2107
      %v2265 = vunpack.c.h.b16 %v2107
      %v2266 = vunpack.c.l.b16 %v2108
      %v2267 = vunpack.c.h.b16 %v2108
      %v2268 = vunpack.c.l.b16 %v2109
      %v2269 = vunpack.c.h.b16 %v2109
      %v2270 = vunpack.c.l.b16 %v2110
      %v2271 = vunpack.c.h.b16 %v2110
      %v2272 = vunpack.c.l.b16 %v2111
      %v2273 = vunpack.c.h.b16 %v2111
      %v2274 = vunpack.c.l.b16 %v2112
      %v2275 = vunpack.c.h.b16 %v2112
      %v2276 = vunpack.c.l.b16 %v2113
      %v2277 = vunpack.c.h.b16 %v2113
      %v2278 = vunpack.c.l.b16 %v2114
      %v2279 = vunpack.c.h.b16 %v2114
      %v2280 = vunpack.c.l.b16 %v2115
      %v2281 = vunpack.c.h.b16 %v2115
      %v2282 = vunpack.c.l.b16 %v2116
      %v2283 = vunpack.c.h.b16 %v2116
      %v2284 = vunpack.c.l.b16 %v2117
      %v2285 = vunpack.c.h.b16 %v2117
      %v2286 = vunpack.c.l.b16 %v2118
      %v2287 = vunpack.c.h.b16 %v2118
      %v2288 = vunpack.c.l.b16 %v2119
      %v2289 = vunpack.c.h.b16 %v2119
      %v2290 = vunpack.c.l.b16 %v2120
      %v2291 = vunpack.c.h.b16 %v2120
      %v2292 = vunpack.c.l.b16 %v2121
      %v2293 = vunpack.c.h.b16 %v2121
      %v2294 = vunpack.c.l.b16 %v2122
      %v2295 = vunpack.c.h.b16 %v2122
      %v2296 = vunpack.c.l.b16 %v2123
      %v2297 = vunpack.c.h.b16 %v2123
      %v2298 = vunpack.c.l.b16 %v2124
      %v2299 = vunpack.c.h.b16 %v2124
      %v2300 = vunpack.c.l.b16 %v2125
      %v2301 = vunpack.c.h.b16 %v2125
      %v2302 = vunpack.c.l.b16 %v2126
      %v2303 = vunpack.c.h.b16 %v2126
      %v2304 = vunpack.c.l.b16 %v2127
      %v2305 = vunpack.c.h.b16 %v2127
      %v2306 = vunpack.c.l.b16 %v2128
      %v2307 = vunpack.c.h.b16 %v2128
      %v2308 = vunpack.c.l.b16 %v2129
      %v2309 = vunpack.c.h.b16 %v2129
      %v2310 = vunpack.c.l.b16 %v2130
      %v2311 = vunpack.c.h.b16 %v2130
      %v2312 = vunpack.c.l.b16 %v2131
      %v2313 = vunpack.c.h.b16 %v2131
      %v2314 = vunpack.c.l.b16 %v2132
      %v2315 = vunpack.c.h.b16 %v2132
      %v2316 = vunpack.c.l.b16 %v2133
      %v2317 = vunpack.c.h.b16 %v2133
      %v2318 = vunpack.c.l.b16 %v2134
      %v2319 = vunpack.c.h.b16 %v2134
      %v2320 = vunpack.c.l.b16 %v2135
      %v2321 = vunpack.c.h.b16 %v2135
      %v2322 = vunpack.c.l.b16 %v2136
      %v2323 = vunpack.c.h.b16 %v2136
      %v2324 = vunpack.c.l.b16 %v2137
      %v2325 = vunpack.c.h.b16 %v2137
      %v2326 = vunpack.c.l.b16 %v2138
      %v2327 = vunpack.c.h.b16 %v2138
      %v2328 = vunpack.c.l.b16 %v2139
      %v2329 = vunpack.c.h.b16 %v2139
      %v2330 = vunpack.c.l.b16 %v2140
      %v2331 = vunpack.c.h.b16 %v2140
      %v2332 = vunpack.c.l.b16 %v2141
      %v2333 = vunpack.c.h.b16 %v2141
      %v2334 = vunpack.c.l.b16 %v2142
      %v2335 = vunpack.c.h.b16 %v2142
      %v2336 = vunpack.c.l.b16 %v2143
      %v2337 = vunpack.c.h.b16 %v2143
      %v2338 = vunpack.c.l.b16 %v2144
      %v2339 = vunpack.c.h.b16 %v2144
      %v2340 = vunpack.c.l.b16 %v2145
      %v2341 = vunpack.c.h.b16 %v2145
      %v2342 = vunpack.c.l.b16 %v2146
      %v2343 = vunpack.c.h.b16 %v2146
      %v2344 = vunpack.c.l.b16 %v2147
      %v2345 = vunpack.c.h.b16 %v2147
      %v2346 = vunpack.c.l.b16 %v2148
      %v2347 = vunpack.c.h.b16 %v2148
      %v2348 = vunpack.c.l.b16 %v2149
      %v2349 = vunpack.c.h.b16 %v2149
      %v2350 = vunpack.c.l.b16 %v2150
      %v2351 = vunpack.c.h.b16 %v2150
      %v2352 = vunpack.c.l.b16 %v2151
      %v2353 = vunpack.c.h.b16 %v2151
      %v2354 = vunpack.c.l.b16 %v2152
      %v2355 = vunpack.c.h.b16 %v2152
      %v2356 = vunpack.c.l.b16 %v2153
      %v2357 = vunpack.c.h.b16 %v2153
      %v2358 = vpack.c.b16 %v2232, %v2230
      %v2359 = vpack.c.b16 %v2233, %v2231
      %v2360 = vpack.c.b16 %v2236, %v2234
      %v2361 = vpack.c.b16 %v2237, %v2235
      %v2362 = vpack.c.b16 %v2240, %v2238
      %v2363 = vpack.c.b16 %v2241, %v2239
      %v2364 = vpack.c.b16 %v2244, %v2242
      %v2365 = vpack.c.b16 %v2245, %v2243
      %v2366 = vpack.c.b16 %v2248, %v2246
      %v2367 = vpack.c.b16 %v2249, %v2247
      %v2368 = vpack.c.b16 %v2252, %v2250
      %v2369 = vpack.c.b16 %v2253, %v2251
      %v2370 = vpack.c.b16 %v2256, %v2254
      %v2371 = vpack.c.b16 %v2257, %v2255
      %v2372 = vpack.c.b16 %v2260, %v2258
      %v2373 = vpack.c.b16 %v2261, %v2259
      %v2374 = vpack.c.b16 %v2264, %v2262
      %v2375 = vpack.c.b16 %v2265, %v2263
      %v2376 = vpack.c.b16 %v2268, %v2266
      %v2377 = vpack.c.b16 %v2269, %v2267
      %v2378 = vpack.c.b16 %v2272, %v2270
      %v2379 = vpack.c.b16 %v2273, %v2271
      %v2380 = vpack.c.b16 %v2276, %v2274
      %v2381 = vpack.c.b16 %v2277, %v2275
      %v2382 = vpack.c.b16 %v2280, %v2278
      %v2383 = vpack.c.b16 %v2281, %v2279
      %v2384 = vpack.c.b16 %v2284, %v2282
      %v2385 = vpack.c.b16 %v2285, %v2283
      %v2386 = vpack.c.b16 %v2288, %v2286
      %v2387 = vpack.c.b16 %v2289, %v2287
      %v2388 = vpack.c.b16 %v2292, %v2290
      %v2389 = vpack.c.b16 %v2293, %v2291
      %v2390 = vpack.c.b16 %v2296, %v2294
      %v2391 = vpack.c.b16 %v2297, %v2295
      %v2392 = vpack.c.b16 %v2300, %v2298
      %v2393 = vpack.c.b16 %v2301, %v2299
      %v2394 = vpack.c.b16 %v2304, %v2302
      %v2395 = vpack.c.b16 %v2305, %v2303
      %v2396 = vpack.c.b16 %v2308, %v2306
      %v2397 = vpack.c.b16 %v2309, %v2307
      %v2398 = vpack.c.b16 %v2312, %v2310
      %v2399 = vpack.c.b16 %v2313, %v2311
      %v2400 = vpack.c.b16 %v2316, %v2314
      %v2401 = vpack.c.b16 %v2317, %v2315
      %v2402 = vpack.c.b16 %v2320, %v2318
      %v2403 = vpack.c.b16 %v2321, %v2319
      %v2404 = vpack.c.b16 %v2324, %v2322
      %v2405 = vpack.c.b16 %v2325, %v2323
      %v2406 = vpack.c.b16 %v2328, %v2326
      %v2407 = vpack.c.b16 %v2329, %v2327
      %v2408 = vpack.c.b16 %v2332, %v2330
      %v2409 = vpack.c.b16 %v2333, %v2331
      %v2410 = vpack.c.b16 %v2336, %v2334
      %v2411 = vpack.c.b16 %v2337, %v2335
      %v2412 = vpack.c.b16 %v2340, %v2338
      %v2413 = vpack.c.b16 %v2341, %v2339
      %v2414 = vpack.c.b16 %v2344, %v2342
      %v2415 = vpack.c.b16 %v2345, %v2343
      %v2416 = vpack.c.b16 %v2348, %v2346
      %v2417 = vpack.c.b16 %v2349, %v2347
      %v2418 = vpack.c.b16 %v2352, %v2350
      %v2419 = vpack.c.b16 %v2353, %v2351
      %v2420 = vpack.c.b16 %v2356, %v2354
      %v2421 = vpack.c.b16 %v2357, %v2355
      %2486 = vmatprep.subr.bf16.mxu0 %v2359
      %2487 = vmatpush1.bf16.msra.mxu0 %v2358
      %2488 = vmatprep.subr.bf16.mxu0 %v2361
      %2489 = vmatpush1.bf16.msra.mxu0 %v2360
      %2490 = vmatprep.subr.bf16.mxu0 %v2363
      %2491 = vmatpush1.bf16.msra.mxu0 %v2362
      %2492 = vmatprep.subr.bf16.mxu0 %v2365
      %2493 = vmatpush1.bf16.msra.mxu0 %v2364
      %2494 = vmatprep.subr.bf16.mxu0 %v2367
      %2495 = vmatpush1.bf16.msra.mxu0 %v2366
      %2496 = vmatprep.subr.bf16.mxu0 %v2369
      %2497 = vmatpush1.bf16.msra.mxu0 %v2368
      %2498 = vmatprep.subr.bf16.mxu0 %v2371
      %2499 = vmatpush1.bf16.msra.mxu0 %v2370
      %2500 = vmatprep.subr.bf16.mxu0 %v2373
      %2501 = vmatpush1.bf16.msra.mxu0 %v2372
      %2502 = vmatprep.subr.bf16.mxu0 %v2375
      %2503 = vmatpush1.bf16.msra.mxu0 %v2374
      %2504 = vmatprep.subr.bf16.mxu0 %v2377
      %2505 = vmatpush1.bf16.msra.mxu0 %v2376
      %2506 = vmatprep.subr.bf16.mxu0 %v2379
      %2507 = vmatpush1.bf16.msra.mxu0 %v2378
      %2508 = vmatprep.subr.bf16.mxu0 %v2381
      %2509 = vmatpush1.bf16.msra.mxu0 %v2380
      %2510 = vmatprep.subr.bf16.mxu0 %v2383
      %2511 = vmatpush1.bf16.msra.mxu0 %v2382
      %2512 = vmatprep.subr.bf16.mxu0 %v2385
      %2513 = vmatpush1.bf16.msra.mxu0 %v2384
      %2514 = vmatprep.subr.bf16.mxu0 %v2387
      %2515 = vmatpush1.bf16.msra.mxu0 %v2386
      %2516 = vmatprep.subr.bf16.mxu0 %v2389
      %2517 = vmatpush1.bf16.msra.mxu0 %v2388
      %2518 = vmatprep.mubr.bf16.mxu0 %v2087
      %2519 = vmatmul.mubr.bf16.gmra.mrb[0].mxu0 %v2086
      %v2520 = vpop.f32.mrb[0].mxu0
      %v2521 = vadd.f32 %v2159, %v2520
      %v2522 = vpop.f32.mrb[0].mxu0
      %v2523 = vadd.f32 %v2163, %v2522
      %v2524 = vpop.f32.mrb[0].mxu0
      %v2525 = vpop.f32.mrb[0].mxu0
      %2526 = vdwg.mxu0
      %2527 = vmatprep.subr.bf16.mxu0 %v2391
      %2528 = vmatpush1.bf16.msra.mxu0 %v2390
      %2529 = vmatprep.subr.bf16.mxu0 %v2393
      %2530 = vmatpush1.bf16.msra.mxu0 %v2392
      %2531 = vmatprep.subr.bf16.mxu0 %v2395
      %2532 = vmatpush1.bf16.msra.mxu0 %v2394
      %2533 = vmatprep.subr.bf16.mxu0 %v2397
      %2534 = vmatpush1.bf16.msra.mxu0 %v2396
      %2535 = vmatprep.subr.bf16.mxu0 %v2399
      %2536 = vmatpush1.bf16.msra.mxu0 %v2398
      %2537 = vmatprep.subr.bf16.mxu0 %v2401
      %2538 = vmatpush1.bf16.msra.mxu0 %v2400
      %2539 = vmatprep.subr.bf16.mxu0 %v2403
      %2540 = vmatpush1.bf16.msra.mxu0 %v2402
      %2541 = vmatprep.subr.bf16.mxu0 %v2405
      %2542 = vmatpush1.bf16.msra.mxu0 %v2404
      %2543 = vmatprep.subr.bf16.mxu0 %v2407
      %2544 = vmatpush1.bf16.msra.mxu0 %v2406
      %2545 = vmatprep.subr.bf16.mxu0 %v2409
      %2546 = vmatpush1.bf16.msra.mxu0 %v2408
      %2547 = vmatprep.subr.bf16.mxu0 %v2411
      %2548 = vmatpush1.bf16.msra.mxu0 %v2410
      %2549 = vmatprep.subr.bf16.mxu0 %v2413
      %2550 = vmatpush1.bf16.msra.mxu0 %v2412
      %2551 = vmatprep.subr.bf16.mxu0 %v2415
      %2552 = vmatpush1.bf16.msra.mxu0 %v2414
      %2553 = vmatprep.subr.bf16.mxu0 %v2417
      %2554 = vmatpush1.bf16.msra.mxu0 %v2416
      %2555 = vmatprep.subr.bf16.mxu0 %v2419
      %2556 = vmatpush1.bf16.msra.mxu0 %v2418
      %2557 = vmatprep.subr.bf16.mxu0 %v2421
      %2558 = vmatpush1.bf16.msra.mxu0 %v2420
      %2559 = vmatprep.mubr.bf16.mxu0 %v2089
      %2560 = vmatmul.mubr.bf16.gmra.mrb[0].mxu0 %v2088
      %v2561 = vpop.f32.mrb[0].mxu0
      %v2562 = vadd.f32 %v2521, %v2561
      %v2563 = vpop.f32.mrb[0].mxu0
      %v2564 = vadd.f32 %v2523, %v2563
      %v2565 = vpop.f32.mrb[0].mxu0
      %v2566 = vpop.f32.mrb[0].mxu0
      %2567 = vdwg.mxu0
      %vm2568 = vcmask 1042432
      %v2569 = vsel %vm2568, %v2562, 0.0
      %v2570 = vrot.slane %v2569, 4
      %v2571 = vadd.f32 %v2569, %v2570
      %v2572 = vrot.slane %v2571, 2
      %v2573 = vadd.f32 %v2571, %v2572
      %v2574 = vrot.slane %v2573, 1
      %v2575 = vadd.f32 %v2573, %v2574
      %vm2576 = vcmask 518144
      %v2577 = vsel %vm2576, %v2564, 0.0
      %v2578 = vrot.slane %v2577, 4
      %v2579 = vadd.f32 %v2577, %v2578
      %v2580 = vrot.slane %v2579, 2
      %v2581 = vadd.f32 %v2579, %v2580
      %v2582 = vrot.slane %v2581, 1
      %v2583 = vadd.f32 %v2581, %v2582
      %v2584 = vmul.f32 %v2562, %v2562
      %v2585 = vmul.f32 %v2564, %v2564
      %v2586 = vsel %vm2568, %v2584, 0.0
      %v2587 = vrot.slane %v2586, 4
      %v2588 = vadd.f32 %v2586, %v2587
      %v2589 = vrot.slane %v2588, 2
      %v2590 = vadd.f32 %v2588, %v2589
      %v2591 = vrot.slane %v2590, 1
      %v2592 = vadd.f32 %v2590, %v2591
      %v2593 = vsel %vm2576, %v2585, 0.0
      %v2594 = vrot.slane %v2593, 4
      %v2595 = vadd.f32 %v2593, %v2594
      %v2596 = vrot.slane %v2595, 2
      %v2597 = vadd.f32 %v2595, %v2596
      %v2598 = vrot.slane %v2597, 1
      %v2599 = vadd.f32 %v2597, %v2598
      %v2600 = vsel %vm1309, %v2575, %v2592
      %v2601 = vsel %vm1309, %v2583, %v2599
      %v2602 = vld [vmem:[%s13] sm:$0xff]
      %v2603 = vld [vmem:[%s13 + $0x8] sm:$0xff]
      %v2604 = vld [vmem:[%s13 + $0x10] sm:$0xff]
      %v2605 = vld [vmem:[%s13 + $0x18] sm:$0xff]
      %v2606 = vld [vmem:[%s13 + $0x20] sm:$0xff]
      %v2607 = vld [vmem:[%s13 + $0x28] sm:$0xff]
      %v2608 = vld [vmem:[%s13 + $0x30] sm:$0xff]
      %v2609 = vld [vmem:[%s13 + $0x38] sm:$0xff]
      %v2610 = vld [vmem:[%s13 + $0x40] sm:$0xff]
      %v2611 = vld [vmem:[%s13 + $0x48] sm:$0xff]
      %v2612 = vld [vmem:[%s13 + $0x50] sm:$0xff]
      %v2613 = vld [vmem:[%s13 + $0x58] sm:$0xff]
      %v2614 = vld [vmem:[%s13 + $0x60] sm:$0xff]
      %v2615 = vld [vmem:[%s13 + $0x68] sm:$0xff]
      %v2616 = vld [vmem:[%s13 + $0x70] sm:$0xff]
      %v2617 = vld [vmem:[%s13 + $0x78] sm:$0xff]
      %v2618 = vld [vmem:[%s13 + $0x80] sm:$0xff]
      %v2619 = vld [vmem:[%s13 + $0x88] sm:$0xff]
      %v2620 = vld [vmem:[%s13 + $0x90] sm:$0xff]
      %v2621 = vld [vmem:[%s13 + $0x98] sm:$0xff]
      %v2622 = vld [vmem:[%s13 + $0xa0] sm:$0xff]
      %v2623 = vld [vmem:[%s13 + $0xa8] sm:$0xff]
      %v2624 = vld [vmem:[%s13 + $0xb0] sm:$0xff]
      %v2625 = vld [vmem:[%s13 + $0xb8] sm:$0xff]
      %vm2626 = vcmask 523264
      %v2628 = vsel %vm2626, %v2601, 0
      %2630 = vmatprep.subr.mxu0 0.0
      %2631 = vmatpush1.msra.mxu0 %v2602
      %2632 = vmatprep.subr.mxu0 0.0
      %2633 = vmatpush1.msra.mxu0 %v2603
      %2634 = vmatprep.subr.mxu0 0.0
      %2635 = vmatpush1.msra.mxu0 %v2604
      %2636 = vmatprep.subr.mxu0 0.0
      %2637 = vmatpush1.msra.mxu0 %v2605
      %2638 = vmatprep.subr.mxu0 0.0
      %2639 = vmatpush1.msra.mxu0 %v2606
      %2640 = vmatprep.subr.mxu0 0.0
      %2641 = vmatpush1.msra.mxu0 %v2607
      %2642 = vmatprep.subr.mxu0 0.0
      %2643 = vmatpush1.msra.mxu0 %v2608
      %2644 = vmatprep.subr.mxu0 0.0
      %2645 = vmatpush1.msra.mxu0 %v2609
      %2646 = vmatprep.subr.mxu0 0.0
      %2647 = vmatpush1.msra.mxu0 %v2610
      %2648 = vmatprep.subr.mxu0 0.0
      %2649 = vmatpush1.msra.mxu0 %v2611
      %2650 = vmatprep.subr.mxu0 0.0
      %2651 = vmatpush1.msra.mxu0 %v2612
      %2652 = vmatprep.subr.mxu0 0.0
      %2653 = vmatpush1.msra.mxu0 %v2613
      %2654 = vmatprep.subr.mxu0 0.0
      %2655 = vmatpush1.msra.mxu0 %v2614
      %2656 = vmatprep.subr.mxu0 0.0
      %2657 = vmatpush1.msra.mxu0 %v2615
      %2658 = vmatprep.subr.mxu0 0.0
      %2659 = vmatpush1.msra.mxu0 %v2616
      %2660 = vmatprep.subr.mxu0 0.0
      %2661 = vmatpush1.msra.mxu0 %v2617
      %2662 = vmatprep.subr.mxu0 0.0
      %2663 = vmatpush1.msra.mxu0 %v2618
      %2664 = vmatprep.subr.mxu0 0.0
      %2665 = vmatpush1.msra.mxu0 %v2619
      %2666 = vmatprep.subr.mxu0 0.0
      %2667 = vmatpush1.msra.mxu0 %v2620
      %2668 = vmatprep.subr.mxu0 0.0
      %2669 = vmatpush1.msra.mxu0 %v2621
      %2670 = vmatprep.subr.mxu0 0.0
      %2671 = vmatpush1.msra.mxu0 %v2622
      %2672 = vmatprep.subr.mxu0 0.0
      %2673 = vmatpush1.msra.mxu0 %v2623
      %2674 = vmatprep.subr.mxu0 0.0
      %2675 = vmatpush1.msra.mxu0 %v2624
      %2676 = vmatprep.subr.mxu0 0.0
      %2677 = vmatpush1.msra.mxu0 %v2625
      %2678 = vmatprep.subr.mxu0 0.0
      %2679 = vmatpush1.msra.mxu0 0.0
      %2680 = vmatprep.subr.mxu0 0.0
      %2681 = vmatpush1.msra.mxu0 0.0
      %2682 = vmatprep.subr.mxu0 0.0
      %2683 = vmatpush1.msra.mxu0 0.0
      %2684 = vmatprep.subr.mxu0 0.0
      %2685 = vmatpush1.msra.mxu0 0.0
      %2686 = vmatprep.subr.mxu0 0.0
      %2687 = vmatpush1.msra.mxu0 0.0
      %2688 = vmatprep.subr.mxu0 0.0
      %2689 = vmatpush1.msra.mxu0 0.0
      %2690 = vmatprep.subr.mxu0 0.0
      %2691 = vmatpush1.msra.mxu0 0.0
      %2692 = vmatprep.subr.mxu0 0.0
      %2693 = vmatpush1.msra.mxu0 0.0
      %2694 = vmatprep.mubr.f32.mxu0 %v2628
      %2695 = vmatmul.mubr.f32.gmra.mrb[0].mxu0 %v2600
      %v2696 = vpop.f32.mrb[0].mxu0
      %v2697 = vadd.f32 0.0, %v2696
      %v2698 = vpop.f32.mrb[0].mxu0
      %2699 = vdwg.mxu0
      %v2700 = vmul.f32 %v2697, 0.11111111
      %v2701 = vmul.f32 %v2700, %v2700
      %v2703 = vrot.slane %v2701, 7
      %v2705 = vsub.f32 %v2700, %v2703
      %v2706 = vmax.f32 %v2705, 0.0
      %v2707 = vadd.f32 %v2706, 1e-05
      %v2708 = vrsqrt.pop %v2707
      %v2709 = vsub.f32 0.0, %v2700
      %v2711 = vrot.slane %v2708, 1
      %v2713 = vmul.f32 %v2709, %v2711
      %v2715 = vrot.slane %v2713, 7
      %v2717 = vsel %vm1309, %v2711, %v2715
      %v2718 = vld [vmem:[%s14] sm:$0xff]
      %v2719 = vld [vmem:[%s14 + $0x8] sm:$0xff]
      %v2720 = vld [vmem:[%s14 + $0x10] sm:$0xff]
      %v2721 = vld [vmem:[%s14 + $0x18] sm:$0xff]
      %v2722 = vld [vmem:[%s14 + $0x20] sm:$0xff]
      %v2723 = vld [vmem:[%s14 + $0x28] sm:$0xff]
      %v2724 = vld [vmem:[%s14 + $0x30] sm:$0xff]
      %v2725 = vld [vmem:[%s14 + $0x38] sm:$0xff]
      %v2726 = vld [vmem:[%s14 + $0x40] sm:$0xff]
      %v2727 = vld [vmem:[%s14 + $0x48] sm:$0xff]
      %v2728 = vld [vmem:[%s14 + $0x50] sm:$0xff]
      %v2729 = vld [vmem:[%s14 + $0x58] sm:$0xff]
      %v2730 = vld [vmem:[%s14 + $0x60] sm:$0xff]
      %v2731 = vld [vmem:[%s14 + $0x68] sm:$0xff]
      %v2732 = vld [vmem:[%s14 + $0x70] sm:$0xff]
      %v2733 = vld [vmem:[%s14 + $0x78] sm:$0xff]
      %v2735 = vsel %vm2626, %v2717, 0
      %2737 = vmatprep.subr.mxu0 %v2719
      %2738 = vmatpush1.msra.mxu0 %v2718
      %2739 = vmatprep.subr.mxu0 %v2721
      %2740 = vmatpush1.msra.mxu0 %v2720
      %2741 = vmatprep.subr.mxu0 %v2723
      %2742 = vmatpush1.msra.mxu0 %v2722
      %2743 = vmatprep.subr.mxu0 %v2725
      %2744 = vmatpush1.msra.mxu0 %v2724
      %2745 = vmatprep.subr.mxu0 %v2727
      %2746 = vmatpush1.msra.mxu0 %v2726
      %2747 = vmatprep.subr.mxu0 %v2729
      %2748 = vmatpush1.msra.mxu0 %v2728
      %2749 = vmatprep.subr.mxu0 %v2731
      %2750 = vmatpush1.msra.mxu0 %v2730
      %2751 = vmatprep.subr.mxu0 %v2733
      %2752 = vmatpush1.msra.mxu0 %v2732
      %2753 = vmatprep.subr.mxu0 0.0
      %2754 = vmatpush1.msra.mxu0 0.0
      %2755 = vmatprep.subr.mxu0 0.0
      %2756 = vmatpush1.msra.mxu0 0.0
      %2757 = vmatprep.subr.mxu0 0.0
      %2758 = vmatpush1.msra.mxu0 0.0
      %2759 = vmatprep.subr.mxu0 0.0
      %2760 = vmatpush1.msra.mxu0 0.0
      %2761 = vmatprep.subr.mxu0 0.0
      %2762 = vmatpush1.msra.mxu0 0.0
      %2763 = vmatprep.subr.mxu0 0.0
      %2764 = vmatpush1.msra.mxu0 0.0
      %2765 = vmatprep.subr.mxu0 0.0
      %2766 = vmatpush1.msra.mxu0 0.0
      %2767 = vmatprep.subr.mxu0 0.0
      %2768 = vmatpush1.msra.mxu0 0.0
      %2769 = vmatprep.subr.mxu0 0.0
      %2770 = vmatpush1.msra.mxu0 0.0
      %2771 = vmatprep.subr.mxu0 0.0
      %2772 = vmatpush1.msra.mxu0 0.0
      %2773 = vmatprep.subr.mxu0 0.0
      %2774 = vmatpush1.msra.mxu0 0.0
      %2775 = vmatprep.subr.mxu0 0.0
      %2776 = vmatpush1.msra.mxu0 0.0
      %2777 = vmatprep.subr.mxu0 0.0
      %2778 = vmatpush1.msra.mxu0 0.0
      %2779 = vmatprep.subr.mxu0 0.0
      %2780 = vmatpush1.msra.mxu0 0.0
      %2781 = vmatprep.subr.mxu0 0.0
      %2782 = vmatpush1.msra.mxu0 0.0
      %2783 = vmatprep.subr.mxu0 0.0
      %2784 = vmatpush1.msra.mxu0 0.0
      %2785 = vmatprep.subr.mxu0 0.0
      %2786 = vmatpush1.msra.mxu0 0.0
      %2787 = vmatprep.subr.mxu0 0.0
      %2788 = vmatpush1.msra.mxu0 0.0
      %2789 = vmatprep.subr.mxu0 0.0
      %2790 = vmatpush1.msra.mxu0 0.0
      %2791 = vmatprep.subr.mxu0 0.0
      %2792 = vmatpush1.msra.mxu0 0.0
      %2793 = vmatprep.subr.mxu0 0.0
      %2794 = vmatpush1.msra.mxu0 0.0
      %2795 = vmatprep.subr.mxu0 0.0
      %2796 = vmatpush1.msra.mxu0 0.0
      %2797 = vmatprep.subr.mxu0 0.0
      %2798 = vmatpush1.msra.mxu0 0.0
      %2799 = vmatprep.subr.mxu0 0.0
      %2800 = vmatpush1.msra.mxu0 0.0
      %2801 = vmatprep.mubr.f32.mxu0 0.0
      %2802 = vmatmul.mubr.f32.gmra.mrb[0].mxu0 %v2735
      %v2803 = vpop.f32.mrb[0].mxu0
      %v2804 = vadd.f32 0.0, %v2803
      %v2805 = vpop.f32.mrb[0].mxu0
      %v2806 = vadd.f32 0.0, %v2805
      %2807 = vdwg.mxu0
      %v2808 = vlaneseq
      %v2809 = vshrl.u32 %v2808, 7
      %v2810 = vsub.s32 0, %v2809
      %v2811 = vrot.slane %v2804, %v2810
      %v2812 = vlaneseq
      %v2813 = vshrl.u32 %v2812, 7
      %v2814 = vsub.s32 0, %v2813
      %v2815 = vrot.slane %v2806, %v2814
      %v2816 = vmul.f32 %v2562, %v2811
      %v2817 = vmul.f32 %v2564, %v2815
      %v2818 = vlaneseq
      %v2819 = vshrl.u32 %v2818, 7
      %v2820 = vsub.s32 1, %v2819
      %v2821 = vrot.slane %v2804, %v2820
      %v2822 = vlaneseq
      %v2823 = vshrl.u32 %v2822, 7
      %v2824 = vsub.s32 1, %v2823
      %v2825 = vrot.slane %v2806, %v2824
      %v2826 = vadd.f32 %v2816, %v2821
      %v2827 = vadd.f32 %v2817, %v2825
      %vm2828 = vcmp.gt.f32.partialorder %v2826, 0.0
      %vm2829 = vcmp.gt.f32.partialorder %v2827, 0.0
      %v2830 = vmin.f32 %v2826, 0.0
      %v2831 = vmin.f32 %v2827, 0.0
      %v2832 = vmul.f32 %v2830, 1.442695
      %v2833 = vpow.pop %v2832
      %v2834 = vmul.f32 %v2831, 1.442695
      %v2835 = vpow.pop %v2834
      %v2836 = vsub.f32 %v2833, 1.0
      %v2837 = vsub.f32 %v2835, 1.0
      %v2838 = vsel %vm2828, %v2826, %v2836
      %v2839 = vsel %vm2829, %v2827, %v2837
      %v2840 = vlaneseq
      %vm2841 = vcmp.ge.s32.totalorder %v2840, 0
      %vm2842 = vcmp.lt.s32.totalorder %v2840, 192
      %vm2843 = vmand %vm2841, %vm2842
      %2844 = vst.msk [vmem:[#allocation6] ss:$8 sm:$0x3] %vm2843, 0.0
      %2845 = vst.msk [vmem:[#allocation6] ss:$8 sm:$0x0] %vm2843, 0.0
      %s2846 = scalar_lea.vmem [#allocation6], 4
      %2847 = vst.msk [vmem:[%s2846] ss:$8 sm:$0x3] %vm2843, 0.0
      %2848 = vst.msk [vmem:[%s2846] ss:$8 sm:$0x0] %vm2843, 0.0
      %v2851 = vrot.slane %v2838, 7
      %v2852 = vrot.slane %v2839, 7
      %2855 = vst [vmem:[#allocation6] sm:$0xe] %v2851
      %vm2856 = vcmask 519169
      %2857 = vst.msk [vmem:[#allocation6 + $0x8] sm:$0xe] %vm2856, %v2852
      %v2858 = vld [vmem:[#allocation6] sm:$0x3]
      %v2859 = vld [vmem:[#allocation6 + $0x8] sm:$0x3]
      %v2860 = vld [vmem:[#allocation6] sm:$0x6]
      %v2861 = vld [vmem:[#allocation6 + $0x8] sm:$0x6]
      %v2862 = vld [vmem:[#allocation6] sm:$0xc]
      %v2863 = vld [vmem:[#allocation6 + $0x8] sm:$0xc]
      %v2864 = vld [vmem:[#allocation6] sm:$0x18]
      %v2865 = vld [vmem:[#allocation6 + $0x8] sm:$0x18]
      %v2868 = vrot.slane %v2860, 1
      %v2869 = vrot.slane %v2861, 1
      %2870 = vrot.lane.b32.xlu0 %v2868, 64
      %v2871 = vpop.permute.xlu0 %2870
      %2872 = vrot.lane.b32.xlu0 %v2869, 64
      %v2873 = vpop.permute.xlu0 %2872
      %v2874 = vsel %vm2626, %v2871, %v2873
      %v2879 = vrot.slane %v2862, 2
      %v2880 = vrot.slane %v2863, 2
      %v2885 = vrot.slane %v2864, 3
      %v2886 = vrot.slane %v2865, 3
      %2887 = vrot.lane.b32.xlu0 %v2885, 64
      %v2888 = vpop.permute.xlu0 %2887
      %2889 = vrot.lane.b32.xlu0 %v2886, 64
      %v2890 = vpop.permute.xlu0 %2889
      %v2891 = vsel %vm2626, %v2888, %v2890
      %v2894 = vsel %vm2626, %v2859, %v2871
      %v2895 = vsel %vm2626, %v2880, %v2888
      %v2896 = vpack.c.bf16 %v2858, %v2858
      %v2897 = vpack.c.bf16 %v2894, %v2894
      %v2898 = vpack.c.bf16 %v2874, %v2874
      %v2899 = vpack.c.bf16 %v2879, %v2879
      %v2900 = vpack.c.bf16 %v2895, %v2895
      %v2901 = vpack.c.bf16 %v2891, %v2891
      %v2902 = vld [vmem:[%s15] sm:$0xf]
      %v2903 = vld [vmem:[%s15 + $0x4] sm:$0xf]
      %v2904 = vld [vmem:[%s15 + $0x8] sm:$0xf]
      %v2905 = vld [vmem:[%s15 + $0xc] sm:$0xf]
      %v2906 = vld [vmem:[%s15 + $0x10] sm:$0xf]
      %v2907 = vld [vmem:[%s15 + $0x14] sm:$0xf]
      %v2908 = vld [vmem:[%s15 + $0x18] sm:$0xf]
      %v2909 = vld [vmem:[%s15 + $0x1c] sm:$0xf]
      %v2910 = vld [vmem:[%s15 + $0x20] sm:$0xf]
      %v2911 = vld [vmem:[%s15 + $0x24] sm:$0xf]
      %v2912 = vld [vmem:[%s15 + $0x28] sm:$0xf]
      %v2913 = vld [vmem:[%s15 + $0x2c] sm:$0xf]
      %v2914 = vld [vmem:[%s15 + $0x30] sm:$0xf]
      %v2915 = vld [vmem:[%s15 + $0x34] sm:$0xf]
      %v2916 = vld [vmem:[%s15 + $0x38] sm:$0xf]
      %v2917 = vld [vmem:[%s15 + $0x3c] sm:$0xf]
      %v2918 = vld [vmem:[%s15 + $0x40] sm:$0xf]
      %v2919 = vld [vmem:[%s15 + $0x44] sm:$0xf]
      %v2920 = vld [vmem:[%s15 + $0x48] sm:$0xf]
      %v2921 = vld [vmem:[%s15 + $0x4c] sm:$0xf]
      %v2922 = vld [vmem:[%s15 + $0x50] sm:$0xf]
      %v2923 = vld [vmem:[%s15 + $0x54] sm:$0xf]
      %v2924 = vld [vmem:[%s15 + $0x58] sm:$0xf]
      %v2925 = vld [vmem:[%s15 + $0x5c] sm:$0xf]
      %v2926 = vld [vmem:[%s15 + $0x60] sm:$0xf]
      %v2927 = vld [vmem:[%s15 + $0x64] sm:$0xf]
      %v2928 = vld [vmem:[%s15 + $0x68] sm:$0xf]
      %v2929 = vld [vmem:[%s15 + $0x6c] sm:$0xf]
      %v2930 = vld [vmem:[%s15 + $0x70] sm:$0xf]
      %v2931 = vld [vmem:[%s15 + $0x74] sm:$0xf]
      %v2932 = vld [vmem:[%s15 + $0x78] sm:$0xf]
      %v2933 = vld [vmem:[%s15 + $0x7c] sm:$0xf]
      %v2934 = vld [vmem:[%s15 + $0x80] sm:$0xf]
      %v2935 = vld [vmem:[%s15 + $0x84] sm:$0xf]
      %v2936 = vld [vmem:[%s15 + $0x88] sm:$0xf]
      %v2937 = vld [vmem:[%s15 + $0x8c] sm:$0xf]
      %v2938 = vld [vmem:[%s15 + $0x90] sm:$0xf]
      %v2939 = vld [vmem:[%s15 + $0x94] sm:$0xf]
      %v2940 = vld [vmem:[%s15 + $0x98] sm:$0xf]
      %v2941 = vld [vmem:[%s15 + $0x9c] sm:$0xf]
      %v2942 = vld [vmem:[%s15 + $0xa0] sm:$0xf]
      %v2943 = vld [vmem:[%s15 + $0xa4] sm:$0xf]
      %v2944 = vld [vmem:[%s15 + $0xa8] sm:$0xf]
      %v2945 = vld [vmem:[%s15 + $0xac] sm:$0xf]
      %v2946 = vld [vmem:[%s15 + $0xb0] sm:$0xf]
      %v2947 = vld [vmem:[%s15 + $0xb4] sm:$0xf]
      %v2948 = vld [vmem:[%s15 + $0xb8] sm:$0xf]
      %v2949 = vld [vmem:[%s15 + $0xbc] sm:$0xf]
      %v2950 = vld [vmem:[%s15 + $0xc0] sm:$0xf]
      %v2951 = vld [vmem:[%s15 + $0xc4] sm:$0xf]
      %v2952 = vld [vmem:[%s15 + $0xc8] sm:$0xf]
      %v2953 = vld [vmem:[%s15 + $0xcc] sm:$0xf]
      %v2954 = vld [vmem:[%s15 + $0xd0] sm:$0xf]
      %v2955 = vld [vmem:[%s15 + $0xd4] sm:$0xf]
      %v2956 = vld [vmem:[%s15 + $0xd8] sm:$0xf]
      %v2957 = vld [vmem:[%s15 + $0xdc] sm:$0xf]
      %v2958 = vld [vmem:[%s15 + $0xe0] sm:$0xf]
      %v2959 = vld [vmem:[%s15 + $0xe4] sm:$0xf]
      %v2960 = vld [vmem:[%s15 + $0xe8] sm:$0xf]
      %v2961 = vld [vmem:[%s15 + $0xec] sm:$0xf]
      %v2962 = vld [vmem:[%s15 + $0xf0] sm:$0xf]
      %v2963 = vld [vmem:[%s15 + $0xf4] sm:$0xf]
      %v2964 = vld [vmem:[%s15 + $0xf8] sm:$0xf]
      %v2965 = vld [vmem:[%s15 + $0xfc] sm:$0xf]
      %v2966 = vld [vmem:[%s15 + $0x100] sm:$0xf]
      %v2967 = vld [vmem:[%s15 + $0x104] sm:$0xf]
      %v2968 = vld [vmem:[%s15 + $0x108] sm:$0xf]
      %v2969 = vld [vmem:[%s15 + $0x10c] sm:$0xf]
      %v2970 = vld [vmem:[%s15 + $0x110] sm:$0xf]
      %v2971 = vld [vmem:[%s15 + $0x114] sm:$0xf]
      %v2972 = vld [vmem:[%s15 + $0x118] sm:$0xf]
      %v2973 = vld [vmem:[%s15 + $0x11c] sm:$0xf]
      %v2974 = vld [vmem:[%s15 + $0x120] sm:$0xf]
      %v2975 = vld [vmem:[%s15 + $0x124] sm:$0xf]
      %v2976 = vld [vmem:[%s15 + $0x128] sm:$0xf]
      %v2977 = vld [vmem:[%s15 + $0x12c] sm:$0xf]
      %v2978 = vld [vmem:[%s15 + $0x130] sm:$0xf]
      %v2979 = vld [vmem:[%s15 + $0x134] sm:$0xf]
      %v2980 = vld [vmem:[%s15 + $0x138] sm:$0xf]
      %v2981 = vld [vmem:[%s15 + $0x13c] sm:$0xf]
      %v2982 = vld [vmem:[%s15 + $0x140] sm:$0xf]
      %v2983 = vld [vmem:[%s15 + $0x144] sm:$0xf]
      %v2984 = vld [vmem:[%s15 + $0x148] sm:$0xf]
      %v2985 = vld [vmem:[%s15 + $0x14c] sm:$0xf]
      %v2986 = vld [vmem:[%s15 + $0x150] sm:$0xf]
      %v2987 = vld [vmem:[%s15 + $0x154] sm:$0xf]
      %v2988 = vld [vmem:[%s15 + $0x158] sm:$0xf]
      %v2989 = vld [vmem:[%s15 + $0x15c] sm:$0xf]
      %v2990 = vld [vmem:[%s15 + $0x160] sm:$0xf]
      %v2991 = vld [vmem:[%s15 + $0x164] sm:$0xf]
      %v2992 = vld [vmem:[%s15 + $0x168] sm:$0xf]
      %v2993 = vld [vmem:[%s15 + $0x16c] sm:$0xf]
      %v2994 = vld [vmem:[%s15 + $0x170] sm:$0xf]
      %v2995 = vld [vmem:[%s15 + $0x174] sm:$0xf]
      %v2996 = vld [vmem:[%s15 + $0x178] sm:$0xf]
      %v2997 = vld [vmem:[%s15 + $0x17c] sm:$0xf]
      %v3094 = vunpack.c.l.b16 %v2902
      %v3095 = vunpack.c.l.b16 %v2903
      %v3096 = vunpack.c.l.b16 %v2904
      %v3097 = vunpack.c.l.b16 %v2905
      %v3098 = vunpack.c.l.b16 %v2906
      %v3099 = vunpack.c.l.b16 %v2907
      %v3100 = vunpack.c.l.b16 %v2908
      %v3101 = vunpack.c.l.b16 %v2909
      %v3102 = vunpack.c.l.b16 %v2910
      %v3103 = vunpack.c.l.b16 %v2911
      %v3104 = vunpack.c.l.b16 %v2912
      %v3105 = vunpack.c.l.b16 %v2913
      %v3106 = vunpack.c.l.b16 %v2914
      %v3107 = vunpack.c.l.b16 %v2915
      %v3108 = vunpack.c.l.b16 %v2916
      %v3109 = vunpack.c.l.b16 %v2917
      %v3110 = vunpack.c.l.b16 %v2918
      %v3111 = vunpack.c.l.b16 %v2919
      %v3112 = vunpack.c.l.b16 %v2920
      %v3113 = vunpack.c.l.b16 %v2921
      %v3114 = vunpack.c.l.b16 %v2922
      %v3115 = vunpack.c.l.b16 %v2923
      %v3116 = vunpack.c.l.b16 %v2924
      %v3117 = vunpack.c.l.b16 %v2925
      %v3118 = vunpack.c.l.b16 %v2926
      %v3119 = vunpack.c.l.b16 %v2927
      %v3120 = vunpack.c.l.b16 %v2928
      %v3121 = vunpack.c.l.b16 %v2929
      %v3122 = vunpack.c.l.b16 %v2930
      %v3123 = vunpack.c.l.b16 %v2931
      %v3124 = vunpack.c.l.b16 %v2932
      %v3125 = vunpack.c.l.b16 %v2933
      %v3126 = vunpack.c.l.b16 %v2934
      %v3127 = vunpack.c.l.b16 %v2935
      %v3128 = vunpack.c.l.b16 %v2936
      %v3129 = vunpack.c.l.b16 %v2937
      %v3130 = vunpack.c.l.b16 %v2938
      %v3131 = vunpack.c.l.b16 %v2939
      %v3132 = vunpack.c.l.b16 %v2940
      %v3133 = vunpack.c.l.b16 %v2941
      %v3134 = vunpack.c.l.b16 %v2942
      %v3135 = vunpack.c.l.b16 %v2943
      %v3136 = vunpack.c.l.b16 %v2944
      %v3137 = vunpack.c.l.b16 %v2945
      %v3138 = vunpack.c.l.b16 %v2946
      %v3139 = vunpack.c.l.b16 %v2947
      %v3140 = vunpack.c.l.b16 %v2948
      %v3141 = vunpack.c.l.b16 %v2949
      %v3142 = vunpack.c.l.b16 %v2950
      %v3143 = vunpack.c.l.b16 %v2951
      %v3144 = vunpack.c.l.b16 %v2952
      %v3145 = vunpack.c.l.b16 %v2953
      %v3146 = vunpack.c.l.b16 %v2954
      %v3147 = vunpack.c.l.b16 %v2955
      %v3148 = vunpack.c.l.b16 %v2956
      %v3149 = vunpack.c.l.b16 %v2957
      %v3150 = vunpack.c.l.b16 %v2958
      %v3151 = vunpack.c.l.b16 %v2959
      %v3152 = vunpack.c.l.b16 %v2960
      %v3153 = vunpack.c.l.b16 %v2961
      %v3154 = vunpack.c.l.b16 %v2962
      %v3155 = vunpack.c.l.b16 %v2963
      %v3156 = vunpack.c.l.b16 %v2964
      %v3157 = vunpack.c.l.b16 %v2965
      %v3158 = vunpack.c.l.b16 %v2966
      %v3159 = vunpack.c.l.b16 %v2967
      %v3160 = vunpack.c.l.b16 %v2968
      %v3161 = vunpack.c.l.b16 %v2969
      %v3162 = vunpack.c.l.b16 %v2970
      %v3163 = vunpack.c.l.b16 %v2971
      %v3164 = vunpack.c.l.b16 %v2972
      %v3165 = vunpack.c.l.b16 %v2973
      %v3166 = vunpack.c.l.b16 %v2974
      %v3167 = vunpack.c.l.b16 %v2975
      %v3168 = vunpack.c.l.b16 %v2976
      %v3169 = vunpack.c.l.b16 %v2977
      %v3170 = vunpack.c.l.b16 %v2978
      %v3171 = vunpack.c.l.b16 %v2979
      %v3172 = vunpack.c.l.b16 %v2980
      %v3173 = vunpack.c.l.b16 %v2981
      %v3174 = vunpack.c.l.b16 %v2982
      %v3175 = vunpack.c.l.b16 %v2983
      %v3176 = vunpack.c.l.b16 %v2984
      %v3177 = vunpack.c.l.b16 %v2985
      %v3178 = vunpack.c.l.b16 %v2986
      %v3179 = vunpack.c.l.b16 %v2987
      %v3180 = vunpack.c.l.b16 %v2988
      %v3181 = vunpack.c.l.b16 %v2989
      %v3182 = vunpack.c.l.b16 %v2990
      %v3183 = vunpack.c.l.b16 %v2991
      %v3184 = vunpack.c.l.b16 %v2992
      %v3185 = vunpack.c.l.b16 %v2993
      %v3186 = vunpack.c.l.b16 %v2994
      %v3187 = vunpack.c.l.b16 %v2995
      %v3188 = vunpack.c.l.b16 %v2996
      %v3189 = vunpack.c.l.b16 %v2997
      %v3190 = vpack.c.b16 %v3095, %v3094
      %v3191 = vpack.c.b16 %v3097, %v3096
      %v3192 = vpack.c.b16 %v3099, %v3098
      %v3193 = vpack.c.b16 %v3101, %v3100
      %v3194 = vpack.c.b16 %v3103, %v3102
      %v3195 = vpack.c.b16 %v3105, %v3104
      %v3196 = vpack.c.b16 %v3107, %v3106
      %v3197 = vpack.c.b16 %v3109, %v3108
      %v3198 = vpack.c.b16 %v3111, %v3110
      %v3199 = vpack.c.b16 %v3113, %v3112
      %v3200 = vpack.c.b16 %v3115, %v3114
      %v3201 = vpack.c.b16 %v3117, %v3116
      %v3202 = vpack.c.b16 %v3119, %v3118
      %v3203 = vpack.c.b16 %v3121, %v3120
      %v3204 = vpack.c.b16 %v3123, %v3122
      %v3205 = vpack.c.b16 %v3125, %v3124
      %v3206 = vpack.c.b16 %v3127, %v3126
      %v3207 = vpack.c.b16 %v3129, %v3128
      %v3208 = vpack.c.b16 %v3131, %v3130
      %v3209 = vpack.c.b16 %v3133, %v3132
      %v3210 = vpack.c.b16 %v3135, %v3134
      %v3211 = vpack.c.b16 %v3137, %v3136
      %v3212 = vpack.c.b16 %v3139, %v3138
      %v3213 = vpack.c.b16 %v3141, %v3140
      %v3214 = vpack.c.b16 %v3143, %v3142
      %v3215 = vpack.c.b16 %v3145, %v3144
      %v3216 = vpack.c.b16 %v3147, %v3146
      %v3217 = vpack.c.b16 %v3149, %v3148
      %v3218 = vpack.c.b16 %v3151, %v3150
      %v3219 = vpack.c.b16 %v3153, %v3152
      %v3220 = vpack.c.b16 %v3155, %v3154
      %v3221 = vpack.c.b16 %v3157, %v3156
      %v3222 = vpack.c.b16 %v3159, %v3158
      %v3223 = vpack.c.b16 %v3161, %v3160
      %v3224 = vpack.c.b16 %v3163, %v3162
      %v3225 = vpack.c.b16 %v3165, %v3164
      %v3226 = vpack.c.b16 %v3167, %v3166
      %v3227 = vpack.c.b16 %v3169, %v3168
      %v3228 = vpack.c.b16 %v3171, %v3170
      %v3229 = vpack.c.b16 %v3173, %v3172
      %v3230 = vpack.c.b16 %v3175, %v3174
      %v3231 = vpack.c.b16 %v3177, %v3176
      %v3232 = vpack.c.b16 %v3179, %v3178
      %v3233 = vpack.c.b16 %v3181, %v3180
      %v3234 = vpack.c.b16 %v3183, %v3182
      %v3235 = vpack.c.b16 %v3185, %v3184
      %v3236 = vpack.c.b16 %v3187, %v3186
      %v3237 = vpack.c.b16 %v3189, %v3188
      %3286 = vmatprep.subr.bf16.mxu0 0
      %3287 = vmatpush1.bf16.msra.mxu0 %v3190
      %3288 = vmatprep.subr.bf16.mxu0 0
      %3289 = vmatpush1.bf16.msra.mxu0 %v3191
      %3290 = vmatprep.subr.bf16.mxu0 0
      %3291 = vmatpush1.bf16.msra.mxu0 %v3192
      %3292 = vmatprep.subr.bf16.mxu0 0
      %3293 = vmatpush1.bf16.msra.mxu0 %v3193
      %3294 = vmatprep.subr.bf16.mxu0 0
      %3295 = vmatpush1.bf16.msra.mxu0 %v3194
      %3296 = vmatprep.subr.bf16.mxu0 0
      %3297 = vmatpush1.bf16.msra.mxu0 %v3195
      %3298 = vmatprep.subr.bf16.mxu0 0
      %3299 = vmatpush1.bf16.msra.mxu0 %v3196
      %3300 = vmatprep.subr.bf16.mxu0 0
      %3301 = vmatpush1.bf16.msra.mxu0 %v3197
      %3302 = vmatprep.subr.bf16.mxu0 0
      %3303 = vmatpush1.bf16.msra.mxu0 %v3198
      %3304 = vmatprep.subr.bf16.mxu0 0
      %3305 = vmatpush1.bf16.msra.mxu0 %v3199
      %3306 = vmatprep.subr.bf16.mxu0 0
      %3307 = vmatpush1.bf16.msra.mxu0 %v3200
      %3308 = vmatprep.subr.bf16.mxu0 0
      %3309 = vmatpush1.bf16.msra.mxu0 %v3201
      %3310 = vmatprep.subr.bf16.mxu0 0
      %3311 = vmatpush1.bf16.msra.mxu0 %v3202
      %3312 = vmatprep.subr.bf16.mxu0 0
      %3313 = vmatpush1.bf16.msra.mxu0 %v3203
      %3314 = vmatprep.subr.bf16.mxu0 0
      %3315 = vmatpush1.bf16.msra.mxu0 %v3204
      %3316 = vmatprep.subr.bf16.mxu0 0
      %3317 = vmatpush1.bf16.msra.mxu0 %v3205
      %3318 = vmatprep.mubr.bf16.mxu0 %v2897
      %3319 = vmatmul.mubr.bf16.gmra.mrb[0].mxu0 %v2896
      %v3320 = vpop.f32.mrb[0].mxu0
      %v3321 = vadd.f32 0.0, %v3320
      %v3322 = vpop.f32.mrb[0].mxu0
      %v3323 = vpop.f32.mrb[0].mxu0
      %v3324 = vpop.f32.mrb[0].mxu0
      %3325 = vdwg.mxu0
      %3326 = vmatprep.subr.bf16.mxu0 0
      %3327 = vmatpush1.bf16.msra.mxu0 %v3206
      %3328 = vmatprep.subr.bf16.mxu0 0
      %3329 = vmatpush1.bf16.msra.mxu0 %v3207
      %3330 = vmatprep.subr.bf16.mxu0 0
      %3331 = vmatpush1.bf16.msra.mxu0 %v3208
      %3332 = vmatprep.subr.bf16.mxu0 0
      %3333 = vmatpush1.bf16.msra.mxu0 %v3209
      %3334 = vmatprep.subr.bf16.mxu0 0
      %3335 = vmatpush1.bf16.msra.mxu0 %v3210
      %3336 = vmatprep.subr.bf16.mxu0 0
      %3337 = vmatpush1.bf16.msra.mxu0 %v3211
      %3338 = vmatprep.subr.bf16.mxu0 0
      %3339 = vmatpush1.bf16.msra.mxu0 %v3212
      %3340 = vmatprep.subr.bf16.mxu0 0
      %3341 = vmatpush1.bf16.msra.mxu0 %v3213
      %3342 = vmatprep.subr.bf16.mxu0 0
      %3343 = vmatpush1.bf16.msra.mxu0 %v3214
      %3344 = vmatprep.subr.bf16.mxu0 0
      %3345 = vmatpush1.bf16.msra.mxu0 %v3215
      %3346 = vmatprep.subr.bf16.mxu0 0
      %3347 = vmatpush1.bf16.msra.mxu0 %v3216
      %3348 = vmatprep.subr.bf16.mxu0 0
      %3349 = vmatpush1.bf16.msra.mxu0 %v3217
      %3350 = vmatprep.subr.bf16.mxu0 0
      %3351 = vmatpush1.bf16.msra.mxu0 %v3218
      %3352 = vmatprep.subr.bf16.mxu0 0
      %3353 = vmatpush1.bf16.msra.mxu0 %v3219
      %3354 = vmatprep.subr.bf16.mxu0 0
      %3355 = vmatpush1.bf16.msra.mxu0 %v3220
      %3356 = vmatprep.subr.bf16.mxu0 0
      %3357 = vmatpush1.bf16.msra.mxu0 %v3221
      %3358 = vmatprep.mubr.bf16.mxu0 %v2899
      %3359 = vmatmul.mubr.bf16.gmra.mrb[0].mxu0 %v2898
      %v3360 = vpop.f32.mrb[0].mxu0
      %v3361 = vadd.f32 %v3321, %v3360
      %v3362 = vpop.f32.mrb[0].mxu0
      %v3363 = vpop.f32.mrb[0].mxu0
      %v3364 = vpop.f32.mrb[0].mxu0
      %3365 = vdwg.mxu0
      %3366 = vmatprep.subr.bf16.mxu0 0
      %3367 = vmatpush1.bf16.msra.mxu0 %v3222
      %3368 = vmatprep.subr.bf16.mxu0 0
      %3369 = vmatpush1.bf16.msra.mxu0 %v3223
      %3370 = vmatprep.subr.bf16.mxu0 0
      %3371 = vmatpush1.bf16.msra.mxu0 %v3224
      %3372 = vmatprep.subr.bf16.mxu0 0
      %3373 = vmatpush1.bf16.msra.mxu0 %v3225
      %3374 = vmatprep.subr.bf16.mxu0 0
      %3375 = vmatpush1.bf16.msra.mxu0 %v3226
      %3376 = vmatprep.subr.bf16.mxu0 0
      %3377 = vmatpush1.bf16.msra.mxu0 %v3227
      %3378 = vmatprep.subr.bf16.mxu0 0
      %3379 = vmatpush1.bf16.msra.mxu0 %v3228
      %3380 = vmatprep.subr.bf16.mxu0 0
      %3381 = vmatpush1.bf16.msra.mxu0 %v3229
      %3382 = vmatprep.subr.bf16.mxu0 0
      %3383 = vmatpush1.bf16.msra.mxu0 %v3230
      %3384 = vmatprep.subr.bf16.mxu0 0
      %3385 = vmatpush1.bf16.msra.mxu0 %v3231
      %3386 = vmatprep.subr.bf16.mxu0 0
      %3387 = vmatpush1.bf16.msra.mxu0 %v3232
      %3388 = vmatprep.subr.bf16.mxu0 0
      %3389 = vmatpush1.bf16.msra.mxu0 %v3233
      %3390 = vmatprep.subr.bf16.mxu0 0
      %3391 = vmatpush1.bf16.msra.mxu0 %v3234
      %3392 = vmatprep.subr.bf16.mxu0 0
      %3393 = vmatpush1.bf16.msra.mxu0 %v3235
      %3394 = vmatprep.subr.bf16.mxu0 0
      %3395 = vmatpush1.bf16.msra.mxu0 %v3236
      %3396 = vmatprep.subr.bf16.mxu0 0
      %3397 = vmatpush1.bf16.msra.mxu0 %v3237
      %3398 = vmatprep.mubr.bf16.mxu0 %v2901
      %3399 = vmatmul.mubr.bf16.gmra.mrb[0].mxu0 %v2900
      %v3400 = vpop.f32.mrb[0].mxu0
      %v3401 = vadd.f32 %v3361, %v3400
      %v3402 = vpop.f32.mrb[0].mxu0
      %v3403 = vpop.f32.mrb[0].mxu0
      %v3404 = vpop.f32.mrb[0].mxu0
      %3405 = vdwg.mxu0
      %vm3406 = vcmask 1024
      %v3407 = vsel %vm3406, %v3401, 0.0
      %v3408 = vrot.slane %v3407, 4
      %v3409 = vadd.f32 %v3407, %v3408
      %v3410 = vrot.slane %v3409, 2
      %v3411 = vadd.f32 %v3409, %v3410
      %v3412 = vrot.slane %v3411, 1
      %v3413 = vadd.f32 %v3411, %v3412
      %v3414 = vld [vmem:[#allocation7] sm:$0x1]
      %v3415 = vadd.f32 %v3413, %v3414
      %v3416 = vsub.f32 0.0, %v3415
      %v3417 = vmul.f32 %v3416, 1.442695
      %v3418 = vpow.pop %v3417
      %v3419 = vadd.f32 %v3418, 1.0
      %v3420 = vrcp.pop %v3419
      %v3421 = vmul.f32 1.0, %v3420
      %vm3422 = vcmask 0
      %3423 = vst.msk [vmem:[%s546] sm:$0x1] %vm3422, %v3421
      %p3424 = scmp.lt.s32.totalorder %s30, 1
      %s3425 = scalar_select %p3424, %s30, 1
      %s3426 = scalar_lea.vmem %s17, %s3425
      // Predicated region
      $region89: #{tpu_custom_call.1} parent=87 // pred_check
        %p3427 = pneg %p410
      $region90: #{tpu_custom_call.1} parent=87 // pred_check_branch
        %3429 = sbr.rel (%p3427) target = $region92
      $region91: #{tpu_custom_call.1} parent=87 // pred_region
        _
      $region92: #{tpu_custom_call.1} parent=87 // pred_fallthru
        _
    $region88: #{tpu_custom_call.1} parent=5 // pred_fallthru
      _
    %p3430 = scmp.le.s32.totalorder 2, %s25
    // Predicated region
    $region93: #{tpu_custom_call.1} parent=5 // pred_check
      %p3431 = pneg %p3430
    $region94: #{tpu_custom_call.1} parent=5 // pred_check_branch
      %3433 = sbr.rel (%p3431) target = $region96
    $region95: #{tpu_custom_call.1} parent=5 // pred_region
      %s3434 = ssub.s32 %s25, 2
      // Predicated region
      $region97: #{tpu_custom_call.1} parent=95 // pred_check
        %p3435 = pneg %p416
      $region98: #{tpu_custom_call.1} parent=95 // pred_check_branch
        %3437 = sbr.rel (%p3435) target = $region100
      $region99: #{tpu_custom_call.1} parent=95 // pred_region
        %p3438 = scmp.lt.s32.totalorder %s31, 1
        %s3439 = scalar_select %p3438, %s31, 1
        %s3440 = scalar_lea.vmem %s17, %s3439
      $region100: #{tpu_custom_call.1} parent=95 // pred_fallthru
        _
    $region96: #{tpu_custom_call.1} parent=5 // pred_fallthru
      _
  $region6: #{tpu_custom_call.1} parent=0 // loop_footer
    %s29 = sadd.s32 1, %s25
  $region7: #{tpu_custom_call.1} parent=0 // loop_footer_branch
    %24 = sbr.rel target = $region3
  $region8: #{tpu_custom_call.1} parent=0 // loop_exit
    _

</llo_original>
